<compile_context>
chip_gen: v7x
topology: tpu7x:2x2x1
jax: 0.10.0
libtpu: 0.0.40
codegen_flags: <defaults>
</compile_context>

<pallas_src>
import functools

import jax
import jax.numpy as jnp
import numpy as np
from jax.experimental import pallas as pl
from jax.experimental.pallas import tpu as pltpu

# Standard SMPL kinematic tree (24 joints).
SMPL_PARENTS = [-1, 0, 0, 0, 1, 2, 3, 4, 5, 6, 7, 8, 9, 9, 9, 12, 13, 14,
                16, 17, 18, 19, 20, 21]
SMPL_NR_JOINTS = len(SMPL_PARENTS)          # 24

INPUT_DIM = 3
HIDDEN_DIM = 24
HEADS = 3
OUT_C = HIDDEN_DIM // HEADS                 # 8
NEG_SLOPE = 0.2                             # PyG GATConv default

J = SMPL_NR_JOINTS
JA = J * INPUT_DIM                          # 72   flat input width per graph
JH = J * HIDDEN_DIM                         # 576  flat hidden width per graph
JHEADS = J * HEADS                          # 72   flat (joint, head) logit width


def encoder_kernel(x_ref, wpre_ref, bpre_ref, wgat_ref, wgatp_ref,
                   asd_ref, adst_ref, asrc_ref, emat_ref, rootm_ref,
                   bgat_ref, out_ref):
    """One batch of Gb graphs per grid step, lane-dense per-graph rows.

    x_ref    : (Gb, 72)   bf16  flattened (joint, xyz) inputs
    wpre_ref : (72, 576)  bf16  block-diagonal pre-Linear weight (per joint)
    bpre_ref : (1, 576)   f32   pre-Linear bias tiled per joint
    wgat_ref : (576, 576) bf16  block-diagonal GAT projection
    wgatp_ref: (576, 576) bf16  GAT projection composed with parent gather
    asd_ref  : (576, 72)  bf16  per-(joint, head) (att_src + att_dst) matrix
    adst_ref : (576, 72)  bf16  per-(joint, head) att_dst matrix
    asrc_ref : (576, 72)  bf16  per-(joint, head) att_src matrix
    emat_ref : (72, 576)  bf16  (joint, head) -> 8-channel broadcast matrix
    rootm_ref: (1, 72)    f32   0 at root's (joint, head) columns, else 1
    bgat_ref : (1, 576)   f32   GAT output bias tiled per joint
    out_ref  : (Gb, 576)  f32
    """
    x = x_ref[...]                                               # (Gb, 72) bf16

    # --- pre-Linear + ReLU (per joint, via block-diagonal weight) ----------
    h = jnp.maximum(
        jnp.dot(x, wpre_ref[...], preferred_element_type=jnp.float32)
        + bpre_ref[...], 0.0)                                    # (Gb, 576) f32
    h_bf = h.astype(jnp.bfloat16)

    # --- GAT linear projection; same projection of each joint's parent -----
    xs = jnp.dot(h_bf, wgat_ref[...], preferred_element_type=jnp.float32)
    xsp = jnp.dot(h_bf, wgatp_ref[...], preferred_element_type=jnp.float32)
    xs_bf = xs.astype(jnp.bfloat16)
    xsp_bf = xsp.astype(jnp.bfloat16)

    # --- per-(joint, head) attention logits --------------------------------
    # self loop: (att_src + att_dst) . xs ; parent edge: att_dst.xs + att_src.xsp
    l_self = jnp.dot(xs_bf, asd_ref[...], preferred_element_type=jnp.float32)
    l_par = (jnp.dot(xs_bf, adst_ref[...], preferred_element_type=jnp.float32)
             + jnp.dot(xsp_bf, asrc_ref[...], preferred_element_type=jnp.float32))

    l_self = jnp.where(l_self >= 0, l_self, NEG_SLOPE * l_self)
    l_par = jnp.where(l_par >= 0, l_par, NEG_SLOPE * l_par)
    # root has no parent edge -> mask its parent logit to -inf
    l_par = jnp.where(rootm_ref[...] > 0, l_par, jnp.float32(-1e30))

    # --- exact 2-way edge softmax over {self, parent}; w_par = 1 - w_self ---
    m = jnp.maximum(l_self, l_par)
    e_s = jnp.exp(l_self - m)
    e_p = jnp.exp(l_par - m)
    w_s = e_s * pl.reciprocal(e_s + e_p, approx=True)            # (Gb, 72), EUP

    # broadcast the (joint, head) self weight onto that head's 8 channels
    w_s_b = jnp.dot(w_s.astype(jnp.bfloat16), emat_ref[...],
                    preferred_element_type=jnp.float32)          # (Gb, 576)

    # out = w_s * xs + (1 - w_s) * xsp + bias
    out = xsp + w_s_b * (xs - xsp) + bgat_ref[...]
    out_ref[...] = jnp.maximum(out, 0.0)                         # (Gb, 576) f32


def _round_up(v, m):
    return ((v + m - 1) // m) * m


@functools.partial(jax.jit, static_argnames=("block_g",))
def encoder_forward(src, kparams, block_g=512):
    """src: (N, L, J*INPUT_DIM) -> (N, L, J*HIDDEN_DIM)."""
    N, L, D = src.shape
    assert D == JA, f"expected last dim {JA}, got {D}"
    G = N * L
    # feed bf16 inputs (halves input DMA); accumulation/output stay f32
    x = src.reshape(G, JA).astype(jnp.bfloat16)

    # Batch Gb graphs per grid step (multiple of 8 sublanes); pad G if needed.
    gb = min(block_g, _round_up(G, 8))
    g_pad = _round_up(G, gb)
    if g_pad != G:
        x = jnp.pad(x, ((0, g_pad - G), (0, 0)))

    const = lambda g: (0, 0)

    out = pl.pallas_call(
        encoder_kernel,
        out_shape=jax.ShapeDtypeStruct((g_pad, JH), jnp.float32),
        grid=(g_pad // gb,),
        in_specs=[
            pl.BlockSpec((gb, JA), lambda g: (g, 0)),
            pl.BlockSpec((JA, JH), const),
            pl.BlockSpec((1, JH), const),
            pl.BlockSpec((JH, JH), const),
            pl.BlockSpec((JH, JH), const),
            pl.BlockSpec((JH, JHEADS), const),
            pl.BlockSpec((JH, JHEADS), const),
            pl.BlockSpec((JH, JHEADS), const),
            pl.BlockSpec((JHEADS, JH), const),
            pl.BlockSpec((1, JHEADS), const),
            pl.BlockSpec((1, JH), const),
        ],
        out_specs=pl.BlockSpec((gb, JH), lambda g: (g, 0)),
        compiler_params=pltpu.CompilerParams(
            dimension_semantics=("parallel",),
            vmem_limit_bytes=48 * 1024 * 1024),
    )(x, kparams['w_pre_bd'], kparams['b_pre_flat'], kparams['w_gat_bd'],
      kparams['w_gat_par'], kparams['a_sd'], kparams['a_dst'],
      kparams['a_src'], kparams['e_bcast'], kparams['root_mask'],
      kparams['b_gat_flat'])

    return out[:G].reshape(N, L, JH)


# ---------------------------------------------------------------------------
# Parameter construction
# ---------------------------------------------------------------------------
def init_base_params(key):
    """Per-head / per-layer params equivalent to the PyTorch module's."""
    ks = jax.random.split(key, 6)
    return dict(
        w_pre=0.3 * jax.random.normal(ks[0], (INPUT_DIM, HIDDEN_DIM), jnp.float32),
        b_pre=0.1 * jax.random.normal(ks[1], (HIDDEN_DIM,), jnp.float32),
        w_gat=0.2 * jax.random.normal(ks[2], (HIDDEN_DIM, HEADS * OUT_C), jnp.float32),
        att_src=0.2 * jax.random.normal(ks[3], (HEADS, OUT_C), jnp.float32),
        att_dst=0.2 * jax.random.normal(ks[4], (HEADS, OUT_C), jnp.float32),
        b_gat=0.1 * jax.random.normal(ks[5], (HEADS * OUT_C,), jnp.float32),
    )


def build_kernel_params(base):
    """Fold the graph structure into block-structured matrices (host-side)."""
    w_pre = np.asarray(base['w_pre'])       # (3, 24)
    b_pre = np.asarray(base['b_pre'])       # (24,)
    w_gat = np.asarray(base['w_gat'])       # (24, 24)
    att_src = np.asarray(base['att_src'])   # (3, 8)
    att_dst = np.asarray(base['att_dst'])   # (3, 8)
    b_gat = np.asarray(base['b_gat'])       # (24,)

    A, H, C = INPUT_DIM, HIDDEN_DIM, OUT_C

    w_pre_bd = np.zeros((JA, JH), np.float32)
    w_gat_bd = np.zeros((JH, JH), np.float32)
    w_gat_par = np.zeros((JH, JH), np.float32)
    a_src = np.zeros((JH, JHEADS), np.float32)
    a_dst = np.zeros((JH, JHEADS), np.float32)
    e_bcast = np.zeros((JHEADS, JH), np.float32)
    root_mask = np.ones((1, JHEADS), np.float32)

    for j in range(J):
        w_pre_bd[j * A:(j + 1) * A, j * H:(j + 1) * H] = w_pre
        w_gat_bd[j * H:(j + 1) * H, j * H:(j + 1) * H] = w_gat
        p = SMPL_PARENTS[j]
        if p >= 0:
            # parent gather composed with the GAT projection
            w_gat_par[p * H:(p + 1) * H, j * H:(j + 1) * H] = w_gat
        else:
            root_mask[0, j * HEADS:(j + 1) * HEADS] = 0.0
        for hh in range(HEADS):
            a_src[j * H + hh * C: j * H + (hh + 1) * C, j * HEADS + hh] = att_src[hh]
            a_dst[j * H + hh * C: j * H + (hh + 1) * C, j * HEADS + hh] = att_dst[hh]
            e_bcast[j * HEADS + hh, j * H + hh * C: j * H + (hh + 1) * C] = 1.0

    bf16 = jnp.bfloat16
    return dict(
        w_pre_bd=jnp.asarray(w_pre_bd, dtype=bf16),
        b_pre_flat=jnp.asarray(np.tile(b_pre, J)[None, :].astype(np.float32)),
        w_gat_bd=jnp.asarray(w_gat_bd, dtype=bf16),
        w_gat_par=jnp.asarray(w_gat_par, dtype=bf16),
        a_sd=jnp.asarray(a_src + a_dst, dtype=bf16),
        a_dst=jnp.asarray(a_dst, dtype=bf16),
        a_src=jnp.asarray(a_src, dtype=bf16),
        e_bcast=jnp.asarray(e_bcast, dtype=bf16),
        root_mask=jnp.asarray(root_mask),
        b_gat_flat=jnp.asarray(np.tile(b_gat, J)[None, :].astype(np.float32)),
    )


# ---------------------------------------------------------------------------
# Plain-JAX reference (same math as the PyTorch module, dense edge softmax, f32)
# ---------------------------------------------------------------------------
def encoder_reference(src, base):
    N, L, D = src.shape
    A = D // J
    x = src.reshape(N * L, J, A).astype(jnp.float32)
    h = jax.nn.relu(x @ base['w_pre'] + base['b_pre'])
    xs = h @ base['w_gat']                                       # (G, J, 24)
    xs_h = xs.reshape(-1, J, HEADS, OUT_C)
    a_src = jnp.einsum('gjhc,hc->gjh', xs_h, base['att_src'])
    a_dst = jnp.einsum('gjhc,hc->gjh', xs_h, base['att_dst'])

    mask = np.eye(J, dtype=np.float32)
    for child, parent in enumerate(SMPL_PARENTS):
        if parent >= 0:
            mask[child, parent] = 1.0
    mask = jnp.asarray(mask)

    e = a_dst[:, :, None, :] + a_src[:, None, :, :]              # (G, i, j, h)
    e = jnp.where(e >= 0, e, NEG_SLOPE * e)
    e = jnp.where(mask[None, :, :, None] > 0, e, -1e30)
    e = e - e.max(axis=2, keepdims=True)
    p = jnp.exp(e) * mask[None, :, :, None]
    attn = p / p.sum(axis=2, keepdims=True)
    out = jnp.einsum('gijh,gjhc->gihc', attn, xs_h).reshape(-1, J, HIDDEN_DIM)
    out = jax.nn.relu(out + base['b_gat'])
    return out.reshape(N, L, J * HIDDEN_DIM)


if __name__ == "__main__":
    key = jax.random.PRNGKey(0)
    k_x, k_p = jax.random.split(key)

    N, L = 2, 8
    D = J * INPUT_DIM                                            # 72
    src = jax.random.normal(k_x, (N, L, D), jnp.float32)

    base = init_base_params(k_p)
    kparams = build_kernel_params(base)

    out = encoder_forward(src, kparams)
    out = jax.block_until_ready(out)

    ref = encoder_reference(src, base)
    assert out.shape == (N, L, J * HIDDEN_DIM)
    assert bool(jnp.all(jnp.isfinite(out)))
    # kernel uses bf16 MXU operands with f32 accumulation -> small numeric drift
    assert jnp.allclose(out, ref, rtol=3e-2, atol=3e-2), (
        "mismatch vs reference, max abs err = "
        f"{float(jnp.max(jnp.abs(out - ref)))}")

    print("KERNEL_OK")
</pallas_src>

<mosaic_0001>
module attributes {stable_mosaic.version = 11 : i64} {
  func.func @encoder_kernel(%arg0: i32, %arg1: memref<16x72xbf16, #tpu.memory_space<vmem>>, %arg2: memref<72x576xbf16, #tpu.memory_space<vmem>>, %arg3: memref<1x576xf32, #tpu.memory_space<vmem>>, %arg4: memref<576x576xbf16, #tpu.memory_space<vmem>>, %arg5: memref<576x576xbf16, #tpu.memory_space<vmem>>, %arg6: memref<576x72xbf16, #tpu.memory_space<vmem>>, %arg7: memref<576x72xbf16, #tpu.memory_space<vmem>>, %arg8: memref<576x72xbf16, #tpu.memory_space<vmem>>, %arg9: memref<72x576xbf16, #tpu.memory_space<vmem>>, %arg10: memref<1x72xf32, #tpu.memory_space<vmem>>, %arg11: memref<1x576xf32, #tpu.memory_space<vmem>>, %arg12: memref<16x576xf32, #tpu.memory_space<vmem>>) attributes {dimension_semantics = [#tpu.dimension_semantics<parallel>], iteration_bounds = array<i64: 1>, scalar_prefetch = 0 : i64, scratch_operands = 0 : i64, tpu.core_type = #tpu.core_type<tc>, window_params = [{transform_indices = @transform_0, window_bounds = array<i64: 16, 72>}, {pipeline_mode = #tpu.pipeline_mode<synchronous>, transform_indices = @transform_1, window_bounds = array<i64: 72, 576>}, {pipeline_mode = #tpu.pipeline_mode<synchronous>, transform_indices = @transform_2, window_bounds = array<i64: 1, 576>}, {pipeline_mode = #tpu.pipeline_mode<synchronous>, transform_indices = @transform_3, window_bounds = array<i64: 576, 576>}, {pipeline_mode = #tpu.pipeline_mode<synchronous>, transform_indices = @transform_4, window_bounds = array<i64: 576, 576>}, {pipeline_mode = #tpu.pipeline_mode<synchronous>, transform_indices = @transform_5, window_bounds = array<i64: 576, 72>}, {pipeline_mode = #tpu.pipeline_mode<synchronous>, transform_indices = @transform_6, window_bounds = array<i64: 576, 72>}, {pipeline_mode = #tpu.pipeline_mode<synchronous>, transform_indices = @transform_7, window_bounds = array<i64: 576, 72>}, {pipeline_mode = #tpu.pipeline_mode<synchronous>, transform_indices = @transform_8, window_bounds = array<i64: 72, 576>}, {pipeline_mode = #tpu.pipeline_mode<synchronous>, transform_indices = @transform_9, window_bounds = array<i64: 1, 72>}, {pipeline_mode = #tpu.pipeline_mode<synchronous>, transform_indices = @transform_10, window_bounds = array<i64: 1, 576>}, {transform_indices = @transform_11, window_bounds = array<i64: 16, 576>}]} {
    %c0 = arith.constant 0 : index
    %c0_0 = arith.constant 0 : index
    %0 = vector.load %arg1[%c0, %c0_0] : memref<16x72xbf16, #tpu.memory_space<vmem>>, vector<16x72xbf16>
    %c0_1 = arith.constant 0 : index
    %c0_2 = arith.constant 0 : index
    %1 = vector.load %arg2[%c0_1, %c0_2] : memref<72x576xbf16, #tpu.memory_space<vmem>>, vector<72x576xbf16>
    %cst = arith.constant dense<0.000000e+00> : vector<16x576xf32>
    %2 = tpu.matmul %0, %1, %cst {dimension_numbers = #tpu.dot_dimension_numbers<[1], [0], [0], [1], [0, 0, 1, 1], [], []>} : vector<16x72xbf16>, vector<72x576xbf16>, vector<16x576xf32> -> vector<16x576xf32>
    %c0_3 = arith.constant 0 : index
    %c0_4 = arith.constant 0 : index
    %3 = vector.load %arg3[%c0_3, %c0_4] : memref<1x576xf32, #tpu.memory_space<vmem>>, vector<1x576xf32>
    %4 = vector.broadcast %3 : vector<1x576xf32> to vector<16x576xf32>
    %5 = arith.addf %2, %4 : vector<16x576xf32>
    %cst_5 = arith.constant 0.000000e+00 : f32
    %6 = vector.broadcast %cst_5 : f32 to vector<16x576xf32>
    %7 = arith.maximumf %5, %6 : vector<16x576xf32>
    %8 = arith.truncf %7 : vector<16x576xf32> to vector<16x576xbf16>
    %c0_6 = arith.constant 0 : index
    %c0_7 = arith.constant 0 : index
    %9 = vector.load %arg4[%c0_6, %c0_7] : memref<576x576xbf16, #tpu.memory_space<vmem>>, vector<576x576xbf16>
    %cst_8 = arith.constant dense<0.000000e+00> : vector<16x576xf32>
    %10 = tpu.matmul %8, %9, %cst_8 {dimension_numbers = #tpu.dot_dimension_numbers<[1], [0], [0], [1], [0, 0, 1, 1], [], []>} : vector<16x576xbf16>, vector<576x576xbf16>, vector<16x576xf32> -> vector<16x576xf32>
    %c0_9 = arith.constant 0 : index
    %c0_10 = arith.constant 0 : index
    %11 = vector.load %arg5[%c0_9, %c0_10] : memref<576x576xbf16, #tpu.memory_space<vmem>>, vector<576x576xbf16>
    %cst_11 = arith.constant dense<0.000000e+00> : vector<16x576xf32>
    %12 = tpu.matmul %8, %11, %cst_11 {dimension_numbers = #tpu.dot_dimension_numbers<[1], [0], [0], [1], [0, 0, 1, 1], [], []>} : vector<16x576xbf16>, vector<576x576xbf16>, vector<16x576xf32> -> vector<16x576xf32>
    %13 = arith.truncf %10 : vector<16x576xf32> to vector<16x576xbf16>
    %14 = arith.truncf %12 : vector<16x576xf32> to vector<16x576xbf16>
    %c0_12 = arith.constant 0 : index
    %c0_13 = arith.constant 0 : index
    %15 = vector.load %arg6[%c0_12, %c0_13] : memref<576x72xbf16, #tpu.memory_space<vmem>>, vector<576x72xbf16>
    %cst_14 = arith.constant dense<0.000000e+00> : vector<16x72xf32>
    %16 = tpu.matmul %13, %15, %cst_14 {dimension_numbers = #tpu.dot_dimension_numbers<[1], [0], [0], [1], [0, 0, 1, 1], [], []>} : vector<16x576xbf16>, vector<576x72xbf16>, vector<16x72xf32> -> vector<16x72xf32>
    %c0_15 = arith.constant 0 : index
    %c0_16 = arith.constant 0 : index
    %17 = vector.load %arg7[%c0_15, %c0_16] : memref<576x72xbf16, #tpu.memory_space<vmem>>, vector<576x72xbf16>
    %cst_17 = arith.constant dense<0.000000e+00> : vector<16x72xf32>
    %18 = tpu.matmul %13, %17, %cst_17 {dimension_numbers = #tpu.dot_dimension_numbers<[1], [0], [0], [1], [0, 0, 1, 1], [], []>} : vector<16x576xbf16>, vector<576x72xbf16>, vector<16x72xf32> -> vector<16x72xf32>
    %c0_18 = arith.constant 0 : index
    %c0_19 = arith.constant 0 : index
    %19 = vector.load %arg8[%c0_18, %c0_19] : memref<576x72xbf16, #tpu.memory_space<vmem>>, vector<576x72xbf16>
    %cst_20 = arith.constant dense<0.000000e+00> : vector<16x72xf32>
    %20 = tpu.matmul %14, %19, %cst_20 {dimension_numbers = #tpu.dot_dimension_numbers<[1], [0], [0], [1], [0, 0, 1, 1], [], []>} : vector<16x576xbf16>, vector<576x72xbf16>, vector<16x72xf32> -> vector<16x72xf32>
    %21 = arith.addf %18, %20 : vector<16x72xf32>
    %cst_21 = arith.constant 0.000000e+00 : f32
    %22 = vector.broadcast %cst_21 : f32 to vector<16x72xf32>
    %23 = arith.cmpf oge, %16, %22 : vector<16x72xf32>
    %cst_22 = arith.constant 2.000000e-01 : f32
    %24 = vector.broadcast %cst_22 : f32 to vector<16x72xf32>
    %25 = arith.mulf %24, %16 : vector<16x72xf32>
    %26 = arith.select %23, %16, %25 : vector<16x72xi1>, vector<16x72xf32>
    %cst_23 = arith.constant 0.000000e+00 : f32
    %27 = vector.broadcast %cst_23 : f32 to vector<16x72xf32>
    %28 = arith.cmpf oge, %21, %27 : vector<16x72xf32>
    %cst_24 = arith.constant 2.000000e-01 : f32
    %29 = vector.broadcast %cst_24 : f32 to vector<16x72xf32>
    %30 = arith.mulf %29, %21 : vector<16x72xf32>
    %31 = arith.select %28, %21, %30 : vector<16x72xi1>, vector<16x72xf32>
    %c0_25 = arith.constant 0 : index
    %c0_26 = arith.constant 0 : index
    %32 = vector.load %arg10[%c0_25, %c0_26] : memref<1x72xf32, #tpu.memory_space<vmem>>, vector<1x72xf32>
    %cst_27 = arith.constant 0.000000e+00 : f32
    %33 = vector.broadcast %cst_27 : f32 to vector<1x72xf32>
    %34 = arith.cmpf ogt, %32, %33 : vector<1x72xf32>
    %cst_28 = arith.constant -1.000000e+30 : f32
    %35 = vector.shape_cast %34 : vector<1x72xi1> to vector<1x72xi1>
    %36 = vector.broadcast %35 : vector<1x72xi1> to vector<16x72xi1>
    %37 = vector.broadcast %cst_28 : f32 to vector<16x72xf32>
    %38 = arith.select %36, %31, %37 : vector<16x72xi1>, vector<16x72xf32>
    %39 = arith.maximumf %26, %38 : vector<16x72xf32>
    %40 = arith.subf %26, %39 : vector<16x72xf32>
    %41 = math.exp %40 : vector<16x72xf32>
    %42 = arith.subf %38, %39 : vector<16x72xf32>
    %43 = math.exp %42 : vector<16x72xf32>
    %44 = arith.addf %41, %43 : vector<16x72xf32>
    %45 = tpu.reciprocal %44 {approx = true} : vector<16x72xf32> -> vector<16x72xf32>
    %46 = arith.mulf %41, %45 : vector<16x72xf32>
    %47 = arith.truncf %46 : vector<16x72xf32> to vector<16x72xbf16>
    %c0_29 = arith.constant 0 : index
    %c0_30 = arith.constant 0 : index
    %48 = vector.load %arg9[%c0_29, %c0_30] : memref<72x576xbf16, #tpu.memory_space<vmem>>, vector<72x576xbf16>
    %cst_31 = arith.constant dense<0.000000e+00> : vector<16x576xf32>
    %49 = tpu.matmul %47, %48, %cst_31 {dimension_numbers = #tpu.dot_dimension_numbers<[1], [0], [0], [1], [0, 0, 1, 1], [], []>} : vector<16x72xbf16>, vector<72x576xbf16>, vector<16x576xf32> -> vector<16x576xf32>
    %50 = arith.subf %10, %12 : vector<16x576xf32>
    %51 = arith.mulf %49, %50 : vector<16x576xf32>
    %52 = arith.addf %12, %51 : vector<16x576xf32>
    %c0_32 = arith.constant 0 : index
    %c0_33 = arith.constant 0 : index
    %53 = vector.load %arg11[%c0_32, %c0_33] : memref<1x576xf32, #tpu.memory_space<vmem>>, vector<1x576xf32>
    %54 = vector.broadcast %53 : vector<1x576xf32> to vector<16x576xf32>
    %55 = arith.addf %52, %54 : vector<16x576xf32>
    %cst_34 = arith.constant 0.000000e+00 : f32
    %56 = vector.broadcast %cst_34 : f32 to vector<16x576xf32>
    %57 = arith.maximumf %55, %56 : vector<16x576xf32>
    %c0_35 = arith.constant 0 : index
    %c0_36 = arith.constant 0 : index
    %58 = vector.load %arg12[%c0_35, %c0_36] : memref<16x576xf32, #tpu.memory_space<vmem>>, vector<16x576xf32>
    tpu.vector_store %arg12[%c0_35, %c0_36], %57 {strides = array<i32>} : memref<16x576xf32, #tpu.memory_space<vmem>>, vector<16x576xf32>,
    return
  }
  func.func @transform_0(%arg0: i32) -> (i32, i32) {
    %c0_i32 = arith.constant 0 : i32
    %c0_i32_0 = arith.constant 0 : i32
    return %arg0, %c0_i32 : i32, i32
  }
  func.func @transform_1(%arg0: i32) -> (i32, i32) {
    %c0_i32 = arith.constant 0 : i32
    %c0_i32_0 = arith.constant 0 : i32
    %c0_i32_1 = arith.constant 0 : i32
    return %c0_i32, %c0_i32_0 : i32, i32
  }
  func.func @transform_2(%arg0: i32) -> (i32, i32) {
    %c0_i32 = arith.constant 0 : i32
    %c0_i32_0 = arith.constant 0 : i32
    %c0_i32_1 = arith.constant 0 : i32
    return %c0_i32, %c0_i32_0 : i32, i32
  }
  func.func @transform_3(%arg0: i32) -> (i32, i32) {
    %c0_i32 = arith.constant 0 : i32
    %c0_i32_0 = arith.constant 0 : i32
    %c0_i32_1 = arith.constant 0 : i32
    return %c0_i32, %c0_i32_0 : i32, i32
  }
  func.func @transform_4(%arg0: i32) -> (i32, i32) {
    %c0_i32 = arith.constant 0 : i32
    %c0_i32_0 = arith.constant 0 : i32
    %c0_i32_1 = arith.constant 0 : i32
    return %c0_i32, %c0_i32_0 : i32, i32
  }
  func.func @transform_5(%arg0: i32) -> (i32, i32) {
    %c0_i32 = arith.constant 0 : i32
    %c0_i32_0 = arith.constant 0 : i32
    %c0_i32_1 = arith.constant 0 : i32
    return %c0_i32, %c0_i32_0 : i32, i32
  }
  func.func @transform_6(%arg0: i32) -> (i32, i32) {
    %c0_i32 = arith.constant 0 : i32
    %c0_i32_0 = arith.constant 0 : i32
    %c0_i32_1 = arith.constant 0 : i32
    return %c0_i32, %c0_i32_0 : i32, i32
  }
  func.func @transform_7(%arg0: i32) -> (i32, i32) {
    %c0_i32 = arith.constant 0 : i32
    %c0_i32_0 = arith.constant 0 : i32
    %c0_i32_1 = arith.constant 0 : i32
    return %c0_i32, %c0_i32_0 : i32, i32
  }
  func.func @transform_8(%arg0: i32) -> (i32, i32) {
    %c0_i32 = arith.constant 0 : i32
    %c0_i32_0 = arith.constant 0 : i32
    %c0_i32_1 = arith.constant 0 : i32
    return %c0_i32, %c0_i32_0 : i32, i32
  }
  func.func @transform_9(%arg0: i32) -> (i32, i32) {
    %c0_i32 = arith.constant 0 : i32
    %c0_i32_0 = arith.constant 0 : i32
    %c0_i32_1 = arith.constant 0 : i32
    return %c0_i32, %c0_i32_0 : i32, i32
  }
  func.func @transform_10(%arg0: i32) -> (i32, i32) {
    %c0_i32 = arith.constant 0 : i32
    %c0_i32_0 = arith.constant 0 : i32
    %c0_i32_1 = arith.constant 0 : i32
    return %c0_i32, %c0_i32_0 : i32, i32
  }
  func.func @transform_11(%arg0: i32) -> (i32, i32) {
    %c0_i32 = arith.constant 0 : i32
    %c0_i32_0 = arith.constant 0 : i32
    return %arg0, %c0_i32 : i32, i32
  }
}

</mosaic_0001>

<llo_original>
// kernel: encoder_forward.1
$region0: #{encoder_forward.1}
  #allocation0 [shape = 'u32[]', space=smem, size = 0x4, offset = 0x4, fixed_abs, tag = 'smem constant byte address 0x4 - core index']
  #allocation1 [shape = 'u32[144,128]{1,0:T(1,128)}', space=vmem, size = 0x12000, scoped, tag = 'internal scratch']
  %s0 = inlined_call_operand.vmem [shape: bf16[16,72], index: 0, kind: input, shape index: {}]
  %s1 = inlined_call_operand.hbm [shape: bf16[72,576], index: 1, kind: input, shape index: {}]
  %s2 = inlined_call_operand.vmem [shape: f32[1,576], index: 2, kind: input, shape index: {}]
  %s3 = inlined_call_operand.vmem [shape: bf16[576,576], index: 3, kind: input, shape index: {}]
  %s4 = inlined_call_operand.hbm [shape: bf16[576,576], index: 4, kind: input, shape index: {}]
  %s5 = inlined_call_operand.vmem [shape: bf16[576,72], index: 5, kind: input, shape index: {}]
  %s6 = inlined_call_operand.vmem [shape: bf16[576,72], index: 6, kind: input, shape index: {}]
  %s7 = inlined_call_operand.vmem [shape: bf16[576,72], index: 7, kind: input, shape index: {}]
  %s8 = inlined_call_operand.hbm [shape: bf16[72,576], index: 8, kind: input, shape index: {}]
  %s9 = inlined_call_operand.vmem [shape: f32[1,72], index: 9, kind: input, shape index: {}]
  %s10 = inlined_call_operand.vmem [shape: f32[1,576], index: 10, kind: input, shape index: {}]
  %s11 = inlined_call_operand.hbm [shape: f32[16,576], index: 11, kind: output, shape index: {}]
  %s12 = sld [smem:[#allocation0]]
  $region66: #{encoder_forward.1} parent=0
    _
  %s14 = ssub.s32 1, %s12
  %s15 = scalar_select 0, %s14, %s12
  $region1: #{encoder_forward.1} parent=0
    #allocation2 [shape = 'u8[92160]{0}', space=vmem, size = 0x16800, scoped, tag = 'input window, operand 1, single buffered']
    #allocation3 [shape = 's32[1]{0}', space=sflag, size = 0x4, scoped, tag = 'scoped memory for encoder_forward.1']
    #allocation4 [shape = 's32[1]{0}', space=sflag, size = 0x4, scoped, tag = 'scoped memory for encoder_forward.1']
    #allocation5 [shape = 'u8[737280]{0}', space=vmem, size = 0xb4000, scoped, tag = 'input window, operand 4, single buffered']
    #allocation6 [shape = 's32[1]{0}', space=sflag, size = 0x4, scoped, tag = 'scoped memory for encoder_forward.1']
    #allocation7 [shape = 'u8[92160]{0}', space=vmem, size = 0x16800, scoped, tag = 'input window, operand 8, single buffered']
    #allocation8 [shape = 'u8[40960]{0}', space=vmem, size = 0xa000, scoped, tag = 'output window, operand 0, single buffered']
    %16 = vsyncpa [#allocation3], 0
    %17 = vsyncpa [#allocation6], 0
    %18 = vsyncpa [#allocation4], 0
    // Predicated region
    $region2: #{encoder_forward.1} parent=1 // pred_check
      _
    $region3: #{encoder_forward.1} parent=1 // pred_check_branch
      %20 = sbr.rel (0) target = $region5
    $region4: #{encoder_forward.1} parent=1 // pred_region
      _
    $region5: #{encoder_forward.1} parent=1 // pred_fallthru
      _
    // Predicated region
    $region6: #{encoder_forward.1} parent=1 // pred_check
      _
    $region7: #{encoder_forward.1} parent=1 // pred_check_branch
      %22 = sbr.rel (0) target = $region9
    $region8: #{encoder_forward.1} parent=1 // pred_region
      %s24 = ssub.s32 2880, 2880
      %25 = vsyncadd [#allocation3], %s24
      %s26 = sshll.u32 [#allocation2], 4
      %s27 = int_to_ptr.vmem [resolvable:$true] %s26
      %32 = dma.hbm_to_vmem [thread:$0]  %s1, 2880, %s27, [#allocation3], 320, 320, 20
    $region9: #{encoder_forward.1} parent=1 // pred_fallthru
      _
    // Predicated region
    $region10: #{encoder_forward.1} parent=1 // pred_check
      _
    $region11: #{encoder_forward.1} parent=1 // pred_check_branch
      %34 = sbr.rel (0) target = $region13
    $region12: #{encoder_forward.1} parent=1 // pred_region
      _
    $region13: #{encoder_forward.1} parent=1 // pred_fallthru
      _
    // Predicated region
    $region14: #{encoder_forward.1} parent=1 // pred_check
      _
    $region15: #{encoder_forward.1} parent=1 // pred_check_branch
      %36 = sbr.rel (0) target = $region17
    $region16: #{encoder_forward.1} parent=1 // pred_region
      _
    $region17: #{encoder_forward.1} parent=1 // pred_fallthru
      _
    // Predicated region
    $region18: #{encoder_forward.1} parent=1 // pred_check
      _
    $region19: #{encoder_forward.1} parent=1 // pred_check_branch
      %38 = sbr.rel (0) target = $region21
    $region20: #{encoder_forward.1} parent=1 // pred_region
      %s40 = ssub.s32 23040, 23040
      %41 = vsyncadd [#allocation6], %s40
      %s42 = sshll.u32 [#allocation5], 4
      %s43 = int_to_ptr.vmem [resolvable:$true] %s42
      %48 = dma.hbm_to_vmem [thread:$0]  %s4, 23040, %s43, [#allocation6], 320, 320, 20
    $region21: #{encoder_forward.1} parent=1 // pred_fallthru
      _
    // Predicated region
    $region22: #{encoder_forward.1} parent=1 // pred_check
      _
    $region23: #{encoder_forward.1} parent=1 // pred_check_branch
      %50 = sbr.rel (0) target = $region25
    $region24: #{encoder_forward.1} parent=1 // pred_region
      _
    $region25: #{encoder_forward.1} parent=1 // pred_fallthru
      _
    // Predicated region
    $region26: #{encoder_forward.1} parent=1 // pred_check
      _
    $region27: #{encoder_forward.1} parent=1 // pred_check_branch
      %52 = sbr.rel (0) target = $region29
    $region28: #{encoder_forward.1} parent=1 // pred_region
      _
    $region29: #{encoder_forward.1} parent=1 // pred_fallthru
      _
    // Predicated region
    $region30: #{encoder_forward.1} parent=1 // pred_check
      _
    $region31: #{encoder_forward.1} parent=1 // pred_check_branch
      %54 = sbr.rel (0) target = $region33
    $region32: #{encoder_forward.1} parent=1 // pred_region
      _
    $region33: #{encoder_forward.1} parent=1 // pred_fallthru
      _
    // Predicated region
    $region34: #{encoder_forward.1} parent=1 // pred_check
      _
    $region35: #{encoder_forward.1} parent=1 // pred_check_branch
      %56 = sbr.rel (0) target = $region37
    $region36: #{encoder_forward.1} parent=1 // pred_region
      %s58 = ssub.s32 2880, 2880
      %59 = vsyncadd [#allocation6], %s58
      %s60 = sshll.u32 [#allocation7], 4
      %s61 = int_to_ptr.vmem [resolvable:$true] %s60
      %66 = dma.hbm_to_vmem [thread:$0]  %s8, 2880, %s61, [#allocation6], 320, 320, 20
    $region37: #{encoder_forward.1} parent=1 // pred_fallthru
      _
    // Predicated region
    $region38: #{encoder_forward.1} parent=1 // pred_check
      _
    $region39: #{encoder_forward.1} parent=1 // pred_check_branch
      %68 = sbr.rel (0) target = $region41
    $region40: #{encoder_forward.1} parent=1 // pred_region
      _
    $region41: #{encoder_forward.1} parent=1 // pred_fallthru
      _
    // Predicated region
    $region42: #{encoder_forward.1} parent=1 // pred_check
      _
    $region43: #{encoder_forward.1} parent=1 // pred_check_branch
      %70 = sbr.rel (0) target = $region45
    $region44: #{encoder_forward.1} parent=1 // pred_region
      _
    $region45: #{encoder_forward.1} parent=1 // pred_fallthru
      _
    // Predicated region
    $region46: #{encoder_forward.1} parent=1 // pred_check
      _
    $region47: #{encoder_forward.1} parent=1 // pred_check_branch
      %72 = sbr.rel (0) target = $region49
    $region48: #{encoder_forward.1} parent=1 // pred_region
      %73 = dma.done [#allocation3], 2880
    $region49: #{encoder_forward.1} parent=1 // pred_fallthru
      _
    // Predicated region
    $region50: #{encoder_forward.1} parent=1 // pred_check
      _
    $region51: #{encoder_forward.1} parent=1 // pred_check_branch
      %75 = sbr.rel (0) target = $region53
    $region52: #{encoder_forward.1} parent=1 // pred_region
      %76 = dma.done [#allocation6], 23040
    $region53: #{encoder_forward.1} parent=1 // pred_fallthru
      _
    // Predicated region
    $region54: #{encoder_forward.1} parent=1 // pred_check
      _
    $region55: #{encoder_forward.1} parent=1 // pred_check_branch
      %78 = sbr.rel (0) target = $region57
    $region56: #{encoder_forward.1} parent=1 // pred_region
      %79 = dma.done [#allocation6], 2880
    $region57: #{encoder_forward.1} parent=1 // pred_fallthru
      _
    %v81 = vld [vmem:[%s0] sm:$0xf]
    %v82 = vld [vmem:[%s0 + $0x4] sm:$0xf]
    %v83 = vld [vmem:[#allocation2] sm:$0xff]
    %v84 = vld [vmem:[#allocation2 + $0x8] sm:$0xff]
    %v85 = vld [vmem:[#allocation2 + $0x10] sm:$0xf]
    %v86 = vld [vmem:[#allocation2 + $0x14] sm:$0xff]
    %v87 = vld [vmem:[#allocation2 + $0x1c] sm:$0xff]
    %v88 = vld [vmem:[#allocation2 + $0x24] sm:$0xf]
    %v89 = vld [vmem:[#allocation2 + $0x28] sm:$0xff]
    %v90 = vld [vmem:[#allocation2 + $0x30] sm:$0xff]
    %v91 = vld [vmem:[#allocation2 + $0x38] sm:$0xf]
    %v92 = vld [vmem:[#allocation2 + $0x3c] sm:$0xff]
    %v93 = vld [vmem:[#allocation2 + $0x44] sm:$0xff]
    %v94 = vld [vmem:[#allocation2 + $0x4c] sm:$0xf]
    %v95 = vld [vmem:[#allocation2 + $0x50] sm:$0xff]
    %v96 = vld [vmem:[#allocation2 + $0x58] sm:$0xff]
    %v97 = vld [vmem:[#allocation2 + $0x60] sm:$0xf]
    %v98 = vld [vmem:[#allocation2 + $0x64] sm:$0xff]
    %v99 = vld [vmem:[#allocation2 + $0x6c] sm:$0xff]
    %v100 = vld [vmem:[#allocation2 + $0x74] sm:$0xf]
    %v101 = vld [vmem:[#allocation2 + $0x78] sm:$0xff]
    %v102 = vld [vmem:[#allocation2 + $0x80] sm:$0xff]
    %v103 = vld [vmem:[#allocation2 + $0x88] sm:$0xf]
    %v104 = vld [vmem:[#allocation2 + $0x8c] sm:$0xff]
    %v105 = vld [vmem:[#allocation2 + $0x94] sm:$0xff]
    %v106 = vld [vmem:[#allocation2 + $0x9c] sm:$0xf]
    %v107 = vld [vmem:[#allocation2 + $0xa0] sm:$0xff]
    %v108 = vld [vmem:[#allocation2 + $0xa8] sm:$0xff]
    %v109 = vld [vmem:[#allocation2 + $0xb0] sm:$0xf]
    %v110 = vld [vmem:[%s2] sm:$0x1f]
    %v112 = vlaneseq
    %v113 = vshrl.u32 %v112, 7
    %v114 = vsub.s32 0, %v113
    %v115 = vrot.slane %v110, %v114
    %v116 = vlaneseq
    %v117 = vshrl.u32 %v116, 7
    %v118 = vsub.s32 1, %v117
    %v119 = vrot.slane %v110, %v118
    %v120 = vlaneseq
    %v121 = vshrl.u32 %v120, 7
    %v122 = vsub.s32 2, %v121
    %v123 = vrot.slane %v110, %v122
    %v124 = vlaneseq
    %v125 = vshrl.u32 %v124, 7
    %v126 = vsub.s32 3, %v125
    %v127 = vrot.slane %v110, %v126
    %v128 = vlaneseq
    %v129 = vshrl.u32 %v128, 7
    %v130 = vsub.s32 4, %v129
    %v131 = vrot.slane %v110, %v130
    %v139 = vunpack.c.l.b16 %v81
    %v140 = vunpack.c.l.b16 %v82
    %v141 = vpack.c.b16 %v140, %v139
    %v169 = vunpack.c.l.b16 %v83
    %v170 = vunpack.c.h.b16 %v83
    %v171 = vunpack.c.l.b16 %v84
    %v172 = vunpack.c.h.b16 %v84
    %v173 = vunpack.c.l.b16 %v85
    %v174 = vunpack.c.l.b16 %v86
    %v175 = vunpack.c.h.b16 %v86
    %v176 = vunpack.c.l.b16 %v87
    %v177 = vunpack.c.h.b16 %v87
    %v178 = vunpack.c.l.b16 %v88
    %v179 = vunpack.c.l.b16 %v89
    %v180 = vunpack.c.h.b16 %v89
    %v181 = vunpack.c.l.b16 %v90
    %v182 = vunpack.c.h.b16 %v90
    %v183 = vunpack.c.l.b16 %v91
    %v184 = vunpack.c.l.b16 %v92
    %v185 = vunpack.c.h.b16 %v92
    %v186 = vunpack.c.l.b16 %v93
    %v187 = vunpack.c.h.b16 %v93
    %v188 = vunpack.c.l.b16 %v94
    %v189 = vunpack.c.l.b16 %v95
    %v190 = vunpack.c.h.b16 %v95
    %v191 = vunpack.c.l.b16 %v96
    %v192 = vunpack.c.h.b16 %v96
    %v193 = vunpack.c.l.b16 %v97
    %v194 = vunpack.c.l.b16 %v98
    %v195 = vunpack.c.h.b16 %v98
    %v196 = vunpack.c.l.b16 %v99
    %v197 = vunpack.c.h.b16 %v99
    %v198 = vunpack.c.l.b16 %v100
    %v199 = vunpack.c.l.b16 %v101
    %v200 = vunpack.c.h.b16 %v101
    %v201 = vunpack.c.l.b16 %v102
    %v202 = vunpack.c.h.b16 %v102
    %v203 = vunpack.c.l.b16 %v103
    %v204 = vunpack.c.l.b16 %v104
    %v205 = vunpack.c.h.b16 %v104
    %v206 = vunpack.c.l.b16 %v105
    %v207 = vunpack.c.h.b16 %v105
    %v208 = vunpack.c.l.b16 %v106
    %v209 = vunpack.c.l.b16 %v107
    %v210 = vunpack.c.h.b16 %v107
    %v211 = vunpack.c.l.b16 %v108
    %v212 = vunpack.c.h.b16 %v108
    %v213 = vunpack.c.l.b16 %v109
    %v214 = vpack.c.b16 %v174, %v169
    %v215 = vpack.c.b16 %v175, %v170
    %v216 = vpack.c.b16 %v176, %v171
    %v217 = vpack.c.b16 %v177, %v172
    %v218 = vpack.c.b16 %v178, %v173
    %v219 = vpack.c.b16 %v184, %v179
    %v220 = vpack.c.b16 %v185, %v180
    %v221 = vpack.c.b16 %v186, %v181
    %v222 = vpack.c.b16 %v187, %v182
    %v223 = vpack.c.b16 %v188, %v183
    %v224 = vpack.c.b16 %v194, %v189
    %v225 = vpack.c.b16 %v195, %v190
    %v226 = vpack.c.b16 %v196, %v191
    %v227 = vpack.c.b16 %v197, %v192
    %v228 = vpack.c.b16 %v198, %v193
    %v229 = vpack.c.b16 %v204, %v199
    %v230 = vpack.c.b16 %v205, %v200
    %v231 = vpack.c.b16 %v206, %v201
    %v232 = vpack.c.b16 %v207, %v202
    %v233 = vpack.c.b16 %v208, %v203
    %v234 = vpack.c.b16 %v209, %v209
    %v235 = vpack.c.b16 %v210, %v210
    %v236 = vpack.c.b16 %v211, %v211
    %v237 = vpack.c.b16 %v212, %v212
    %v238 = vpack.c.b16 %v213, %v213
    %vm259 = vcmask 588800
    %v261 = vsel %vm259, %v141, 0
    %vm263 = vcmask 1043456
    %v265 = vsel %vm263, %v234, 0
    %v268 = vsel %vm263, %v235, 0
    %v271 = vsel %vm263, %v236, 0
    %v274 = vsel %vm263, %v237, 0
    %v277 = vsel %vm263, %v238, 0
    %279 = vmatprep.subr.bf16.mxu0 %v215
    %280 = vmatpush1.bf16.msra.mxu0 %v214
    %281 = vmatprep.subr.bf16.mxu0 %v220
    %282 = vmatpush1.bf16.msra.mxu0 %v219
    %283 = vmatprep.subr.bf16.mxu0 %v225
    %284 = vmatpush1.bf16.msra.mxu0 %v224
    %285 = vmatprep.subr.bf16.mxu0 %v230
    %286 = vmatpush1.bf16.msra.mxu0 %v229
    %287 = vmatprep.subr.bf16.mxu0 %v268
    %288 = vmatpush1.bf16.msra.mxu0 %v265
    %289 = vmatprep.subr.bf16.mxu0 0
    %290 = vmatpush1.bf16.msra.mxu0 0
    %291 = vmatprep.subr.bf16.mxu0 0
    %292 = vmatpush1.bf16.msra.mxu0 0
    %293 = vmatprep.subr.bf16.mxu0 0
    %294 = vmatpush1.bf16.msra.mxu0 0
    %295 = vmatprep.subr.bf16.mxu0 0
    %296 = vmatpush1.bf16.msra.mxu0 0
    %297 = vmatprep.subr.bf16.mxu0 0
    %298 = vmatpush1.bf16.msra.mxu0 0
    %299 = vmatprep.subr.bf16.mxu0 0
    %300 = vmatpush1.bf16.msra.mxu0 0
    %301 = vmatprep.subr.bf16.mxu0 0
    %302 = vmatpush1.bf16.msra.mxu0 0
    %303 = vmatprep.subr.bf16.mxu0 0
    %304 = vmatpush1.bf16.msra.mxu0 0
    %305 = vmatprep.subr.bf16.mxu0 0
    %306 = vmatpush1.bf16.msra.mxu0 0
    %307 = vmatprep.subr.bf16.mxu0 0
    %308 = vmatpush1.bf16.msra.mxu0 0
    %309 = vmatprep.subr.bf16.mxu0 0
    %310 = vmatpush1.bf16.msra.mxu0 0
    %311 = vmatprep.mubr.bf16.mxu0 0
    %312 = vmatmul.mubr.bf16.gmra.mrb[0].mxu0 %v261
    %v313 = vpop.f32.mrb[0].mxu0
    %v314 = vadd.f32 %v115, %v313
    %v315 = vpop.f32.mrb[0].mxu0
    %v316 = vadd.f32 %v119, %v315
    %v317 = vpop.f32.mrb[0].mxu0
    %v318 = vadd.f32 %v115, %v317
    %v319 = vpop.f32.mrb[0].mxu0
    %v320 = vadd.f32 %v119, %v319
    %321 = vdwg.mxu0
    %322 = vmatprep.subr.bf16.mxu0 %v217
    %323 = vmatpush1.bf16.msra.mxu0 %v216
    %324 = vmatprep.subr.bf16.mxu0 %v222
    %325 = vmatpush1.bf16.msra.mxu0 %v221
    %326 = vmatprep.subr.bf16.mxu0 %v227
    %327 = vmatpush1.bf16.msra.mxu0 %v226
    %328 = vmatprep.subr.bf16.mxu0 %v232
    %329 = vmatpush1.bf16.msra.mxu0 %v231
    %330 = vmatprep.subr.bf16.mxu0 %v274
    %331 = vmatpush1.bf16.msra.mxu0 %v271
    %332 = vmatprep.subr.bf16.mxu0 0
    %333 = vmatpush1.bf16.msra.mxu0 0
    %334 = vmatprep.subr.bf16.mxu0 0
    %335 = vmatpush1.bf16.msra.mxu0 0
    %336 = vmatprep.subr.bf16.mxu0 0
    %337 = vmatpush1.bf16.msra.mxu0 0
    %338 = vmatprep.subr.bf16.mxu0 0
    %339 = vmatpush1.bf16.msra.mxu0 0
    %340 = vmatprep.subr.bf16.mxu0 0
    %341 = vmatpush1.bf16.msra.mxu0 0
    %342 = vmatprep.subr.bf16.mxu0 0
    %343 = vmatpush1.bf16.msra.mxu0 0
    %344 = vmatprep.subr.bf16.mxu0 0
    %345 = vmatpush1.bf16.msra.mxu0 0
    %346 = vmatprep.subr.bf16.mxu0 0
    %347 = vmatpush1.bf16.msra.mxu0 0
    %348 = vmatprep.subr.bf16.mxu0 0
    %349 = vmatpush1.bf16.msra.mxu0 0
    %350 = vmatprep.subr.bf16.mxu0 0
    %351 = vmatpush1.bf16.msra.mxu0 0
    %352 = vmatprep.subr.bf16.mxu0 0
    %353 = vmatpush1.bf16.msra.mxu0 0
    %354 = vmatprep.mubr.bf16.mxu0 0
    %355 = vmatmul.mubr.bf16.gmra.mrb[0].mxu0 %v261
    %v356 = vpop.f32.mrb[0].mxu0
    %v357 = vadd.f32 %v123, %v356
    %v358 = vpop.f32.mrb[0].mxu0
    %v359 = vadd.f32 %v127, %v358
    %v360 = vpop.f32.mrb[0].mxu0
    %v361 = vadd.f32 %v123, %v360
    %v362 = vpop.f32.mrb[0].mxu0
    %v363 = vadd.f32 %v127, %v362
    %364 = vdwg.mxu0
    %365 = vmatprep.subr.bf16.mxu0 0
    %366 = vmatpush1.bf16.msra.mxu0 %v218
    %367 = vmatprep.subr.bf16.mxu0 0
    %368 = vmatpush1.bf16.msra.mxu0 %v223
    %369 = vmatprep.subr.bf16.mxu0 0
    %370 = vmatpush1.bf16.msra.mxu0 %v228
    %371 = vmatprep.subr.bf16.mxu0 0
    %372 = vmatpush1.bf16.msra.mxu0 %v233
    %373 = vmatprep.subr.bf16.mxu0 0
    %374 = vmatpush1.bf16.msra.mxu0 %v277
    %375 = vmatprep.subr.bf16.mxu0 0
    %376 = vmatpush1.bf16.msra.mxu0 0
    %377 = vmatprep.subr.bf16.mxu0 0
    %378 = vmatpush1.bf16.msra.mxu0 0
    %379 = vmatprep.subr.bf16.mxu0 0
    %380 = vmatpush1.bf16.msra.mxu0 0
    %381 = vmatprep.subr.bf16.mxu0 0
    %382 = vmatpush1.bf16.msra.mxu0 0
    %383 = vmatprep.subr.bf16.mxu0 0
    %384 = vmatpush1.bf16.msra.mxu0 0
    %385 = vmatprep.subr.bf16.mxu0 0
    %386 = vmatpush1.bf16.msra.mxu0 0
    %387 = vmatprep.subr.bf16.mxu0 0
    %388 = vmatpush1.bf16.msra.mxu0 0
    %389 = vmatprep.subr.bf16.mxu0 0
    %390 = vmatpush1.bf16.msra.mxu0 0
    %391 = vmatprep.subr.bf16.mxu0 0
    %392 = vmatpush1.bf16.msra.mxu0 0
    %393 = vmatprep.subr.bf16.mxu0 0
    %394 = vmatpush1.bf16.msra.mxu0 0
    %395 = vmatprep.subr.bf16.mxu0 0
    %396 = vmatpush1.bf16.msra.mxu0 0
    %397 = vmatprep.mubr.bf16.mxu0 0
    %398 = vmatmul.mubr.bf16.gmra.mrb[0].mxu0 %v261
    %v399 = vpop.f32.mrb[0].mxu0
    %v400 = vadd.f32 %v131, %v399
    %v401 = vpop.f32.mrb[0].mxu0
    %v402 = vpop.f32.mrb[0].mxu0
    %v403 = vadd.f32 %v131, %v402
    %v404 = vpop.f32.mrb[0].mxu0
    %405 = vdwg.mxu0
    %v406 = vmax.f32 %v314, 0.0
    %v407 = vmax.f32 %v316, 0.0
    %v408 = vmax.f32 %v357, 0.0
    %v409 = vmax.f32 %v359, 0.0
    %v410 = vmax.f32 %v400, 0.0
    %v411 = vmax.f32 %v318, 0.0
    %v412 = vmax.f32 %v320, 0.0
    %v413 = vmax.f32 %v361, 0.0
    %v414 = vmax.f32 %v363, 0.0
    %v415 = vmax.f32 %v403, 0.0
    %v416 = vpack.c.bf16 %v411, %v406
    %v417 = vpack.c.bf16 %v412, %v407
    %v418 = vpack.c.bf16 %v413, %v408
    %v419 = vpack.c.bf16 %v414, %v409
    %v420 = vpack.c.bf16 %v415, %v410
    %v421 = vld [vmem:[%s3] sm:$0xff]
    %v422 = vld [vmem:[%s3 + $0x8] sm:$0xff]
    %v423 = vld [vmem:[%s3 + $0x10] sm:$0xf]
    %v424 = vld [vmem:[%s3 + $0x14] sm:$0xff]
    %v425 = vld [vmem:[%s3 + $0x1c] sm:$0xff]
    %v426 = vld [vmem:[%s3 + $0x24] sm:$0xf]
    %v427 = vld [vmem:[%s3 + $0x28] sm:$0xff]
    %v428 = vld [vmem:[%s3 + $0x30] sm:$0xff]
    %v429 = vld [vmem:[%s3 + $0x38] sm:$0xf]
    %v430 = vld [vmem:[%s3 + $0x3c] sm:$0xff]
    %v431 = vld [vmem:[%s3 + $0x44] sm:$0xff]
    %v432 = vld [vmem:[%s3 + $0x4c] sm:$0xf]
    %v433 = vld [vmem:[%s3 + $0x50] sm:$0xff]
    %v434 = vld [vmem:[%s3 + $0x58] sm:$0xff]
    %v435 = vld [vmem:[%s3 + $0x60] sm:$0xf]
    %v436 = vld [vmem:[%s3 + $0x64] sm:$0xff]
    %v437 = vld [vmem:[%s3 + $0x6c] sm:$0xff]
    %v438 = vld [vmem:[%s3 + $0x74] sm:$0xf]
    %v439 = vld [vmem:[%s3 + $0x78] sm:$0xff]
    %v440 = vld [vmem:[%s3 + $0x80] sm:$0xff]
    %v441 = vld [vmem:[%s3 + $0x88] sm:$0xf]
    %v442 = vld [vmem:[%s3 + $0x8c] sm:$0xff]
    %v443 = vld [vmem:[%s3 + $0x94] sm:$0xff]
    %v444 = vld [vmem:[%s3 + $0x9c] sm:$0xf]
    %v445 = vld [vmem:[%s3 + $0xa0] sm:$0xff]
    %v446 = vld [vmem:[%s3 + $0xa8] sm:$0xff]
    %v447 = vld [vmem:[%s3 + $0xb0] sm:$0xf]
    %v448 = vld [vmem:[%s3 + $0xb4] sm:$0xff]
    %v449 = vld [vmem:[%s3 + $0xbc] sm:$0xff]
    %v450 = vld [vmem:[%s3 + $0xc4] sm:$0xf]
    %v451 = vld [vmem:[%s3 + $0xc8] sm:$0xff]
    %v452 = vld [vmem:[%s3 + $0xd0] sm:$0xff]
    %v453 = vld [vmem:[%s3 + $0xd8] sm:$0xf]
    %v454 = vld [vmem:[%s3 + $0xdc] sm:$0xff]
    %v455 = vld [vmem:[%s3 + $0xe4] sm:$0xff]
    %v456 = vld [vmem:[%s3 + $0xec] sm:$0xf]
    %v457 = vld [vmem:[%s3 + $0xf0] sm:$0xff]
    %v458 = vld [vmem:[%s3 + $0xf8] sm:$0xff]
    %v459 = vld [vmem:[%s3 + $0x100] sm:$0xf]
    %v460 = vld [vmem:[%s3 + $0x104] sm:$0xff]
    %v461 = vld [vmem:[%s3 + $0x10c] sm:$0xff]
    %v462 = vld [vmem:[%s3 + $0x114] sm:$0xf]
    %v463 = vld [vmem:[%s3 + $0x118] sm:$0xff]
    %v464 = vld [vmem:[%s3 + $0x120] sm:$0xff]
    %v465 = vld [vmem:[%s3 + $0x128] sm:$0xf]
    %v466 = vld [vmem:[%s3 + $0x12c] sm:$0xff]
    %v467 = vld [vmem:[%s3 + $0x134] sm:$0xff]
    %v468 = vld [vmem:[%s3 + $0x13c] sm:$0xf]
    %v469 = vld [vmem:[%s3 + $0x140] sm:$0xff]
    %v470 = vld [vmem:[%s3 + $0x148] sm:$0xff]
    %v471 = vld [vmem:[%s3 + $0x150] sm:$0xf]
    %v472 = vld [vmem:[%s3 + $0x154] sm:$0xff]
    %v473 = vld [vmem:[%s3 + $0x15c] sm:$0xff]
    %v474 = vld [vmem:[%s3 + $0x164] sm:$0xf]
    %v475 = vld [vmem:[%s3 + $0x168] sm:$0xff]
    %v476 = vld [vmem:[%s3 + $0x170] sm:$0xff]
    %v477 = vld [vmem:[%s3 + $0x178] sm:$0xf]
    %v478 = vld [vmem:[%s3 + $0x17c] sm:$0xff]
    %v479 = vld [vmem:[%s3 + $0x184] sm:$0xff]
    %v480 = vld [vmem:[%s3 + $0x18c] sm:$0xf]
    %v481 = vld [vmem:[%s3 + $0x190] sm:$0xff]
    %v482 = vld [vmem:[%s3 + $0x198] sm:$0xff]
    %v483 = vld [vmem:[%s3 + $0x1a0] sm:$0xf]
    %v484 = vld [vmem:[%s3 + $0x1a4] sm:$0xff]
    %v485 = vld [vmem:[%s3 + $0x1ac] sm:$0xff]
    %v486 = vld [vmem:[%s3 + $0x1b4] sm:$0xf]
    %v487 = vld [vmem:[%s3 + $0x1b8] sm:$0xff]
    %v488 = vld [vmem:[%s3 + $0x1c0] sm:$0xff]
    %v489 = vld [vmem:[%s3 + $0x1c8] sm:$0xf]
    %v490 = vld [vmem:[%s3 + $0x1cc] sm:$0xff]
    %v491 = vld [vmem:[%s3 + $0x1d4] sm:$0xff]
    %v492 = vld [vmem:[%s3 + $0x1dc] sm:$0xf]
    %v493 = vld [vmem:[%s3 + $0x1e0] sm:$0xff]
    %v494 = vld [vmem:[%s3 + $0x1e8] sm:$0xff]
    %v495 = vld [vmem:[%s3 + $0x1f0] sm:$0xf]
    %v496 = vld [vmem:[%s3 + $0x1f4] sm:$0xff]
    %v497 = vld [vmem:[%s3 + $0x1fc] sm:$0xff]
    %v498 = vld [vmem:[%s3 + $0x204] sm:$0xf]
    %v499 = vld [vmem:[%s3 + $0x208] sm:$0xff]
    %v500 = vld [vmem:[%s3 + $0x210] sm:$0xff]
    %v501 = vld [vmem:[%s3 + $0x218] sm:$0xf]
    %v502 = vld [vmem:[%s3 + $0x21c] sm:$0xff]
    %v503 = vld [vmem:[%s3 + $0x224] sm:$0xff]
    %v504 = vld [vmem:[%s3 + $0x22c] sm:$0xf]
    %v505 = vld [vmem:[%s3 + $0x230] sm:$0xff]
    %v506 = vld [vmem:[%s3 + $0x238] sm:$0xff]
    %v507 = vld [vmem:[%s3 + $0x240] sm:$0xf]
    %v508 = vld [vmem:[%s3 + $0x244] sm:$0xff]
    %v509 = vld [vmem:[%s3 + $0x24c] sm:$0xff]
    %v510 = vld [vmem:[%s3 + $0x254] sm:$0xf]
    %v511 = vld [vmem:[%s3 + $0x258] sm:$0xff]
    %v512 = vld [vmem:[%s3 + $0x260] sm:$0xff]
    %v513 = vld [vmem:[%s3 + $0x268] sm:$0xf]
    %v514 = vld [vmem:[%s3 + $0x26c] sm:$0xff]
    %v515 = vld [vmem:[%s3 + $0x274] sm:$0xff]
    %v516 = vld [vmem:[%s3 + $0x27c] sm:$0xf]
    %v517 = vld [vmem:[%s3 + $0x280] sm:$0xff]
    %v518 = vld [vmem:[%s3 + $0x288] sm:$0xff]
    %v519 = vld [vmem:[%s3 + $0x290] sm:$0xf]
    %v520 = vld [vmem:[%s3 + $0x294] sm:$0xff]
    %v521 = vld [vmem:[%s3 + $0x29c] sm:$0xff]
    %v522 = vld [vmem:[%s3 + $0x2a4] sm:$0xf]
    %v523 = vld [vmem:[%s3 + $0x2a8] sm:$0xff]
    %v524 = vld [vmem:[%s3 + $0x2b0] sm:$0xff]
    %v525 = vld [vmem:[%s3 + $0x2b8] sm:$0xf]
    %v526 = vld [vmem:[%s3 + $0x2bc] sm:$0xff]
    %v527 = vld [vmem:[%s3 + $0x2c4] sm:$0xff]
    %v528 = vld [vmem:[%s3 + $0x2cc] sm:$0xf]
    %v529 = vld [vmem:[%s3 + $0x2d0] sm:$0xff]
    %v530 = vld [vmem:[%s3 + $0x2d8] sm:$0xff]
    %v531 = vld [vmem:[%s3 + $0x2e0] sm:$0xf]
    %v532 = vld [vmem:[%s3 + $0x2e4] sm:$0xff]
    %v533 = vld [vmem:[%s3 + $0x2ec] sm:$0xff]
    %v534 = vld [vmem:[%s3 + $0x2f4] sm:$0xf]
    %v535 = vld [vmem:[%s3 + $0x2f8] sm:$0xff]
    %v536 = vld [vmem:[%s3 + $0x300] sm:$0xff]
    %v537 = vld [vmem:[%s3 + $0x308] sm:$0xf]
    %v538 = vld [vmem:[%s3 + $0x30c] sm:$0xff]
    %v539 = vld [vmem:[%s3 + $0x314] sm:$0xff]
    %v540 = vld [vmem:[%s3 + $0x31c] sm:$0xf]
    %v541 = vld [vmem:[%s3 + $0x320] sm:$0xff]
    %v542 = vld [vmem:[%s3 + $0x328] sm:$0xff]
    %v543 = vld [vmem:[%s3 + $0x330] sm:$0xf]
    %v544 = vld [vmem:[%s3 + $0x334] sm:$0xff]
    %v545 = vld [vmem:[%s3 + $0x33c] sm:$0xff]
    %v546 = vld [vmem:[%s3 + $0x344] sm:$0xf]
    %v547 = vld [vmem:[%s3 + $0x348] sm:$0xff]
    %v548 = vld [vmem:[%s3 + $0x350] sm:$0xff]
    %v549 = vld [vmem:[%s3 + $0x358] sm:$0xf]
    %v550 = vld [vmem:[%s3 + $0x35c] sm:$0xff]
    %v551 = vld [vmem:[%s3 + $0x364] sm:$0xff]
    %v552 = vld [vmem:[%s3 + $0x36c] sm:$0xf]
    %v553 = vld [vmem:[%s3 + $0x370] sm:$0xff]
    %v554 = vld [vmem:[%s3 + $0x378] sm:$0xff]
    %v555 = vld [vmem:[%s3 + $0x380] sm:$0xf]
    %v556 = vld [vmem:[%s3 + $0x384] sm:$0xff]
    %v557 = vld [vmem:[%s3 + $0x38c] sm:$0xff]
    %v558 = vld [vmem:[%s3 + $0x394] sm:$0xf]
    %v559 = vld [vmem:[%s3 + $0x398] sm:$0xff]
    %v560 = vld [vmem:[%s3 + $0x3a0] sm:$0xff]
    %v561 = vld [vmem:[%s3 + $0x3a8] sm:$0xf]
    %v562 = vld [vmem:[%s3 + $0x3ac] sm:$0xff]
    %v563 = vld [vmem:[%s3 + $0x3b4] sm:$0xff]
    %v564 = vld [vmem:[%s3 + $0x3bc] sm:$0xf]
    %v565 = vld [vmem:[%s3 + $0x3c0] sm:$0xff]
    %v566 = vld [vmem:[%s3 + $0x3c8] sm:$0xff]
    %v567 = vld [vmem:[%s3 + $0x3d0] sm:$0xf]
    %v568 = vld [vmem:[%s3 + $0x3d4] sm:$0xff]
    %v569 = vld [vmem:[%s3 + $0x3dc] sm:$0xff]
    %v570 = vld [vmem:[%s3 + $0x3e4] sm:$0xf]
    %v571 = vld [vmem:[%s3 + $0x3e8] sm:$0xff]
    %v572 = vld [vmem:[%s3 + $0x3f0] sm:$0xff]
    %v573 = vld [vmem:[%s3 + $0x3f8] sm:$0xf]
    %v574 = vld [vmem:[%s3 + $0x3fc] sm:$0xff]
    %v575 = vld [vmem:[%s3 + $0x404] sm:$0xff]
    %v576 = vld [vmem:[%s3 + $0x40c] sm:$0xf]
    %v577 = vld [vmem:[%s3 + $0x410] sm:$0xff]
    %v578 = vld [vmem:[%s3 + $0x418] sm:$0xff]
    %v579 = vld [vmem:[%s3 + $0x420] sm:$0xf]
    %v580 = vld [vmem:[%s3 + $0x424] sm:$0xff]
    %v581 = vld [vmem:[%s3 + $0x42c] sm:$0xff]
    %v582 = vld [vmem:[%s3 + $0x434] sm:$0xf]
    %v583 = vld [vmem:[%s3 + $0x438] sm:$0xff]
    %v584 = vld [vmem:[%s3 + $0x440] sm:$0xff]
    %v585 = vld [vmem:[%s3 + $0x448] sm:$0xf]
    %v586 = vld [vmem:[%s3 + $0x44c] sm:$0xff]
    %v587 = vld [vmem:[%s3 + $0x454] sm:$0xff]
    %v588 = vld [vmem:[%s3 + $0x45c] sm:$0xf]
    %v589 = vld [vmem:[%s3 + $0x460] sm:$0xff]
    %v590 = vld [vmem:[%s3 + $0x468] sm:$0xff]
    %v591 = vld [vmem:[%s3 + $0x470] sm:$0xf]
    %v592 = vld [vmem:[%s3 + $0x474] sm:$0xff]
    %v593 = vld [vmem:[%s3 + $0x47c] sm:$0xff]
    %v594 = vld [vmem:[%s3 + $0x484] sm:$0xf]
    %v595 = vld [vmem:[%s3 + $0x488] sm:$0xff]
    %v596 = vld [vmem:[%s3 + $0x490] sm:$0xff]
    %v597 = vld [vmem:[%s3 + $0x498] sm:$0xf]
    %v598 = vld [vmem:[%s3 + $0x49c] sm:$0xff]
    %v599 = vld [vmem:[%s3 + $0x4a4] sm:$0xff]
    %v600 = vld [vmem:[%s3 + $0x4ac] sm:$0xf]
    %v601 = vld [vmem:[%s3 + $0x4b0] sm:$0xff]
    %v602 = vld [vmem:[%s3 + $0x4b8] sm:$0xff]
    %v603 = vld [vmem:[%s3 + $0x4c0] sm:$0xf]
    %v604 = vld [vmem:[%s3 + $0x4c4] sm:$0xff]
    %v605 = vld [vmem:[%s3 + $0x4cc] sm:$0xff]
    %v606 = vld [vmem:[%s3 + $0x4d4] sm:$0xf]
    %v607 = vld [vmem:[%s3 + $0x4d8] sm:$0xff]
    %v608 = vld [vmem:[%s3 + $0x4e0] sm:$0xff]
    %v609 = vld [vmem:[%s3 + $0x4e8] sm:$0xf]
    %v610 = vld [vmem:[%s3 + $0x4ec] sm:$0xff]
    %v611 = vld [vmem:[%s3 + $0x4f4] sm:$0xff]
    %v612 = vld [vmem:[%s3 + $0x4fc] sm:$0xf]
    %v613 = vld [vmem:[%s3 + $0x500] sm:$0xff]
    %v614 = vld [vmem:[%s3 + $0x508] sm:$0xff]
    %v615 = vld [vmem:[%s3 + $0x510] sm:$0xf]
    %v616 = vld [vmem:[%s3 + $0x514] sm:$0xff]
    %v617 = vld [vmem:[%s3 + $0x51c] sm:$0xff]
    %v618 = vld [vmem:[%s3 + $0x524] sm:$0xf]
    %v619 = vld [vmem:[%s3 + $0x528] sm:$0xff]
    %v620 = vld [vmem:[%s3 + $0x530] sm:$0xff]
    %v621 = vld [vmem:[%s3 + $0x538] sm:$0xf]
    %v622 = vld [vmem:[%s3 + $0x53c] sm:$0xff]
    %v623 = vld [vmem:[%s3 + $0x544] sm:$0xff]
    %v624 = vld [vmem:[%s3 + $0x54c] sm:$0xf]
    %v625 = vld [vmem:[%s3 + $0x550] sm:$0xff]
    %v626 = vld [vmem:[%s3 + $0x558] sm:$0xff]
    %v627 = vld [vmem:[%s3 + $0x560] sm:$0xf]
    %v628 = vld [vmem:[%s3 + $0x564] sm:$0xff]
    %v629 = vld [vmem:[%s3 + $0x56c] sm:$0xff]
    %v630 = vld [vmem:[%s3 + $0x574] sm:$0xf]
    %v631 = vld [vmem:[%s3 + $0x578] sm:$0xff]
    %v632 = vld [vmem:[%s3 + $0x580] sm:$0xff]
    %v633 = vld [vmem:[%s3 + $0x588] sm:$0xf]
    %v634 = vld [vmem:[%s3 + $0x58c] sm:$0xff]
    %v635 = vld [vmem:[%s3 + $0x594] sm:$0xff]
    %v636 = vld [vmem:[%s3 + $0x59c] sm:$0xf]
    %v853 = vunpack.c.l.b16 %v421
    %v854 = vunpack.c.h.b16 %v421
    %v855 = vunpack.c.l.b16 %v422
    %v856 = vunpack.c.h.b16 %v422
    %v857 = vunpack.c.l.b16 %v423
    %v858 = vunpack.c.l.b16 %v424
    %v859 = vunpack.c.h.b16 %v424
    %v860 = vunpack.c.l.b16 %v425
    %v861 = vunpack.c.h.b16 %v425
    %v862 = vunpack.c.l.b16 %v426
    %v863 = vunpack.c.l.b16 %v427
    %v864 = vunpack.c.h.b16 %v427
    %v865 = vunpack.c.l.b16 %v428
    %v866 = vunpack.c.h.b16 %v428
    %v867 = vunpack.c.l.b16 %v429
    %v868 = vunpack.c.l.b16 %v430
    %v869 = vunpack.c.h.b16 %v430
    %v870 = vunpack.c.l.b16 %v431
    %v871 = vunpack.c.h.b16 %v431
    %v872 = vunpack.c.l.b16 %v432
    %v873 = vunpack.c.l.b16 %v433
    %v874 = vunpack.c.h.b16 %v433
    %v875 = vunpack.c.l.b16 %v434
    %v876 = vunpack.c.h.b16 %v434
    %v877 = vunpack.c.l.b16 %v435
    %v878 = vunpack.c.l.b16 %v436
    %v879 = vunpack.c.h.b16 %v436
    %v880 = vunpack.c.l.b16 %v437
    %v881 = vunpack.c.h.b16 %v437
    %v882 = vunpack.c.l.b16 %v438
    %v883 = vunpack.c.l.b16 %v439
    %v884 = vunpack.c.h.b16 %v439
    %v885 = vunpack.c.l.b16 %v440
    %v886 = vunpack.c.h.b16 %v440
    %v887 = vunpack.c.l.b16 %v441
    %v888 = vunpack.c.l.b16 %v442
    %v889 = vunpack.c.h.b16 %v442
    %v890 = vunpack.c.l.b16 %v443
    %v891 = vunpack.c.h.b16 %v443
    %v892 = vunpack.c.l.b16 %v444
    %v893 = vunpack.c.l.b16 %v445
    %v894 = vunpack.c.h.b16 %v445
    %v895 = vunpack.c.l.b16 %v446
    %v896 = vunpack.c.h.b16 %v446
    %v897 = vunpack.c.l.b16 %v447
    %v898 = vunpack.c.l.b16 %v448
    %v899 = vunpack.c.h.b16 %v448
    %v900 = vunpack.c.l.b16 %v449
    %v901 = vunpack.c.h.b16 %v449
    %v902 = vunpack.c.l.b16 %v450
    %v903 = vunpack.c.l.b16 %v451
    %v904 = vunpack.c.h.b16 %v451
    %v905 = vunpack.c.l.b16 %v452
    %v906 = vunpack.c.h.b16 %v452
    %v907 = vunpack.c.l.b16 %v453
    %v908 = vunpack.c.l.b16 %v454
    %v909 = vunpack.c.h.b16 %v454
    %v910 = vunpack.c.l.b16 %v455
    %v911 = vunpack.c.h.b16 %v455
    %v912 = vunpack.c.l.b16 %v456
    %v913 = vunpack.c.l.b16 %v457
    %v914 = vunpack.c.h.b16 %v457
    %v915 = vunpack.c.l.b16 %v458
    %v916 = vunpack.c.h.b16 %v458
    %v917 = vunpack.c.l.b16 %v459
    %v918 = vunpack.c.l.b16 %v460
    %v919 = vunpack.c.h.b16 %v460
    %v920 = vunpack.c.l.b16 %v461
    %v921 = vunpack.c.h.b16 %v461
    %v922 = vunpack.c.l.b16 %v462
    %v923 = vunpack.c.l.b16 %v463
    %v924 = vunpack.c.h.b16 %v463
    %v925 = vunpack.c.l.b16 %v464
    %v926 = vunpack.c.h.b16 %v464
    %v927 = vunpack.c.l.b16 %v465
    %v928 = vunpack.c.l.b16 %v466
    %v929 = vunpack.c.h.b16 %v466
    %v930 = vunpack.c.l.b16 %v467
    %v931 = vunpack.c.h.b16 %v467
    %v932 = vunpack.c.l.b16 %v468
    %v933 = vunpack.c.l.b16 %v469
    %v934 = vunpack.c.h.b16 %v469
    %v935 = vunpack.c.l.b16 %v470
    %v936 = vunpack.c.h.b16 %v470
    %v937 = vunpack.c.l.b16 %v471
    %v938 = vunpack.c.l.b16 %v472
    %v939 = vunpack.c.h.b16 %v472
    %v940 = vunpack.c.l.b16 %v473
    %v941 = vunpack.c.h.b16 %v473
    %v942 = vunpack.c.l.b16 %v474
    %v943 = vunpack.c.l.b16 %v475
    %v944 = vunpack.c.h.b16 %v475
    %v945 = vunpack.c.l.b16 %v476
    %v946 = vunpack.c.h.b16 %v476
    %v947 = vunpack.c.l.b16 %v477
    %v948 = vunpack.c.l.b16 %v478
    %v949 = vunpack.c.h.b16 %v478
    %v950 = vunpack.c.l.b16 %v479
    %v951 = vunpack.c.h.b16 %v479
    %v952 = vunpack.c.l.b16 %v480
    %v953 = vunpack.c.l.b16 %v481
    %v954 = vunpack.c.h.b16 %v481
    %v955 = vunpack.c.l.b16 %v482
    %v956 = vunpack.c.h.b16 %v482
    %v957 = vunpack.c.l.b16 %v483
    %v958 = vunpack.c.l.b16 %v484
    %v959 = vunpack.c.h.b16 %v484
    %v960 = vunpack.c.l.b16 %v485
    %v961 = vunpack.c.h.b16 %v485
    %v962 = vunpack.c.l.b16 %v486
    %v963 = vunpack.c.l.b16 %v487
    %v964 = vunpack.c.h.b16 %v487
    %v965 = vunpack.c.l.b16 %v488
    %v966 = vunpack.c.h.b16 %v488
    %v967 = vunpack.c.l.b16 %v489
    %v968 = vunpack.c.l.b16 %v490
    %v969 = vunpack.c.h.b16 %v490
    %v970 = vunpack.c.l.b16 %v491
    %v971 = vunpack.c.h.b16 %v491
    %v972 = vunpack.c.l.b16 %v492
    %v973 = vunpack.c.l.b16 %v493
    %v974 = vunpack.c.h.b16 %v493
    %v975 = vunpack.c.l.b16 %v494
    %v976 = vunpack.c.h.b16 %v494
    %v977 = vunpack.c.l.b16 %v495
    %v978 = vunpack.c.l.b16 %v496
    %v979 = vunpack.c.h.b16 %v496
    %v980 = vunpack.c.l.b16 %v497
    %v981 = vunpack.c.h.b16 %v497
    %v982 = vunpack.c.l.b16 %v498
    %v983 = vunpack.c.l.b16 %v499
    %v984 = vunpack.c.h.b16 %v499
    %v985 = vunpack.c.l.b16 %v500
    %v986 = vunpack.c.h.b16 %v500
    %v987 = vunpack.c.l.b16 %v501
    %v988 = vunpack.c.l.b16 %v502
    %v989 = vunpack.c.h.b16 %v502
    %v990 = vunpack.c.l.b16 %v503
    %v991 = vunpack.c.h.b16 %v503
    %v992 = vunpack.c.l.b16 %v504
    %v993 = vunpack.c.l.b16 %v505
    %v994 = vunpack.c.h.b16 %v505
    %v995 = vunpack.c.l.b16 %v506
    %v996 = vunpack.c.h.b16 %v506
    %v997 = vunpack.c.l.b16 %v507
    %v998 = vunpack.c.l.b16 %v508
    %v999 = vunpack.c.h.b16 %v508
    %v1000 = vunpack.c.l.b16 %v509
    %v1001 = vunpack.c.h.b16 %v509
    %v1002 = vunpack.c.l.b16 %v510
    %v1003 = vunpack.c.l.b16 %v511
    %v1004 = vunpack.c.h.b16 %v511
    %v1005 = vunpack.c.l.b16 %v512
    %v1006 = vunpack.c.h.b16 %v512
    %v1007 = vunpack.c.l.b16 %v513
    %v1008 = vunpack.c.l.b16 %v514
    %v1009 = vunpack.c.h.b16 %v514
    %v1010 = vunpack.c.l.b16 %v515
    %v1011 = vunpack.c.h.b16 %v515
    %v1012 = vunpack.c.l.b16 %v516
    %v1013 = vunpack.c.l.b16 %v517
    %v1014 = vunpack.c.h.b16 %v517
    %v1015 = vunpack.c.l.b16 %v518
    %v1016 = vunpack.c.h.b16 %v518
    %v1017 = vunpack.c.l.b16 %v519
    %v1018 = vunpack.c.l.b16 %v520
    %v1019 = vunpack.c.h.b16 %v520
    %v1020 = vunpack.c.l.b16 %v521
    %v1021 = vunpack.c.h.b16 %v521
    %v1022 = vunpack.c.l.b16 %v522
    %v1023 = vunpack.c.l.b16 %v523
    %v1024 = vunpack.c.h.b16 %v523
    %v1025 = vunpack.c.l.b16 %v524
    %v1026 = vunpack.c.h.b16 %v524
    %v1027 = vunpack.c.l.b16 %v525
    %v1028 = vunpack.c.l.b16 %v526
    %v1029 = vunpack.c.h.b16 %v526
    %v1030 = vunpack.c.l.b16 %v527
    %v1031 = vunpack.c.h.b16 %v527
    %v1032 = vunpack.c.l.b16 %v528
    %v1033 = vunpack.c.l.b16 %v529
    %v1034 = vunpack.c.h.b16 %v529
    %v1035 = vunpack.c.l.b16 %v530
    %v1036 = vunpack.c.h.b16 %v530
    %v1037 = vunpack.c.l.b16 %v531
    %v1038 = vunpack.c.l.b16 %v532
    %v1039 = vunpack.c.h.b16 %v532
    %v1040 = vunpack.c.l.b16 %v533
    %v1041 = vunpack.c.h.b16 %v533
    %v1042 = vunpack.c.l.b16 %v534
    %v1043 = vunpack.c.l.b16 %v535
    %v1044 = vunpack.c.h.b16 %v535
    %v1045 = vunpack.c.l.b16 %v536
    %v1046 = vunpack.c.h.b16 %v536
    %v1047 = vunpack.c.l.b16 %v537
    %v1048 = vunpack.c.l.b16 %v538
    %v1049 = vunpack.c.h.b16 %v538
    %v1050 = vunpack.c.l.b16 %v539
    %v1051 = vunpack.c.h.b16 %v539
    %v1052 = vunpack.c.l.b16 %v540
    %v1053 = vunpack.c.l.b16 %v541
    %v1054 = vunpack.c.h.b16 %v541
    %v1055 = vunpack.c.l.b16 %v542
    %v1056 = vunpack.c.h.b16 %v542
    %v1057 = vunpack.c.l.b16 %v543
    %v1058 = vunpack.c.l.b16 %v544
    %v1059 = vunpack.c.h.b16 %v544
    %v1060 = vunpack.c.l.b16 %v545
    %v1061 = vunpack.c.h.b16 %v545
    %v1062 = vunpack.c.l.b16 %v546
    %v1063 = vunpack.c.l.b16 %v547
    %v1064 = vunpack.c.h.b16 %v547
    %v1065 = vunpack.c.l.b16 %v548
    %v1066 = vunpack.c.h.b16 %v548
    %v1067 = vunpack.c.l.b16 %v549
    %v1068 = vunpack.c.l.b16 %v550
    %v1069 = vunpack.c.h.b16 %v550
    %v1070 = vunpack.c.l.b16 %v551
    %v1071 = vunpack.c.h.b16 %v551
    %v1072 = vunpack.c.l.b16 %v552
    %v1073 = vunpack.c.l.b16 %v553
    %v1074 = vunpack.c.h.b16 %v553
    %v1075 = vunpack.c.l.b16 %v554
    %v1076 = vunpack.c.h.b16 %v554
    %v1077 = vunpack.c.l.b16 %v555
    %v1078 = vunpack.c.l.b16 %v556
    %v1079 = vunpack.c.h.b16 %v556
    %v1080 = vunpack.c.l.b16 %v557
    %v1081 = vunpack.c.h.b16 %v557
    %v1082 = vunpack.c.l.b16 %v558
    %v1083 = vunpack.c.l.b16 %v559
    %v1084 = vunpack.c.h.b16 %v559
    %v1085 = vunpack.c.l.b16 %v560
    %v1086 = vunpack.c.h.b16 %v560
    %v1087 = vunpack.c.l.b16 %v561
    %v1088 = vunpack.c.l.b16 %v562
    %v1089 = vunpack.c.h.b16 %v562
    %v1090 = vunpack.c.l.b16 %v563
    %v1091 = vunpack.c.h.b16 %v563
    %v1092 = vunpack.c.l.b16 %v564
    %v1093 = vunpack.c.l.b16 %v565
    %v1094 = vunpack.c.h.b16 %v565
    %v1095 = vunpack.c.l.b16 %v566
    %v1096 = vunpack.c.h.b16 %v566
    %v1097 = vunpack.c.l.b16 %v567
    %v1098 = vunpack.c.l.b16 %v568
    %v1099 = vunpack.c.h.b16 %v568
    %v1100 = vunpack.c.l.b16 %v569
    %v1101 = vunpack.c.h.b16 %v569
    %v1102 = vunpack.c.l.b16 %v570
    %v1103 = vunpack.c.l.b16 %v571
    %v1104 = vunpack.c.h.b16 %v571
    %v1105 = vunpack.c.l.b16 %v572
    %v1106 = vunpack.c.h.b16 %v572
    %v1107 = vunpack.c.l.b16 %v573
    %v1108 = vunpack.c.l.b16 %v574
    %v1109 = vunpack.c.h.b16 %v574
    %v1110 = vunpack.c.l.b16 %v575
    %v1111 = vunpack.c.h.b16 %v575
    %v1112 = vunpack.c.l.b16 %v576
    %v1113 = vunpack.c.l.b16 %v577
    %v1114 = vunpack.c.h.b16 %v577
    %v1115 = vunpack.c.l.b16 %v578
    %v1116 = vunpack.c.h.b16 %v578
    %v1117 = vunpack.c.l.b16 %v579
    %v1118 = vunpack.c.l.b16 %v580
    %v1119 = vunpack.c.h.b16 %v580
    %v1120 = vunpack.c.l.b16 %v581
    %v1121 = vunpack.c.h.b16 %v581
    %v1122 = vunpack.c.l.b16 %v582
    %v1123 = vunpack.c.l.b16 %v583
    %v1124 = vunpack.c.h.b16 %v583
    %v1125 = vunpack.c.l.b16 %v584
    %v1126 = vunpack.c.h.b16 %v584
    %v1127 = vunpack.c.l.b16 %v585
    %v1128 = vunpack.c.l.b16 %v586
    %v1129 = vunpack.c.h.b16 %v586
    %v1130 = vunpack.c.l.b16 %v587
    %v1131 = vunpack.c.h.b16 %v587
    %v1132 = vunpack.c.l.b16 %v588
    %v1133 = vunpack.c.l.b16 %v589
    %v1134 = vunpack.c.h.b16 %v589
    %v1135 = vunpack.c.l.b16 %v590
    %v1136 = vunpack.c.h.b16 %v590
    %v1137 = vunpack.c.l.b16 %v591
    %v1138 = vunpack.c.l.b16 %v592
    %v1139 = vunpack.c.h.b16 %v592
    %v1140 = vunpack.c.l.b16 %v593
    %v1141 = vunpack.c.h.b16 %v593
    %v1142 = vunpack.c.l.b16 %v594
    %v1143 = vunpack.c.l.b16 %v595
    %v1144 = vunpack.c.h.b16 %v595
    %v1145 = vunpack.c.l.b16 %v596
    %v1146 = vunpack.c.h.b16 %v596
    %v1147 = vunpack.c.l.b16 %v597
    %v1148 = vunpack.c.l.b16 %v598
    %v1149 = vunpack.c.h.b16 %v598
    %v1150 = vunpack.c.l.b16 %v599
    %v1151 = vunpack.c.h.b16 %v599
    %v1152 = vunpack.c.l.b16 %v600
    %v1153 = vunpack.c.l.b16 %v601
    %v1154 = vunpack.c.h.b16 %v601
    %v1155 = vunpack.c.l.b16 %v602
    %v1156 = vunpack.c.h.b16 %v602
    %v1157 = vunpack.c.l.b16 %v603
    %v1158 = vunpack.c.l.b16 %v604
    %v1159 = vunpack.c.h.b16 %v604
    %v1160 = vunpack.c.l.b16 %v605
    %v1161 = vunpack.c.h.b16 %v605
    %v1162 = vunpack.c.l.b16 %v606
    %v1163 = vunpack.c.l.b16 %v607
    %v1164 = vunpack.c.h.b16 %v607
    %v1165 = vunpack.c.l.b16 %v608
    %v1166 = vunpack.c.h.b16 %v608
    %v1167 = vunpack.c.l.b16 %v609
    %v1168 = vunpack.c.l.b16 %v610
    %v1169 = vunpack.c.h.b16 %v610
    %v1170 = vunpack.c.l.b16 %v611
    %v1171 = vunpack.c.h.b16 %v611
    %v1172 = vunpack.c.l.b16 %v612
    %v1173 = vunpack.c.l.b16 %v613
    %v1174 = vunpack.c.h.b16 %v613
    %v1175 = vunpack.c.l.b16 %v614
    %v1176 = vunpack.c.h.b16 %v614
    %v1177 = vunpack.c.l.b16 %v615
    %v1178 = vunpack.c.l.b16 %v616
    %v1179 = vunpack.c.h.b16 %v616
    %v1180 = vunpack.c.l.b16 %v617
    %v1181 = vunpack.c.h.b16 %v617
    %v1182 = vunpack.c.l.b16 %v618
    %v1183 = vunpack.c.l.b16 %v619
    %v1184 = vunpack.c.h.b16 %v619
    %v1185 = vunpack.c.l.b16 %v620
    %v1186 = vunpack.c.h.b16 %v620
    %v1187 = vunpack.c.l.b16 %v621
    %v1188 = vunpack.c.l.b16 %v622
    %v1189 = vunpack.c.h.b16 %v622
    %v1190 = vunpack.c.l.b16 %v623
    %v1191 = vunpack.c.h.b16 %v623
    %v1192 = vunpack.c.l.b16 %v624
    %v1193 = vunpack.c.l.b16 %v625
    %v1194 = vunpack.c.h.b16 %v625
    %v1195 = vunpack.c.l.b16 %v626
    %v1196 = vunpack.c.h.b16 %v626
    %v1197 = vunpack.c.l.b16 %v627
    %v1198 = vunpack.c.l.b16 %v628
    %v1199 = vunpack.c.h.b16 %v628
    %v1200 = vunpack.c.l.b16 %v629
    %v1201 = vunpack.c.h.b16 %v629
    %v1202 = vunpack.c.l.b16 %v630
    %v1203 = vunpack.c.l.b16 %v631
    %v1204 = vunpack.c.h.b16 %v631
    %v1205 = vunpack.c.l.b16 %v632
    %v1206 = vunpack.c.h.b16 %v632
    %v1207 = vunpack.c.l.b16 %v633
    %v1208 = vunpack.c.l.b16 %v634
    %v1209 = vunpack.c.h.b16 %v634
    %v1210 = vunpack.c.l.b16 %v635
    %v1211 = vunpack.c.h.b16 %v635
    %v1212 = vunpack.c.l.b16 %v636
    %v1213 = vpack.c.b16 %v858, %v853
    %v1214 = vpack.c.b16 %v859, %v854
    %v1215 = vpack.c.b16 %v860, %v855
    %v1216 = vpack.c.b16 %v861, %v856
    %v1217 = vpack.c.b16 %v862, %v857
    %v1218 = vpack.c.b16 %v868, %v863
    %v1219 = vpack.c.b16 %v869, %v864
    %v1220 = vpack.c.b16 %v870, %v865
    %v1221 = vpack.c.b16 %v871, %v866
    %v1222 = vpack.c.b16 %v872, %v867
    %v1223 = vpack.c.b16 %v878, %v873
    %v1224 = vpack.c.b16 %v879, %v874
    %v1225 = vpack.c.b16 %v880, %v875
    %v1226 = vpack.c.b16 %v881, %v876
    %v1227 = vpack.c.b16 %v882, %v877
    %v1228 = vpack.c.b16 %v888, %v883
    %v1229 = vpack.c.b16 %v889, %v884
    %v1230 = vpack.c.b16 %v890, %v885
    %v1231 = vpack.c.b16 %v891, %v886
    %v1232 = vpack.c.b16 %v892, %v887
    %v1233 = vpack.c.b16 %v898, %v893
    %v1234 = vpack.c.b16 %v899, %v894
    %v1235 = vpack.c.b16 %v900, %v895
    %v1236 = vpack.c.b16 %v901, %v896
    %v1237 = vpack.c.b16 %v902, %v897
    %v1238 = vpack.c.b16 %v908, %v903
    %v1239 = vpack.c.b16 %v909, %v904
    %v1240 = vpack.c.b16 %v910, %v905
    %v1241 = vpack.c.b16 %v911, %v906
    %v1242 = vpack.c.b16 %v912, %v907
    %v1243 = vpack.c.b16 %v918, %v913
    %v1244 = vpack.c.b16 %v919, %v914
    %v1245 = vpack.c.b16 %v920, %v915
    %v1246 = vpack.c.b16 %v921, %v916
    %v1247 = vpack.c.b16 %v922, %v917
    %v1248 = vpack.c.b16 %v928, %v923
    %v1249 = vpack.c.b16 %v929, %v924
    %v1250 = vpack.c.b16 %v930, %v925
    %v1251 = vpack.c.b16 %v931, %v926
    %v1252 = vpack.c.b16 %v932, %v927
    %v1253 = vpack.c.b16 %v938, %v933
    %v1254 = vpack.c.b16 %v939, %v934
    %v1255 = vpack.c.b16 %v940, %v935
    %v1256 = vpack.c.b16 %v941, %v936
    %v1257 = vpack.c.b16 %v942, %v937
    %v1258 = vpack.c.b16 %v948, %v943
    %v1259 = vpack.c.b16 %v949, %v944
    %v1260 = vpack.c.b16 %v950, %v945
    %v1261 = vpack.c.b16 %v951, %v946
    %v1262 = vpack.c.b16 %v952, %v947
    %v1263 = vpack.c.b16 %v958, %v953
    %v1264 = vpack.c.b16 %v959, %v954
    %v1265 = vpack.c.b16 %v960, %v955
    %v1266 = vpack.c.b16 %v961, %v956
    %v1267 = vpack.c.b16 %v962, %v957
    %v1268 = vpack.c.b16 %v968, %v963
    %v1269 = vpack.c.b16 %v969, %v964
    %v1270 = vpack.c.b16 %v970, %v965
    %v1271 = vpack.c.b16 %v971, %v966
    %v1272 = vpack.c.b16 %v972, %v967
    %v1273 = vpack.c.b16 %v978, %v973
    %v1274 = vpack.c.b16 %v979, %v974
    %v1275 = vpack.c.b16 %v980, %v975
    %v1276 = vpack.c.b16 %v981, %v976
    %v1277 = vpack.c.b16 %v982, %v977
    %v1278 = vpack.c.b16 %v988, %v983
    %v1279 = vpack.c.b16 %v989, %v984
    %v1280 = vpack.c.b16 %v990, %v985
    %v1281 = vpack.c.b16 %v991, %v986
    %v1282 = vpack.c.b16 %v992, %v987
    %v1283 = vpack.c.b16 %v998, %v993
    %v1284 = vpack.c.b16 %v999, %v994
    %v1285 = vpack.c.b16 %v1000, %v995
    %v1286 = vpack.c.b16 %v1001, %v996
    %v1287 = vpack.c.b16 %v1002, %v997
    %v1288 = vpack.c.b16 %v1008, %v1003
    %v1289 = vpack.c.b16 %v1009, %v1004
    %v1290 = vpack.c.b16 %v1010, %v1005
    %v1291 = vpack.c.b16 %v1011, %v1006
    %v1292 = vpack.c.b16 %v1012, %v1007
    %v1293 = vpack.c.b16 %v1018, %v1013
    %v1294 = vpack.c.b16 %v1019, %v1014
    %v1295 = vpack.c.b16 %v1020, %v1015
    %v1296 = vpack.c.b16 %v1021, %v1016
    %v1297 = vpack.c.b16 %v1022, %v1017
    %v1298 = vpack.c.b16 %v1028, %v1023
    %v1299 = vpack.c.b16 %v1029, %v1024
    %v1300 = vpack.c.b16 %v1030, %v1025
    %v1301 = vpack.c.b16 %v1031, %v1026
    %v1302 = vpack.c.b16 %v1032, %v1027
    %v1303 = vpack.c.b16 %v1038, %v1033
    %v1304 = vpack.c.b16 %v1039, %v1034
    %v1305 = vpack.c.b16 %v1040, %v1035
    %v1306 = vpack.c.b16 %v1041, %v1036
    %v1307 = vpack.c.b16 %v1042, %v1037
    %v1308 = vpack.c.b16 %v1048, %v1043
    %v1309 = vpack.c.b16 %v1049, %v1044
    %v1310 = vpack.c.b16 %v1050, %v1045
    %v1311 = vpack.c.b16 %v1051, %v1046
    %v1312 = vpack.c.b16 %v1052, %v1047
    %v1313 = vpack.c.b16 %v1058, %v1053
    %v1314 = vpack.c.b16 %v1059, %v1054
    %v1315 = vpack.c.b16 %v1060, %v1055
    %v1316 = vpack.c.b16 %v1061, %v1056
    %v1317 = vpack.c.b16 %v1062, %v1057
    %v1318 = vpack.c.b16 %v1068, %v1063
    %v1319 = vpack.c.b16 %v1069, %v1064
    %v1320 = vpack.c.b16 %v1070, %v1065
    %v1321 = vpack.c.b16 %v1071, %v1066
    %v1322 = vpack.c.b16 %v1072, %v1067
    %v1323 = vpack.c.b16 %v1078, %v1073
    %v1324 = vpack.c.b16 %v1079, %v1074
    %v1325 = vpack.c.b16 %v1080, %v1075
    %v1326 = vpack.c.b16 %v1081, %v1076
    %v1327 = vpack.c.b16 %v1082, %v1077
    %v1328 = vpack.c.b16 %v1088, %v1083
    %v1329 = vpack.c.b16 %v1089, %v1084
    %v1330 = vpack.c.b16 %v1090, %v1085
    %v1331 = vpack.c.b16 %v1091, %v1086
    %v1332 = vpack.c.b16 %v1092, %v1087
    %v1333 = vpack.c.b16 %v1098, %v1093
    %v1334 = vpack.c.b16 %v1099, %v1094
    %v1335 = vpack.c.b16 %v1100, %v1095
    %v1336 = vpack.c.b16 %v1101, %v1096
    %v1337 = vpack.c.b16 %v1102, %v1097
    %v1338 = vpack.c.b16 %v1108, %v1103
    %v1339 = vpack.c.b16 %v1109, %v1104
    %v1340 = vpack.c.b16 %v1110, %v1105
    %v1341 = vpack.c.b16 %v1111, %v1106
    %v1342 = vpack.c.b16 %v1112, %v1107
    %v1343 = vpack.c.b16 %v1118, %v1113
    %v1344 = vpack.c.b16 %v1119, %v1114
    %v1345 = vpack.c.b16 %v1120, %v1115
    %v1346 = vpack.c.b16 %v1121, %v1116
    %v1347 = vpack.c.b16 %v1122, %v1117
    %v1348 = vpack.c.b16 %v1128, %v1123
    %v1349 = vpack.c.b16 %v1129, %v1124
    %v1350 = vpack.c.b16 %v1130, %v1125
    %v1351 = vpack.c.b16 %v1131, %v1126
    %v1352 = vpack.c.b16 %v1132, %v1127
    %v1353 = vpack.c.b16 %v1138, %v1133
    %v1354 = vpack.c.b16 %v1139, %v1134
    %v1355 = vpack.c.b16 %v1140, %v1135
    %v1356 = vpack.c.b16 %v1141, %v1136
    %v1357 = vpack.c.b16 %v1142, %v1137
    %v1358 = vpack.c.b16 %v1148, %v1143
    %v1359 = vpack.c.b16 %v1149, %v1144
    %v1360 = vpack.c.b16 %v1150, %v1145
    %v1361 = vpack.c.b16 %v1151, %v1146
    %v1362 = vpack.c.b16 %v1152, %v1147
    %v1363 = vpack.c.b16 %v1158, %v1153
    %v1364 = vpack.c.b16 %v1159, %v1154
    %v1365 = vpack.c.b16 %v1160, %v1155
    %v1366 = vpack.c.b16 %v1161, %v1156
    %v1367 = vpack.c.b16 %v1162, %v1157
    %v1368 = vpack.c.b16 %v1168, %v1163
    %v1369 = vpack.c.b16 %v1169, %v1164
    %v1370 = vpack.c.b16 %v1170, %v1165
    %v1371 = vpack.c.b16 %v1171, %v1166
    %v1372 = vpack.c.b16 %v1172, %v1167
    %v1373 = vpack.c.b16 %v1178, %v1173
    %v1374 = vpack.c.b16 %v1179, %v1174
    %v1375 = vpack.c.b16 %v1180, %v1175
    %v1376 = vpack.c.b16 %v1181, %v1176
    %v1377 = vpack.c.b16 %v1182, %v1177
    %v1378 = vpack.c.b16 %v1188, %v1183
    %v1379 = vpack.c.b16 %v1189, %v1184
    %v1380 = vpack.c.b16 %v1190, %v1185
    %v1381 = vpack.c.b16 %v1191, %v1186
    %v1382 = vpack.c.b16 %v1192, %v1187
    %v1383 = vpack.c.b16 %v1198, %v1193
    %v1384 = vpack.c.b16 %v1199, %v1194
    %v1385 = vpack.c.b16 %v1200, %v1195
    %v1386 = vpack.c.b16 %v1201, %v1196
    %v1387 = vpack.c.b16 %v1202, %v1197
    %v1388 = vpack.c.b16 %v1208, %v1203
    %v1389 = vpack.c.b16 %v1209, %v1204
    %v1390 = vpack.c.b16 %v1210, %v1205
    %v1391 = vpack.c.b16 %v1211, %v1206
    %v1392 = vpack.c.b16 %v1212, %v1207
    %vm1573 = vcmask 523264
    %v1575 = vsel %vm1573, %v420, 0
    %1577 = vmatprep.subr.bf16.mxu0 %v1214
    %1578 = vmatpush1.bf16.msra.mxu0 %v1213
    %1579 = vmatprep.subr.bf16.mxu0 %v1219
    %1580 = vmatpush1.bf16.msra.mxu0 %v1218
    %1581 = vmatprep.subr.bf16.mxu0 %v1224
    %1582 = vmatpush1.bf16.msra.mxu0 %v1223
    %1583 = vmatprep.subr.bf16.mxu0 %v1229
    %1584 = vmatpush1.bf16.msra.mxu0 %v1228
    %1585 = vmatprep.subr.bf16.mxu0 %v1234
    %1586 = vmatpush1.bf16.msra.mxu0 %v1233
    %1587 = vmatprep.subr.bf16.mxu0 %v1239
    %1588 = vmatpush1.bf16.msra.mxu0 %v1238
    %1589 = vmatprep.subr.bf16.mxu0 %v1244
    %1590 = vmatpush1.bf16.msra.mxu0 %v1243
    %1591 = vmatprep.subr.bf16.mxu0 %v1249
    %1592 = vmatpush1.bf16.msra.mxu0 %v1248
    %1593 = vmatprep.subr.bf16.mxu0 %v1254
    %1594 = vmatpush1.bf16.msra.mxu0 %v1253
    %1595 = vmatprep.subr.bf16.mxu0 %v1259
    %1596 = vmatpush1.bf16.msra.mxu0 %v1258
    %1597 = vmatprep.subr.bf16.mxu0 %v1264
    %1598 = vmatpush1.bf16.msra.mxu0 %v1263
    %1599 = vmatprep.subr.bf16.mxu0 %v1269
    %1600 = vmatpush1.bf16.msra.mxu0 %v1268
    %1601 = vmatprep.subr.bf16.mxu0 %v1274
    %1602 = vmatpush1.bf16.msra.mxu0 %v1273
    %1603 = vmatprep.subr.bf16.mxu0 %v1279
    %1604 = vmatpush1.bf16.msra.mxu0 %v1278
    %1605 = vmatprep.subr.bf16.mxu0 %v1284
    %1606 = vmatpush1.bf16.msra.mxu0 %v1283
    %1607 = vmatprep.subr.bf16.mxu0 %v1289
    %1608 = vmatpush1.bf16.msra.mxu0 %v1288
    %1609 = vmatprep.mubr.bf16.mxu0 %v417
    %1610 = vmatmul.mubr.bf16.gmra.mrb[0].mxu0 %v416
    %v1611 = vpop.f32.mrb[0].mxu0
    %v1612 = vadd.f32 0.0, %v1611
    %v1613 = vpop.f32.mrb[0].mxu0
    %v1614 = vadd.f32 0.0, %v1613
    %v1615 = vpop.f32.mrb[0].mxu0
    %v1616 = vadd.f32 0.0, %v1615
    %v1617 = vpop.f32.mrb[0].mxu0
    %v1618 = vadd.f32 0.0, %v1617
    %1619 = vdwg.mxu0
    %1620 = vmatprep.subr.bf16.mxu0 %v1294
    %1621 = vmatpush1.bf16.msra.mxu0 %v1293
    %1622 = vmatprep.subr.bf16.mxu0 %v1299
    %1623 = vmatpush1.bf16.msra.mxu0 %v1298
    %1624 = vmatprep.subr.bf16.mxu0 %v1304
    %1625 = vmatpush1.bf16.msra.mxu0 %v1303
    %1626 = vmatprep.subr.bf16.mxu0 %v1309
    %1627 = vmatpush1.bf16.msra.mxu0 %v1308
    %1628 = vmatprep.subr.bf16.mxu0 %v1314
    %1629 = vmatpush1.bf16.msra.mxu0 %v1313
    %1630 = vmatprep.subr.bf16.mxu0 %v1319
    %1631 = vmatpush1.bf16.msra.mxu0 %v1318
    %1632 = vmatprep.subr.bf16.mxu0 %v1324
    %1633 = vmatpush1.bf16.msra.mxu0 %v1323
    %1634 = vmatprep.subr.bf16.mxu0 %v1329
    %1635 = vmatpush1.bf16.msra.mxu0 %v1328
    %1636 = vmatprep.subr.bf16.mxu0 %v1334
    %1637 = vmatpush1.bf16.msra.mxu0 %v1333
    %1638 = vmatprep.subr.bf16.mxu0 %v1339
    %1639 = vmatpush1.bf16.msra.mxu0 %v1338
    %1640 = vmatprep.subr.bf16.mxu0 %v1344
    %1641 = vmatpush1.bf16.msra.mxu0 %v1343
    %1642 = vmatprep.subr.bf16.mxu0 %v1349
    %1643 = vmatpush1.bf16.msra.mxu0 %v1348
    %1644 = vmatprep.subr.bf16.mxu0 %v1354
    %1645 = vmatpush1.bf16.msra.mxu0 %v1353
    %1646 = vmatprep.subr.bf16.mxu0 %v1359
    %1647 = vmatpush1.bf16.msra.mxu0 %v1358
    %1648 = vmatprep.subr.bf16.mxu0 %v1364
    %1649 = vmatpush1.bf16.msra.mxu0 %v1363
    %1650 = vmatprep.subr.bf16.mxu0 %v1369
    %1651 = vmatpush1.bf16.msra.mxu0 %v1368
    %1652 = vmatprep.mubr.bf16.mxu0 %v419
    %1653 = vmatmul.mubr.bf16.gmra.mrb[0].mxu0 %v418
    %v1654 = vpop.f32.mrb[0].mxu0
    %v1655 = vadd.f32 %v1612, %v1654
    %v1656 = vpop.f32.mrb[0].mxu0
    %v1657 = vadd.f32 %v1614, %v1656
    %v1658 = vpop.f32.mrb[0].mxu0
    %v1659 = vadd.f32 %v1616, %v1658
    %v1660 = vpop.f32.mrb[0].mxu0
    %v1661 = vadd.f32 %v1618, %v1660
    %1662 = vdwg.mxu0
    %1663 = vmatprep.subr.bf16.mxu0 %v1374
    %1664 = vmatpush1.bf16.msra.mxu0 %v1373
    %1665 = vmatprep.subr.bf16.mxu0 %v1379
    %1666 = vmatpush1.bf16.msra.mxu0 %v1378
    %1667 = vmatprep.subr.bf16.mxu0 %v1384
    %1668 = vmatpush1.bf16.msra.mxu0 %v1383
    %1669 = vmatprep.subr.bf16.mxu0 %v1389
    %1670 = vmatpush1.bf16.msra.mxu0 %v1388
    %1671 = vmatprep.subr.bf16.mxu0 0
    %1672 = vmatpush1.bf16.msra.mxu0 0
    %1673 = vmatprep.subr.bf16.mxu0 0
    %1674 = vmatpush1.bf16.msra.mxu0 0
    %1675 = vmatprep.subr.bf16.mxu0 0
    %1676 = vmatpush1.bf16.msra.mxu0 0
    %1677 = vmatprep.subr.bf16.mxu0 0
    %1678 = vmatpush1.bf16.msra.mxu0 0
    %1679 = vmatprep.subr.bf16.mxu0 0
    %1680 = vmatpush1.bf16.msra.mxu0 0
    %1681 = vmatprep.subr.bf16.mxu0 0
    %1682 = vmatpush1.bf16.msra.mxu0 0
    %1683 = vmatprep.subr.bf16.mxu0 0
    %1684 = vmatpush1.bf16.msra.mxu0 0
    %1685 = vmatprep.subr.bf16.mxu0 0
    %1686 = vmatpush1.bf16.msra.mxu0 0
    %1687 = vmatprep.subr.bf16.mxu0 0
    %1688 = vmatpush1.bf16.msra.mxu0 0
    %1689 = vmatprep.subr.bf16.mxu0 0
    %1690 = vmatpush1.bf16.msra.mxu0 0
    %1691 = vmatprep.subr.bf16.mxu0 0
    %1692 = vmatpush1.bf16.msra.mxu0 0
    %1693 = vmatprep.subr.bf16.mxu0 0
    %1694 = vmatpush1.bf16.msra.mxu0 0
    %1695 = vmatprep.mubr.bf16.mxu0 0
    %1696 = vmatmul.mubr.bf16.gmra.mrb[0].mxu0 %v1575
    %v1697 = vpop.f32.mrb[0].mxu0
    %v1698 = vadd.f32 %v1655, %v1697
    %v1699 = vpop.f32.mrb[0].mxu0
    %v1700 = vadd.f32 %v1657, %v1699
    %v1701 = vpop.f32.mrb[0].mxu0
    %v1702 = vadd.f32 %v1659, %v1701
    %v1703 = vpop.f32.mrb[0].mxu0
    %v1704 = vadd.f32 %v1661, %v1703
    %1705 = vdwg.mxu0
    %1706 = vmatprep.subr.bf16.mxu0 %v1216
    %1707 = vmatpush1.bf16.msra.mxu0 %v1215
    %1708 = vmatprep.subr.bf16.mxu0 %v1221
    %1709 = vmatpush1.bf16.msra.mxu0 %v1220
    %1710 = vmatprep.subr.bf16.mxu0 %v1226
    %1711 = vmatpush1.bf16.msra.mxu0 %v1225
    %1712 = vmatprep.subr.bf16.mxu0 %v1231
    %1713 = vmatpush1.bf16.msra.mxu0 %v1230
    %1714 = vmatprep.subr.bf16.mxu0 %v1236
    %1715 = vmatpush1.bf16.msra.mxu0 %v1235
    %1716 = vmatprep.subr.bf16.mxu0 %v1241
    %1717 = vmatpush1.bf16.msra.mxu0 %v1240
    %1718 = vmatprep.subr.bf16.mxu0 %v1246
    %1719 = vmatpush1.bf16.msra.mxu0 %v1245
    %1720 = vmatprep.subr.bf16.mxu0 %v1251
    %1721 = vmatpush1.bf16.msra.mxu0 %v1250
    %1722 = vmatprep.subr.bf16.mxu0 %v1256
    %1723 = vmatpush1.bf16.msra.mxu0 %v1255
    %1724 = vmatprep.subr.bf16.mxu0 %v1261
    %1725 = vmatpush1.bf16.msra.mxu0 %v1260
    %1726 = vmatprep.subr.bf16.mxu0 %v1266
    %1727 = vmatpush1.bf16.msra.mxu0 %v1265
    %1728 = vmatprep.subr.bf16.mxu0 %v1271
    %1729 = vmatpush1.bf16.msra.mxu0 %v1270
    %1730 = vmatprep.subr.bf16.mxu0 %v1276
    %1731 = vmatpush1.bf16.msra.mxu0 %v1275
    %1732 = vmatprep.subr.bf16.mxu0 %v1281
    %1733 = vmatpush1.bf16.msra.mxu0 %v1280
    %1734 = vmatprep.subr.bf16.mxu0 %v1286
    %1735 = vmatpush1.bf16.msra.mxu0 %v1285
    %1736 = vmatprep.subr.bf16.mxu0 %v1291
    %1737 = vmatpush1.bf16.msra.mxu0 %v1290
    %1738 = vmatprep.mubr.bf16.mxu0 %v417
    %1739 = vmatmul.mubr.bf16.gmra.mrb[0].mxu0 %v416
    %v1740 = vpop.f32.mrb[0].mxu0
    %v1741 = vadd.f32 0.0, %v1740
    %v1742 = vpop.f32.mrb[0].mxu0
    %v1743 = vadd.f32 0.0, %v1742
    %v1744 = vpop.f32.mrb[0].mxu0
    %v1745 = vadd.f32 0.0, %v1744
    %v1746 = vpop.f32.mrb[0].mxu0
    %v1747 = vadd.f32 0.0, %v1746
    %1748 = vdwg.mxu0
    %1749 = vmatprep.subr.bf16.mxu0 %v1296
    %1750 = vmatpush1.bf16.msra.mxu0 %v1295
    %1751 = vmatprep.subr.bf16.mxu0 %v1301
    %1752 = vmatpush1.bf16.msra.mxu0 %v1300
    %1753 = vmatprep.subr.bf16.mxu0 %v1306
    %1754 = vmatpush1.bf16.msra.mxu0 %v1305
    %1755 = vmatprep.subr.bf16.mxu0 %v1311
    %1756 = vmatpush1.bf16.msra.mxu0 %v1310
    %1757 = vmatprep.subr.bf16.mxu0 %v1316
    %1758 = vmatpush1.bf16.msra.mxu0 %v1315
    %1759 = vmatprep.subr.bf16.mxu0 %v1321
    %1760 = vmatpush1.bf16.msra.mxu0 %v1320
    %1761 = vmatprep.subr.bf16.mxu0 %v1326
    %1762 = vmatpush1.bf16.msra.mxu0 %v1325
    %1763 = vmatprep.subr.bf16.mxu0 %v1331
    %1764 = vmatpush1.bf16.msra.mxu0 %v1330
    %1765 = vmatprep.subr.bf16.mxu0 %v1336
    %1766 = vmatpush1.bf16.msra.mxu0 %v1335
    %1767 = vmatprep.subr.bf16.mxu0 %v1341
    %1768 = vmatpush1.bf16.msra.mxu0 %v1340
    %1769 = vmatprep.subr.bf16.mxu0 %v1346
    %1770 = vmatpush1.bf16.msra.mxu0 %v1345
    %1771 = vmatprep.subr.bf16.mxu0 %v1351
    %1772 = vmatpush1.bf16.msra.mxu0 %v1350
    %1773 = vmatprep.subr.bf16.mxu0 %v1356
    %1774 = vmatpush1.bf16.msra.mxu0 %v1355
    %1775 = vmatprep.subr.bf16.mxu0 %v1361
    %1776 = vmatpush1.bf16.msra.mxu0 %v1360
    %1777 = vmatprep.subr.bf16.mxu0 %v1366
    %1778 = vmatpush1.bf16.msra.mxu0 %v1365
    %1779 = vmatprep.subr.bf16.mxu0 %v1371
    %1780 = vmatpush1.bf16.msra.mxu0 %v1370
    %1781 = vmatprep.mubr.bf16.mxu0 %v419
    %1782 = vmatmul.mubr.bf16.gmra.mrb[0].mxu0 %v418
    %v1783 = vpop.f32.mrb[0].mxu0
    %v1784 = vadd.f32 %v1741, %v1783
    %v1785 = vpop.f32.mrb[0].mxu0
    %v1786 = vadd.f32 %v1743, %v1785
    %v1787 = vpop.f32.mrb[0].mxu0
    %v1788 = vadd.f32 %v1745, %v1787
    %v1789 = vpop.f32.mrb[0].mxu0
    %v1790 = vadd.f32 %v1747, %v1789
    %1791 = vdwg.mxu0
    %1792 = vmatprep.subr.bf16.mxu0 %v1376
    %1793 = vmatpush1.bf16.msra.mxu0 %v1375
    %1794 = vmatprep.subr.bf16.mxu0 %v1381
    %1795 = vmatpush1.bf16.msra.mxu0 %v1380
    %1796 = vmatprep.subr.bf16.mxu0 %v1386
    %1797 = vmatpush1.bf16.msra.mxu0 %v1385
    %1798 = vmatprep.subr.bf16.mxu0 %v1391
    %1799 = vmatpush1.bf16.msra.mxu0 %v1390
    %1800 = vmatprep.subr.bf16.mxu0 0
    %1801 = vmatpush1.bf16.msra.mxu0 0
    %1802 = vmatprep.subr.bf16.mxu0 0
    %1803 = vmatpush1.bf16.msra.mxu0 0
    %1804 = vmatprep.subr.bf16.mxu0 0
    %1805 = vmatpush1.bf16.msra.mxu0 0
    %1806 = vmatprep.subr.bf16.mxu0 0
    %1807 = vmatpush1.bf16.msra.mxu0 0
    %1808 = vmatprep.subr.bf16.mxu0 0
    %1809 = vmatpush1.bf16.msra.mxu0 0
    %1810 = vmatprep.subr.bf16.mxu0 0
    %1811 = vmatpush1.bf16.msra.mxu0 0
    %1812 = vmatprep.subr.bf16.mxu0 0
    %1813 = vmatpush1.bf16.msra.mxu0 0
    %1814 = vmatprep.subr.bf16.mxu0 0
    %1815 = vmatpush1.bf16.msra.mxu0 0
    %1816 = vmatprep.subr.bf16.mxu0 0
    %1817 = vmatpush1.bf16.msra.mxu0 0
    %1818 = vmatprep.subr.bf16.mxu0 0
    %1819 = vmatpush1.bf16.msra.mxu0 0
    %1820 = vmatprep.subr.bf16.mxu0 0
    %1821 = vmatpush1.bf16.msra.mxu0 0
    %1822 = vmatprep.subr.bf16.mxu0 0
    %1823 = vmatpush1.bf16.msra.mxu0 0
    %1824 = vmatprep.mubr.bf16.mxu0 0
    %1825 = vmatmul.mubr.bf16.gmra.mrb[0].mxu0 %v1575
    %v1826 = vpop.f32.mrb[0].mxu0
    %v1827 = vadd.f32 %v1784, %v1826
    %v1828 = vpop.f32.mrb[0].mxu0
    %v1829 = vadd.f32 %v1786, %v1828
    %v1830 = vpop.f32.mrb[0].mxu0
    %v1831 = vadd.f32 %v1788, %v1830
    %v1832 = vpop.f32.mrb[0].mxu0
    %v1833 = vadd.f32 %v1790, %v1832
    %1834 = vdwg.mxu0
    %1835 = vmatprep.subr.bf16.mxu0 0
    %1836 = vmatpush1.bf16.msra.mxu0 %v1217
    %1837 = vmatprep.subr.bf16.mxu0 0
    %1838 = vmatpush1.bf16.msra.mxu0 %v1222
    %1839 = vmatprep.subr.bf16.mxu0 0
    %1840 = vmatpush1.bf16.msra.mxu0 %v1227
    %1841 = vmatprep.subr.bf16.mxu0 0
    %1842 = vmatpush1.bf16.msra.mxu0 %v1232
    %1843 = vmatprep.subr.bf16.mxu0 0
    %1844 = vmatpush1.bf16.msra.mxu0 %v1237
    %1845 = vmatprep.subr.bf16.mxu0 0
    %1846 = vmatpush1.bf16.msra.mxu0 %v1242
    %1847 = vmatprep.subr.bf16.mxu0 0
    %1848 = vmatpush1.bf16.msra.mxu0 %v1247
    %1849 = vmatprep.subr.bf16.mxu0 0
    %1850 = vmatpush1.bf16.msra.mxu0 %v1252
    %1851 = vmatprep.subr.bf16.mxu0 0
    %1852 = vmatpush1.bf16.msra.mxu0 %v1257
    %1853 = vmatprep.subr.bf16.mxu0 0
    %1854 = vmatpush1.bf16.msra.mxu0 %v1262
    %1855 = vmatprep.subr.bf16.mxu0 0
    %1856 = vmatpush1.bf16.msra.mxu0 %v1267
    %1857 = vmatprep.subr.bf16.mxu0 0
    %1858 = vmatpush1.bf16.msra.mxu0 %v1272
    %1859 = vmatprep.subr.bf16.mxu0 0
    %1860 = vmatpush1.bf16.msra.mxu0 %v1277
    %1861 = vmatprep.subr.bf16.mxu0 0
    %1862 = vmatpush1.bf16.msra.mxu0 %v1282
    %1863 = vmatprep.subr.bf16.mxu0 0
    %1864 = vmatpush1.bf16.msra.mxu0 %v1287
    %1865 = vmatprep.subr.bf16.mxu0 0
    %1866 = vmatpush1.bf16.msra.mxu0 %v1292
    %1867 = vmatprep.mubr.bf16.mxu0 %v417
    %1868 = vmatmul.mubr.bf16.gmra.mrb[0].mxu0 %v416
    %v1869 = vpop.f32.mrb[0].mxu0
    %v1870 = vadd.f32 0.0, %v1869
    %v1871 = vpop.f32.mrb[0].mxu0
    %v1872 = vpop.f32.mrb[0].mxu0
    %v1873 = vadd.f32 0.0, %v1872
    %v1874 = vpop.f32.mrb[0].mxu0
    %1875 = vdwg.mxu0
    %1876 = vmatprep.subr.bf16.mxu0 0
    %1877 = vmatpush1.bf16.msra.mxu0 %v1297
    %1878 = vmatprep.subr.bf16.mxu0 0
    %1879 = vmatpush1.bf16.msra.mxu0 %v1302
    %1880 = vmatprep.subr.bf16.mxu0 0
    %1881 = vmatpush1.bf16.msra.mxu0 %v1307
    %1882 = vmatprep.subr.bf16.mxu0 0
    %1883 = vmatpush1.bf16.msra.mxu0 %v1312
    %1884 = vmatprep.subr.bf16.mxu0 0
    %1885 = vmatpush1.bf16.msra.mxu0 %v1317
    %1886 = vmatprep.subr.bf16.mxu0 0
    %1887 = vmatpush1.bf16.msra.mxu0 %v1322
    %1888 = vmatprep.subr.bf16.mxu0 0
    %1889 = vmatpush1.bf16.msra.mxu0 %v1327
    %1890 = vmatprep.subr.bf16.mxu0 0
    %1891 = vmatpush1.bf16.msra.mxu0 %v1332
    %1892 = vmatprep.subr.bf16.mxu0 0
    %1893 = vmatpush1.bf16.msra.mxu0 %v1337
    %1894 = vmatprep.subr.bf16.mxu0 0
    %1895 = vmatpush1.bf16.msra.mxu0 %v1342
    %1896 = vmatprep.subr.bf16.mxu0 0
    %1897 = vmatpush1.bf16.msra.mxu0 %v1347
    %1898 = vmatprep.subr.bf16.mxu0 0
    %1899 = vmatpush1.bf16.msra.mxu0 %v1352
    %1900 = vmatprep.subr.bf16.mxu0 0
    %1901 = vmatpush1.bf16.msra.mxu0 %v1357
    %1902 = vmatprep.subr.bf16.mxu0 0
    %1903 = vmatpush1.bf16.msra.mxu0 %v1362
    %1904 = vmatprep.subr.bf16.mxu0 0
    %1905 = vmatpush1.bf16.msra.mxu0 %v1367
    %1906 = vmatprep.subr.bf16.mxu0 0
    %1907 = vmatpush1.bf16.msra.mxu0 %v1372
    %1908 = vmatprep.mubr.bf16.mxu0 %v419
    %1909 = vmatmul.mubr.bf16.gmra.mrb[0].mxu0 %v418
    %v1910 = vpop.f32.mrb[0].mxu0
    %v1911 = vadd.f32 %v1870, %v1910
    %v1912 = vpop.f32.mrb[0].mxu0
    %v1913 = vpop.f32.mrb[0].mxu0
    %v1914 = vadd.f32 %v1873, %v1913
    %v1915 = vpop.f32.mrb[0].mxu0
    %1916 = vdwg.mxu0
    %1917 = vmatprep.subr.bf16.mxu0 0
    %1918 = vmatpush1.bf16.msra.mxu0 %v1377
    %1919 = vmatprep.subr.bf16.mxu0 0
    %1920 = vmatpush1.bf16.msra.mxu0 %v1382
    %1921 = vmatprep.subr.bf16.mxu0 0
    %1922 = vmatpush1.bf16.msra.mxu0 %v1387
    %1923 = vmatprep.subr.bf16.mxu0 0
    %1924 = vmatpush1.bf16.msra.mxu0 %v1392
    %1925 = vmatprep.subr.bf16.mxu0 0
    %1926 = vmatpush1.bf16.msra.mxu0 0
    %1927 = vmatprep.subr.bf16.mxu0 0
    %1928 = vmatpush1.bf16.msra.mxu0 0
    %1929 = vmatprep.subr.bf16.mxu0 0
    %1930 = vmatpush1.bf16.msra.mxu0 0
    %1931 = vmatprep.subr.bf16.mxu0 0
    %1932 = vmatpush1.bf16.msra.mxu0 0
    %1933 = vmatprep.subr.bf16.mxu0 0
    %1934 = vmatpush1.bf16.msra.mxu0 0
    %1935 = vmatprep.subr.bf16.mxu0 0
    %1936 = vmatpush1.bf16.msra.mxu0 0
    %1937 = vmatprep.subr.bf16.mxu0 0
    %1938 = vmatpush1.bf16.msra.mxu0 0
    %1939 = vmatprep.subr.bf16.mxu0 0
    %1940 = vmatpush1.bf16.msra.mxu0 0
    %1941 = vmatprep.subr.bf16.mxu0 0
    %1942 = vmatpush1.bf16.msra.mxu0 0
    %1943 = vmatprep.subr.bf16.mxu0 0
    %1944 = vmatpush1.bf16.msra.mxu0 0
    %1945 = vmatprep.subr.bf16.mxu0 0
    %1946 = vmatpush1.bf16.msra.mxu0 0
    %1947 = vmatprep.subr.bf16.mxu0 0
    %1948 = vmatpush1.bf16.msra.mxu0 0
    %1949 = vmatprep.mubr.bf16.mxu0 0
    %1950 = vmatmul.mubr.bf16.gmra.mrb[0].mxu0 %v1575
    %v1951 = vpop.f32.mrb[0].mxu0
    %v1952 = vadd.f32 %v1911, %v1951
    %v1953 = vpop.f32.mrb[0].mxu0
    %v1954 = vpop.f32.mrb[0].mxu0
    %v1955 = vadd.f32 %v1914, %v1954
    %v1956 = vpop.f32.mrb[0].mxu0
    %1957 = vdwg.mxu0
    %v1958 = vld [vmem:[#allocation5] sm:$0xff]
    %v1959 = vld [vmem:[#allocation5 + $0x8] sm:$0xff]
    %v1960 = vld [vmem:[#allocation5 + $0x10] sm:$0xf]
    %v1961 = vld [vmem:[#allocation5 + $0x14] sm:$0xff]
    %v1962 = vld [vmem:[#allocation5 + $0x1c] sm:$0xff]
    %v1963 = vld [vmem:[#allocation5 + $0x24] sm:$0xf]
    %v1964 = vld [vmem:[#allocation5 + $0x28] sm:$0xff]
    %v1965 = vld [vmem:[#allocation5 + $0x30] sm:$0xff]
    %v1966 = vld [vmem:[#allocation5 + $0x38] sm:$0xf]
    %v1967 = vld [vmem:[#allocation5 + $0x3c] sm:$0xff]
    %v1968 = vld [vmem:[#allocation5 + $0x44] sm:$0xff]
    %v1969 = vld [vmem:[#allocation5 + $0x4c] sm:$0xf]
    %v1970 = vld [vmem:[#allocation5 + $0x50] sm:$0xff]
    %v1971 = vld [vmem:[#allocation5 + $0x58] sm:$0xff]
    %v1972 = vld [vmem:[#allocation5 + $0x60] sm:$0xf]
    %v1973 = vld [vmem:[#allocation5 + $0x64] sm:$0xff]
    %v1974 = vld [vmem:[#allocation5 + $0x6c] sm:$0xff]
    %v1975 = vld [vmem:[#allocation5 + $0x74] sm:$0xf]
    %v1976 = vld [vmem:[#allocation5 + $0x78] sm:$0xff]
    %v1977 = vld [vmem:[#allocation5 + $0x80] sm:$0xff]
    %v1978 = vld [vmem:[#allocation5 + $0x88] sm:$0xf]
    %v1979 = vld [vmem:[#allocation5 + $0x8c] sm:$0xff]
    %v1980 = vld [vmem:[#allocation5 + $0x94] sm:$0xff]
    %v1981 = vld [vmem:[#allocation5 + $0x9c] sm:$0xf]
    %v1982 = vld [vmem:[#allocation5 + $0xa0] sm:$0xff]
    %v1983 = vld [vmem:[#allocation5 + $0xa8] sm:$0xff]
    %v1984 = vld [vmem:[#allocation5 + $0xb0] sm:$0xf]
    %v1985 = vld [vmem:[#allocation5 + $0xb4] sm:$0xff]
    %v1986 = vld [vmem:[#allocation5 + $0xbc] sm:$0xff]
    %v1987 = vld [vmem:[#allocation5 + $0xc4] sm:$0xf]
    %v1988 = vld [vmem:[#allocation5 + $0xc8] sm:$0xff]
    %v1989 = vld [vmem:[#allocation5 + $0xd0] sm:$0xff]
    %v1990 = vld [vmem:[#allocation5 + $0xd8] sm:$0xf]
    %v1991 = vld [vmem:[#allocation5 + $0xdc] sm:$0xff]
    %v1992 = vld [vmem:[#allocation5 + $0xe4] sm:$0xff]
    %v1993 = vld [vmem:[#allocation5 + $0xec] sm:$0xf]
    %v1994 = vld [vmem:[#allocation5 + $0xf0] sm:$0xff]
    %v1995 = vld [vmem:[#allocation5 + $0xf8] sm:$0xff]
    %v1996 = vld [vmem:[#allocation5 + $0x100] sm:$0xf]
    %v1997 = vld [vmem:[#allocation5 + $0x104] sm:$0xff]
    %v1998 = vld [vmem:[#allocation5 + $0x10c] sm:$0xff]
    %v1999 = vld [vmem:[#allocation5 + $0x114] sm:$0xf]
    %v2000 = vld [vmem:[#allocation5 + $0x118] sm:$0xff]
    %v2001 = vld [vmem:[#allocation5 + $0x120] sm:$0xff]
    %v2002 = vld [vmem:[#allocation5 + $0x128] sm:$0xf]
    %v2003 = vld [vmem:[#allocation5 + $0x12c] sm:$0xff]
    %v2004 = vld [vmem:[#allocation5 + $0x134] sm:$0xff]
    %v2005 = vld [vmem:[#allocation5 + $0x13c] sm:$0xf]
    %v2006 = vld [vmem:[#allocation5 + $0x140] sm:$0xff]
    %v2007 = vld [vmem:[#allocation5 + $0x148] sm:$0xff]
    %v2008 = vld [vmem:[#allocation5 + $0x150] sm:$0xf]
    %v2009 = vld [vmem:[#allocation5 + $0x154] sm:$0xff]
    %v2010 = vld [vmem:[#allocation5 + $0x15c] sm:$0xff]
    %v2011 = vld [vmem:[#allocation5 + $0x164] sm:$0xf]
    %v2012 = vld [vmem:[#allocation5 + $0x168] sm:$0xff]
    %v2013 = vld [vmem:[#allocation5 + $0x170] sm:$0xff]
    %v2014 = vld [vmem:[#allocation5 + $0x178] sm:$0xf]
    %v2015 = vld [vmem:[#allocation5 + $0x17c] sm:$0xff]
    %v2016 = vld [vmem:[#allocation5 + $0x184] sm:$0xff]
    %v2017 = vld [vmem:[#allocation5 + $0x18c] sm:$0xf]
    %v2018 = vld [vmem:[#allocation5 + $0x190] sm:$0xff]
    %v2019 = vld [vmem:[#allocation5 + $0x198] sm:$0xff]
    %v2020 = vld [vmem:[#allocation5 + $0x1a0] sm:$0xf]
    %v2021 = vld [vmem:[#allocation5 + $0x1a4] sm:$0xff]
    %v2022 = vld [vmem:[#allocation5 + $0x1ac] sm:$0xff]
    %v2023 = vld [vmem:[#allocation5 + $0x1b4] sm:$0xf]
    %v2024 = vld [vmem:[#allocation5 + $0x1b8] sm:$0xff]
    %v2025 = vld [vmem:[#allocation5 + $0x1c0] sm:$0xff]
    %v2026 = vld [vmem:[#allocation5 + $0x1c8] sm:$0xf]
    %v2027 = vld [vmem:[#allocation5 + $0x1cc] sm:$0xff]
    %v2028 = vld [vmem:[#allocation5 + $0x1d4] sm:$0xff]
    %v2029 = vld [vmem:[#allocation5 + $0x1dc] sm:$0xf]
    %v2030 = vld [vmem:[#allocation5 + $0x1e0] sm:$0xff]
    %v2031 = vld [vmem:[#allocation5 + $0x1e8] sm:$0xff]
    %v2032 = vld [vmem:[#allocation5 + $0x1f0] sm:$0xf]
    %v2033 = vld [vmem:[#allocation5 + $0x1f4] sm:$0xff]
    %v2034 = vld [vmem:[#allocation5 + $0x1fc] sm:$0xff]
    %v2035 = vld [vmem:[#allocation5 + $0x204] sm:$0xf]
    %v2036 = vld [vmem:[#allocation5 + $0x208] sm:$0xff]
    %v2037 = vld [vmem:[#allocation5 + $0x210] sm:$0xff]
    %v2038 = vld [vmem:[#allocation5 + $0x218] sm:$0xf]
    %v2039 = vld [vmem:[#allocation5 + $0x21c] sm:$0xff]
    %v2040 = vld [vmem:[#allocation5 + $0x224] sm:$0xff]
    %v2041 = vld [vmem:[#allocation5 + $0x22c] sm:$0xf]
    %v2042 = vld [vmem:[#allocation5 + $0x230] sm:$0xff]
    %v2043 = vld [vmem:[#allocation5 + $0x238] sm:$0xff]
    %v2044 = vld [vmem:[#allocation5 + $0x240] sm:$0xf]
    %v2045 = vld [vmem:[#allocation5 + $0x244] sm:$0xff]
    %v2046 = vld [vmem:[#allocation5 + $0x24c] sm:$0xff]
    %v2047 = vld [vmem:[#allocation5 + $0x254] sm:$0xf]
    %v2048 = vld [vmem:[#allocation5 + $0x258] sm:$0xff]
    %v2049 = vld [vmem:[#allocation5 + $0x260] sm:$0xff]
    %v2050 = vld [vmem:[#allocation5 + $0x268] sm:$0xf]
    %v2051 = vld [vmem:[#allocation5 + $0x26c] sm:$0xff]
    %v2052 = vld [vmem:[#allocation5 + $0x274] sm:$0xff]
    %v2053 = vld [vmem:[#allocation5 + $0x27c] sm:$0xf]
    %v2054 = vld [vmem:[#allocation5 + $0x280] sm:$0xff]
    %v2055 = vld [vmem:[#allocation5 + $0x288] sm:$0xff]
    %v2056 = vld [vmem:[#allocation5 + $0x290] sm:$0xf]
    %v2057 = vld [vmem:[#allocation5 + $0x294] sm:$0xff]
    %v2058 = vld [vmem:[#allocation5 + $0x29c] sm:$0xff]
    %v2059 = vld [vmem:[#allocation5 + $0x2a4] sm:$0xf]
    %v2060 = vld [vmem:[#allocation5 + $0x2a8] sm:$0xff]
    %v2061 = vld [vmem:[#allocation5 + $0x2b0] sm:$0xff]
    %v2062 = vld [vmem:[#allocation5 + $0x2b8] sm:$0xf]
    %v2063 = vld [vmem:[#allocation5 + $0x2bc] sm:$0xff]
    %v2064 = vld [vmem:[#allocation5 + $0x2c4] sm:$0xff]
    %v2065 = vld [vmem:[#allocation5 + $0x2cc] sm:$0xf]
    %v2066 = vld [vmem:[#allocation5 + $0x2d0] sm:$0xff]
    %v2067 = vld [vmem:[#allocation5 + $0x2d8] sm:$0xff]
    %v2068 = vld [vmem:[#allocation5 + $0x2e0] sm:$0xf]
    %v2069 = vld [vmem:[#allocation5 + $0x2e4] sm:$0xff]
    %v2070 = vld [vmem:[#allocation5 + $0x2ec] sm:$0xff]
    %v2071 = vld [vmem:[#allocation5 + $0x2f4] sm:$0xf]
    %v2072 = vld [vmem:[#allocation5 + $0x2f8] sm:$0xff]
    %v2073 = vld [vmem:[#allocation5 + $0x300] sm:$0xff]
    %v2074 = vld [vmem:[#allocation5 + $0x308] sm:$0xf]
    %v2075 = vld [vmem:[#allocation5 + $0x30c] sm:$0xff]
    %v2076 = vld [vmem:[#allocation5 + $0x314] sm:$0xff]
    %v2077 = vld [vmem:[#allocation5 + $0x31c] sm:$0xf]
    %v2078 = vld [vmem:[#allocation5 + $0x320] sm:$0xff]
    %v2079 = vld [vmem:[#allocation5 + $0x328] sm:$0xff]
    %v2080 = vld [vmem:[#allocation5 + $0x330] sm:$0xf]
    %v2081 = vld [vmem:[#allocation5 + $0x334] sm:$0xff]
    %v2082 = vld [vmem:[#allocation5 + $0x33c] sm:$0xff]
    %v2083 = vld [vmem:[#allocation5 + $0x344] sm:$0xf]
    %v2084 = vld [vmem:[#allocation5 + $0x348] sm:$0xff]
    %v2085 = vld [vmem:[#allocation5 + $0x350] sm:$0xff]
    %v2086 = vld [vmem:[#allocation5 + $0x358] sm:$0xf]
    %v2087 = vld [vmem:[#allocation5 + $0x35c] sm:$0xff]
    %v2088 = vld [vmem:[#allocation5 + $0x364] sm:$0xff]
    %v2089 = vld [vmem:[#allocation5 + $0x36c] sm:$0xf]
    %v2090 = vld [vmem:[#allocation5 + $0x370] sm:$0xff]
    %v2091 = vld [vmem:[#allocation5 + $0x378] sm:$0xff]
    %v2092 = vld [vmem:[#allocation5 + $0x380] sm:$0xf]
    %v2093 = vld [vmem:[#allocation5 + $0x384] sm:$0xff]
    %v2094 = vld [vmem:[#allocation5 + $0x38c] sm:$0xff]
    %v2095 = vld [vmem:[#allocation5 + $0x394] sm:$0xf]
    %v2096 = vld [vmem:[#allocation5 + $0x398] sm:$0xff]
    %v2097 = vld [vmem:[#allocation5 + $0x3a0] sm:$0xff]
    %v2098 = vld [vmem:[#allocation5 + $0x3a8] sm:$0xf]
    %v2099 = vld [vmem:[#allocation5 + $0x3ac] sm:$0xff]
    %v2100 = vld [vmem:[#allocation5 + $0x3b4] sm:$0xff]
    %v2101 = vld [vmem:[#allocation5 + $0x3bc] sm:$0xf]
    %v2102 = vld [vmem:[#allocation5 + $0x3c0] sm:$0xff]
    %v2103 = vld [vmem:[#allocation5 + $0x3c8] sm:$0xff]
    %v2104 = vld [vmem:[#allocation5 + $0x3d0] sm:$0xf]
    %v2105 = vld [vmem:[#allocation5 + $0x3d4] sm:$0xff]
    %v2106 = vld [vmem:[#allocation5 + $0x3dc] sm:$0xff]
    %v2107 = vld [vmem:[#allocation5 + $0x3e4] sm:$0xf]
    %v2108 = vld [vmem:[#allocation5 + $0x3e8] sm:$0xff]
    %v2109 = vld [vmem:[#allocation5 + $0x3f0] sm:$0xff]
    %v2110 = vld [vmem:[#allocation5 + $0x3f8] sm:$0xf]
    %v2111 = vld [vmem:[#allocation5 + $0x3fc] sm:$0xff]
    %v2112 = vld [vmem:[#allocation5 + $0x404] sm:$0xff]
    %v2113 = vld [vmem:[#allocation5 + $0x40c] sm:$0xf]
    %v2114 = vld [vmem:[#allocation5 + $0x410] sm:$0xff]
    %v2115 = vld [vmem:[#allocation5 + $0x418] sm:$0xff]
    %v2116 = vld [vmem:[#allocation5 + $0x420] sm:$0xf]
    %v2117 = vld [vmem:[#allocation5 + $0x424] sm:$0xff]
    %v2118 = vld [vmem:[#allocation5 + $0x42c] sm:$0xff]
    %v2119 = vld [vmem:[#allocation5 + $0x434] sm:$0xf]
    %v2120 = vld [vmem:[#allocation5 + $0x438] sm:$0xff]
    %v2121 = vld [vmem:[#allocation5 + $0x440] sm:$0xff]
    %v2122 = vld [vmem:[#allocation5 + $0x448] sm:$0xf]
    %v2123 = vld [vmem:[#allocation5 + $0x44c] sm:$0xff]
    %v2124 = vld [vmem:[#allocation5 + $0x454] sm:$0xff]
    %v2125 = vld [vmem:[#allocation5 + $0x45c] sm:$0xf]
    %v2126 = vld [vmem:[#allocation5 + $0x460] sm:$0xff]
    %v2127 = vld [vmem:[#allocation5 + $0x468] sm:$0xff]
    %v2128 = vld [vmem:[#allocation5 + $0x470] sm:$0xf]
    %v2129 = vld [vmem:[#allocation5 + $0x474] sm:$0xff]
    %v2130 = vld [vmem:[#allocation5 + $0x47c] sm:$0xff]
    %v2131 = vld [vmem:[#allocation5 + $0x484] sm:$0xf]
    %v2132 = vld [vmem:[#allocation5 + $0x488] sm:$0xff]
    %v2133 = vld [vmem:[#allocation5 + $0x490] sm:$0xff]
    %v2134 = vld [vmem:[#allocation5 + $0x498] sm:$0xf]
    %v2135 = vld [vmem:[#allocation5 + $0x49c] sm:$0xff]
    %v2136 = vld [vmem:[#allocation5 + $0x4a4] sm:$0xff]
    %v2137 = vld [vmem:[#allocation5 + $0x4ac] sm:$0xf]
    %v2138 = vld [vmem:[#allocation5 + $0x4b0] sm:$0xff]
    %v2139 = vld [vmem:[#allocation5 + $0x4b8] sm:$0xff]
    %v2140 = vld [vmem:[#allocation5 + $0x4c0] sm:$0xf]
    %v2141 = vld [vmem:[#allocation5 + $0x4c4] sm:$0xff]
    %v2142 = vld [vmem:[#allocation5 + $0x4cc] sm:$0xff]
    %v2143 = vld [vmem:[#allocation5 + $0x4d4] sm:$0xf]
    %v2144 = vld [vmem:[#allocation5 + $0x4d8] sm:$0xff]
    %v2145 = vld [vmem:[#allocation5 + $0x4e0] sm:$0xff]
    %v2146 = vld [vmem:[#allocation5 + $0x4e8] sm:$0xf]
    %v2147 = vld [vmem:[#allocation5 + $0x4ec] sm:$0xff]
    %v2148 = vld [vmem:[#allocation5 + $0x4f4] sm:$0xff]
    %v2149 = vld [vmem:[#allocation5 + $0x4fc] sm:$0xf]
    %v2150 = vld [vmem:[#allocation5 + $0x500] sm:$0xff]
    %v2151 = vld [vmem:[#allocation5 + $0x508] sm:$0xff]
    %v2152 = vld [vmem:[#allocation5 + $0x510] sm:$0xf]
    %v2153 = vld [vmem:[#allocation5 + $0x514] sm:$0xff]
    %v2154 = vld [vmem:[#allocation5 + $0x51c] sm:$0xff]
    %v2155 = vld [vmem:[#allocation5 + $0x524] sm:$0xf]
    %v2156 = vld [vmem:[#allocation5 + $0x528] sm:$0xff]
    %v2157 = vld [vmem:[#allocation5 + $0x530] sm:$0xff]
    %v2158 = vld [vmem:[#allocation5 + $0x538] sm:$0xf]
    %v2159 = vld [vmem:[#allocation5 + $0x53c] sm:$0xff]
    %v2160 = vld [vmem:[#allocation5 + $0x544] sm:$0xff]
    %v2161 = vld [vmem:[#allocation5 + $0x54c] sm:$0xf]
    %v2162 = vld [vmem:[#allocation5 + $0x550] sm:$0xff]
    %v2163 = vld [vmem:[#allocation5 + $0x558] sm:$0xff]
    %v2164 = vld [vmem:[#allocation5 + $0x560] sm:$0xf]
    %v2165 = vld [vmem:[#allocation5 + $0x564] sm:$0xff]
    %v2166 = vld [vmem:[#allocation5 + $0x56c] sm:$0xff]
    %v2167 = vld [vmem:[#allocation5 + $0x574] sm:$0xf]
    %v2168 = vld [vmem:[#allocation5 + $0x578] sm:$0xff]
    %v2169 = vld [vmem:[#allocation5 + $0x580] sm:$0xff]
    %v2170 = vld [vmem:[#allocation5 + $0x588] sm:$0xf]
    %v2171 = vld [vmem:[#allocation5 + $0x58c] sm:$0xff]
    %v2172 = vld [vmem:[#allocation5 + $0x594] sm:$0xff]
    %v2173 = vld [vmem:[#allocation5 + $0x59c] sm:$0xf]
    %v2390 = vunpack.c.l.b16 %v1958
    %v2391 = vunpack.c.h.b16 %v1958
    %v2392 = vunpack.c.l.b16 %v1959
    %v2393 = vunpack.c.h.b16 %v1959
    %v2394 = vunpack.c.l.b16 %v1960
    %v2395 = vunpack.c.l.b16 %v1961
    %v2396 = vunpack.c.h.b16 %v1961
    %v2397 = vunpack.c.l.b16 %v1962
    %v2398 = vunpack.c.h.b16 %v1962
    %v2399 = vunpack.c.l.b16 %v1963
    %v2400 = vunpack.c.l.b16 %v1964
    %v2401 = vunpack.c.h.b16 %v1964
    %v2402 = vunpack.c.l.b16 %v1965
    %v2403 = vunpack.c.h.b16 %v1965
    %v2404 = vunpack.c.l.b16 %v1966
    %v2405 = vunpack.c.l.b16 %v1967
    %v2406 = vunpack.c.h.b16 %v1967
    %v2407 = vunpack.c.l.b16 %v1968
    %v2408 = vunpack.c.h.b16 %v1968
    %v2409 = vunpack.c.l.b16 %v1969
    %v2410 = vunpack.c.l.b16 %v1970
    %v2411 = vunpack.c.h.b16 %v1970
    %v2412 = vunpack.c.l.b16 %v1971
    %v2413 = vunpack.c.h.b16 %v1971
    %v2414 = vunpack.c.l.b16 %v1972
    %v2415 = vunpack.c.l.b16 %v1973
    %v2416 = vunpack.c.h.b16 %v1973
    %v2417 = vunpack.c.l.b16 %v1974
    %v2418 = vunpack.c.h.b16 %v1974
    %v2419 = vunpack.c.l.b16 %v1975
    %v2420 = vunpack.c.l.b16 %v1976
    %v2421 = vunpack.c.h.b16 %v1976
    %v2422 = vunpack.c.l.b16 %v1977
    %v2423 = vunpack.c.h.b16 %v1977
    %v2424 = vunpack.c.l.b16 %v1978
    %v2425 = vunpack.c.l.b16 %v1979
    %v2426 = vunpack.c.h.b16 %v1979
    %v2427 = vunpack.c.l.b16 %v1980
    %v2428 = vunpack.c.h.b16 %v1980
    %v2429 = vunpack.c.l.b16 %v1981
    %v2430 = vunpack.c.l.b16 %v1982
    %v2431 = vunpack.c.h.b16 %v1982
    %v2432 = vunpack.c.l.b16 %v1983
    %v2433 = vunpack.c.h.b16 %v1983
    %v2434 = vunpack.c.l.b16 %v1984
    %v2435 = vunpack.c.l.b16 %v1985
    %v2436 = vunpack.c.h.b16 %v1985
    %v2437 = vunpack.c.l.b16 %v1986
    %v2438 = vunpack.c.h.b16 %v1986
    %v2439 = vunpack.c.l.b16 %v1987
    %v2440 = vunpack.c.l.b16 %v1988
    %v2441 = vunpack.c.h.b16 %v1988
    %v2442 = vunpack.c.l.b16 %v1989
    %v2443 = vunpack.c.h.b16 %v1989
    %v2444 = vunpack.c.l.b16 %v1990
    %v2445 = vunpack.c.l.b16 %v1991
    %v2446 = vunpack.c.h.b16 %v1991
    %v2447 = vunpack.c.l.b16 %v1992
    %v2448 = vunpack.c.h.b16 %v1992
    %v2449 = vunpack.c.l.b16 %v1993
    %v2450 = vunpack.c.l.b16 %v1994
    %v2451 = vunpack.c.h.b16 %v1994
    %v2452 = vunpack.c.l.b16 %v1995
    %v2453 = vunpack.c.h.b16 %v1995
    %v2454 = vunpack.c.l.b16 %v1996
    %v2455 = vunpack.c.l.b16 %v1997
    %v2456 = vunpack.c.h.b16 %v1997
    %v2457 = vunpack.c.l.b16 %v1998
    %v2458 = vunpack.c.h.b16 %v1998
    %v2459 = vunpack.c.l.b16 %v1999
    %v2460 = vunpack.c.l.b16 %v2000
    %v2461 = vunpack.c.h.b16 %v2000
    %v2462 = vunpack.c.l.b16 %v2001
    %v2463 = vunpack.c.h.b16 %v2001
    %v2464 = vunpack.c.l.b16 %v2002
    %v2465 = vunpack.c.l.b16 %v2003
    %v2466 = vunpack.c.h.b16 %v2003
    %v2467 = vunpack.c.l.b16 %v2004
    %v2468 = vunpack.c.h.b16 %v2004
    %v2469 = vunpack.c.l.b16 %v2005
    %v2470 = vunpack.c.l.b16 %v2006
    %v2471 = vunpack.c.h.b16 %v2006
    %v2472 = vunpack.c.l.b16 %v2007
    %v2473 = vunpack.c.h.b16 %v2007
    %v2474 = vunpack.c.l.b16 %v2008
    %v2475 = vunpack.c.l.b16 %v2009
    %v2476 = vunpack.c.h.b16 %v2009
    %v2477 = vunpack.c.l.b16 %v2010
    %v2478 = vunpack.c.h.b16 %v2010
    %v2479 = vunpack.c.l.b16 %v2011
    %v2480 = vunpack.c.l.b16 %v2012
    %v2481 = vunpack.c.h.b16 %v2012
    %v2482 = vunpack.c.l.b16 %v2013
    %v2483 = vunpack.c.h.b16 %v2013
    %v2484 = vunpack.c.l.b16 %v2014
    %v2485 = vunpack.c.l.b16 %v2015
    %v2486 = vunpack.c.h.b16 %v2015
    %v2487 = vunpack.c.l.b16 %v2016
    %v2488 = vunpack.c.h.b16 %v2016
    %v2489 = vunpack.c.l.b16 %v2017
    %v2490 = vunpack.c.l.b16 %v2018
    %v2491 = vunpack.c.h.b16 %v2018
    %v2492 = vunpack.c.l.b16 %v2019
    %v2493 = vunpack.c.h.b16 %v2019
    %v2494 = vunpack.c.l.b16 %v2020
    %v2495 = vunpack.c.l.b16 %v2021
    %v2496 = vunpack.c.h.b16 %v2021
    %v2497 = vunpack.c.l.b16 %v2022
    %v2498 = vunpack.c.h.b16 %v2022
    %v2499 = vunpack.c.l.b16 %v2023
    %v2500 = vunpack.c.l.b16 %v2024
    %v2501 = vunpack.c.h.b16 %v2024
    %v2502 = vunpack.c.l.b16 %v2025
    %v2503 = vunpack.c.h.b16 %v2025
    %v2504 = vunpack.c.l.b16 %v2026
    %v2505 = vunpack.c.l.b16 %v2027
    %v2506 = vunpack.c.h.b16 %v2027
    %v2507 = vunpack.c.l.b16 %v2028
    %v2508 = vunpack.c.h.b16 %v2028
    %v2509 = vunpack.c.l.b16 %v2029
    %v2510 = vunpack.c.l.b16 %v2030
    %v2511 = vunpack.c.h.b16 %v2030
    %v2512 = vunpack.c.l.b16 %v2031
    %v2513 = vunpack.c.h.b16 %v2031
    %v2514 = vunpack.c.l.b16 %v2032
    %v2515 = vunpack.c.l.b16 %v2033
    %v2516 = vunpack.c.h.b16 %v2033
    %v2517 = vunpack.c.l.b16 %v2034
    %v2518 = vunpack.c.h.b16 %v2034
    %v2519 = vunpack.c.l.b16 %v2035
    %v2520 = vunpack.c.l.b16 %v2036
    %v2521 = vunpack.c.h.b16 %v2036
    %v2522 = vunpack.c.l.b16 %v2037
    %v2523 = vunpack.c.h.b16 %v2037
    %v2524 = vunpack.c.l.b16 %v2038
    %v2525 = vunpack.c.l.b16 %v2039
    %v2526 = vunpack.c.h.b16 %v2039
    %v2527 = vunpack.c.l.b16 %v2040
    %v2528 = vunpack.c.h.b16 %v2040
    %v2529 = vunpack.c.l.b16 %v2041
    %v2530 = vunpack.c.l.b16 %v2042
    %v2531 = vunpack.c.h.b16 %v2042
    %v2532 = vunpack.c.l.b16 %v2043
    %v2533 = vunpack.c.h.b16 %v2043
    %v2534 = vunpack.c.l.b16 %v2044
    %v2535 = vunpack.c.l.b16 %v2045
    %v2536 = vunpack.c.h.b16 %v2045
    %v2537 = vunpack.c.l.b16 %v2046
    %v2538 = vunpack.c.h.b16 %v2046
    %v2539 = vunpack.c.l.b16 %v2047
    %v2540 = vunpack.c.l.b16 %v2048
    %v2541 = vunpack.c.h.b16 %v2048
    %v2542 = vunpack.c.l.b16 %v2049
    %v2543 = vunpack.c.h.b16 %v2049
    %v2544 = vunpack.c.l.b16 %v2050
    %v2545 = vunpack.c.l.b16 %v2051
    %v2546 = vunpack.c.h.b16 %v2051
    %v2547 = vunpack.c.l.b16 %v2052
    %v2548 = vunpack.c.h.b16 %v2052
    %v2549 = vunpack.c.l.b16 %v2053
    %v2550 = vunpack.c.l.b16 %v2054
    %v2551 = vunpack.c.h.b16 %v2054
    %v2552 = vunpack.c.l.b16 %v2055
    %v2553 = vunpack.c.h.b16 %v2055
    %v2554 = vunpack.c.l.b16 %v2056
    %v2555 = vunpack.c.l.b16 %v2057
    %v2556 = vunpack.c.h.b16 %v2057
    %v2557 = vunpack.c.l.b16 %v2058
    %v2558 = vunpack.c.h.b16 %v2058
    %v2559 = vunpack.c.l.b16 %v2059
    %v2560 = vunpack.c.l.b16 %v2060
    %v2561 = vunpack.c.h.b16 %v2060
    %v2562 = vunpack.c.l.b16 %v2061
    %v2563 = vunpack.c.h.b16 %v2061
    %v2564 = vunpack.c.l.b16 %v2062
    %v2565 = vunpack.c.l.b16 %v2063
    %v2566 = vunpack.c.h.b16 %v2063
    %v2567 = vunpack.c.l.b16 %v2064
    %v2568 = vunpack.c.h.b16 %v2064
    %v2569 = vunpack.c.l.b16 %v2065
    %v2570 = vunpack.c.l.b16 %v2066
    %v2571 = vunpack.c.h.b16 %v2066
    %v2572 = vunpack.c.l.b16 %v2067
    %v2573 = vunpack.c.h.b16 %v2067
    %v2574 = vunpack.c.l.b16 %v2068
    %v2575 = vunpack.c.l.b16 %v2069
    %v2576 = vunpack.c.h.b16 %v2069
    %v2577 = vunpack.c.l.b16 %v2070
    %v2578 = vunpack.c.h.b16 %v2070
    %v2579 = vunpack.c.l.b16 %v2071
    %v2580 = vunpack.c.l.b16 %v2072
    %v2581 = vunpack.c.h.b16 %v2072
    %v2582 = vunpack.c.l.b16 %v2073
    %v2583 = vunpack.c.h.b16 %v2073
    %v2584 = vunpack.c.l.b16 %v2074
    %v2585 = vunpack.c.l.b16 %v2075
    %v2586 = vunpack.c.h.b16 %v2075
    %v2587 = vunpack.c.l.b16 %v2076
    %v2588 = vunpack.c.h.b16 %v2076
    %v2589 = vunpack.c.l.b16 %v2077
    %v2590 = vunpack.c.l.b16 %v2078
    %v2591 = vunpack.c.h.b16 %v2078
    %v2592 = vunpack.c.l.b16 %v2079
    %v2593 = vunpack.c.h.b16 %v2079
    %v2594 = vunpack.c.l.b16 %v2080
    %v2595 = vunpack.c.l.b16 %v2081
    %v2596 = vunpack.c.h.b16 %v2081
    %v2597 = vunpack.c.l.b16 %v2082
    %v2598 = vunpack.c.h.b16 %v2082
    %v2599 = vunpack.c.l.b16 %v2083
    %v2600 = vunpack.c.l.b16 %v2084
    %v2601 = vunpack.c.h.b16 %v2084
    %v2602 = vunpack.c.l.b16 %v2085
    %v2603 = vunpack.c.h.b16 %v2085
    %v2604 = vunpack.c.l.b16 %v2086
    %v2605 = vunpack.c.l.b16 %v2087
    %v2606 = vunpack.c.h.b16 %v2087
    %v2607 = vunpack.c.l.b16 %v2088
    %v2608 = vunpack.c.h.b16 %v2088
    %v2609 = vunpack.c.l.b16 %v2089
    %v2610 = vunpack.c.l.b16 %v2090
    %v2611 = vunpack.c.h.b16 %v2090
    %v2612 = vunpack.c.l.b16 %v2091
    %v2613 = vunpack.c.h.b16 %v2091
    %v2614 = vunpack.c.l.b16 %v2092
    %v2615 = vunpack.c.l.b16 %v2093
    %v2616 = vunpack.c.h.b16 %v2093
    %v2617 = vunpack.c.l.b16 %v2094
    %v2618 = vunpack.c.h.b16 %v2094
    %v2619 = vunpack.c.l.b16 %v2095
    %v2620 = vunpack.c.l.b16 %v2096
    %v2621 = vunpack.c.h.b16 %v2096
    %v2622 = vunpack.c.l.b16 %v2097
    %v2623 = vunpack.c.h.b16 %v2097
    %v2624 = vunpack.c.l.b16 %v2098
    %v2625 = vunpack.c.l.b16 %v2099
    %v2626 = vunpack.c.h.b16 %v2099
    %v2627 = vunpack.c.l.b16 %v2100
    %v2628 = vunpack.c.h.b16 %v2100
    %v2629 = vunpack.c.l.b16 %v2101
    %v2630 = vunpack.c.l.b16 %v2102
    %v2631 = vunpack.c.h.b16 %v2102
    %v2632 = vunpack.c.l.b16 %v2103
    %v2633 = vunpack.c.h.b16 %v2103
    %v2634 = vunpack.c.l.b16 %v2104
    %v2635 = vunpack.c.l.b16 %v2105
    %v2636 = vunpack.c.h.b16 %v2105
    %v2637 = vunpack.c.l.b16 %v2106
    %v2638 = vunpack.c.h.b16 %v2106
    %v2639 = vunpack.c.l.b16 %v2107
    %v2640 = vunpack.c.l.b16 %v2108
    %v2641 = vunpack.c.h.b16 %v2108
    %v2642 = vunpack.c.l.b16 %v2109
    %v2643 = vunpack.c.h.b16 %v2109
    %v2644 = vunpack.c.l.b16 %v2110
    %v2645 = vunpack.c.l.b16 %v2111
    %v2646 = vunpack.c.h.b16 %v2111
    %v2647 = vunpack.c.l.b16 %v2112
    %v2648 = vunpack.c.h.b16 %v2112
    %v2649 = vunpack.c.l.b16 %v2113
    %v2650 = vunpack.c.l.b16 %v2114
    %v2651 = vunpack.c.h.b16 %v2114
    %v2652 = vunpack.c.l.b16 %v2115
    %v2653 = vunpack.c.h.b16 %v2115
    %v2654 = vunpack.c.l.b16 %v2116
    %v2655 = vunpack.c.l.b16 %v2117
    %v2656 = vunpack.c.h.b16 %v2117
    %v2657 = vunpack.c.l.b16 %v2118
    %v2658 = vunpack.c.h.b16 %v2118
    %v2659 = vunpack.c.l.b16 %v2119
    %v2660 = vunpack.c.l.b16 %v2120
    %v2661 = vunpack.c.h.b16 %v2120
    %v2662 = vunpack.c.l.b16 %v2121
    %v2663 = vunpack.c.h.b16 %v2121
    %v2664 = vunpack.c.l.b16 %v2122
    %v2665 = vunpack.c.l.b16 %v2123
    %v2666 = vunpack.c.h.b16 %v2123
    %v2667 = vunpack.c.l.b16 %v2124
    %v2668 = vunpack.c.h.b16 %v2124
    %v2669 = vunpack.c.l.b16 %v2125
    %v2670 = vunpack.c.l.b16 %v2126
    %v2671 = vunpack.c.h.b16 %v2126
    %v2672 = vunpack.c.l.b16 %v2127
    %v2673 = vunpack.c.h.b16 %v2127
    %v2674 = vunpack.c.l.b16 %v2128
    %v2675 = vunpack.c.l.b16 %v2129
    %v2676 = vunpack.c.h.b16 %v2129
    %v2677 = vunpack.c.l.b16 %v2130
    %v2678 = vunpack.c.h.b16 %v2130
    %v2679 = vunpack.c.l.b16 %v2131
    %v2680 = vunpack.c.l.b16 %v2132
    %v2681 = vunpack.c.h.b16 %v2132
    %v2682 = vunpack.c.l.b16 %v2133
    %v2683 = vunpack.c.h.b16 %v2133
    %v2684 = vunpack.c.l.b16 %v2134
    %v2685 = vunpack.c.l.b16 %v2135
    %v2686 = vunpack.c.h.b16 %v2135
    %v2687 = vunpack.c.l.b16 %v2136
    %v2688 = vunpack.c.h.b16 %v2136
    %v2689 = vunpack.c.l.b16 %v2137
    %v2690 = vunpack.c.l.b16 %v2138
    %v2691 = vunpack.c.h.b16 %v2138
    %v2692 = vunpack.c.l.b16 %v2139
    %v2693 = vunpack.c.h.b16 %v2139
    %v2694 = vunpack.c.l.b16 %v2140
    %v2695 = vunpack.c.l.b16 %v2141
    %v2696 = vunpack.c.h.b16 %v2141
    %v2697 = vunpack.c.l.b16 %v2142
    %v2698 = vunpack.c.h.b16 %v2142
    %v2699 = vunpack.c.l.b16 %v2143
    %v2700 = vunpack.c.l.b16 %v2144
    %v2701 = vunpack.c.h.b16 %v2144
    %v2702 = vunpack.c.l.b16 %v2145
    %v2703 = vunpack.c.h.b16 %v2145
    %v2704 = vunpack.c.l.b16 %v2146
    %v2705 = vunpack.c.l.b16 %v2147
    %v2706 = vunpack.c.h.b16 %v2147
    %v2707 = vunpack.c.l.b16 %v2148
    %v2708 = vunpack.c.h.b16 %v2148
    %v2709 = vunpack.c.l.b16 %v2149
    %v2710 = vunpack.c.l.b16 %v2150
    %v2711 = vunpack.c.h.b16 %v2150
    %v2712 = vunpack.c.l.b16 %v2151
    %v2713 = vunpack.c.h.b16 %v2151
    %v2714 = vunpack.c.l.b16 %v2152
    %v2715 = vunpack.c.l.b16 %v2153
    %v2716 = vunpack.c.h.b16 %v2153
    %v2717 = vunpack.c.l.b16 %v2154
    %v2718 = vunpack.c.h.b16 %v2154
    %v2719 = vunpack.c.l.b16 %v2155
    %v2720 = vunpack.c.l.b16 %v2156
    %v2721 = vunpack.c.h.b16 %v2156
    %v2722 = vunpack.c.l.b16 %v2157
    %v2723 = vunpack.c.h.b16 %v2157
    %v2724 = vunpack.c.l.b16 %v2158
    %v2725 = vunpack.c.l.b16 %v2159
    %v2726 = vunpack.c.h.b16 %v2159
    %v2727 = vunpack.c.l.b16 %v2160
    %v2728 = vunpack.c.h.b16 %v2160
    %v2729 = vunpack.c.l.b16 %v2161
    %v2730 = vunpack.c.l.b16 %v2162
    %v2731 = vunpack.c.h.b16 %v2162
    %v2732 = vunpack.c.l.b16 %v2163
    %v2733 = vunpack.c.h.b16 %v2163
    %v2734 = vunpack.c.l.b16 %v2164
    %v2735 = vunpack.c.l.b16 %v2165
    %v2736 = vunpack.c.h.b16 %v2165
    %v2737 = vunpack.c.l.b16 %v2166
    %v2738 = vunpack.c.h.b16 %v2166
    %v2739 = vunpack.c.l.b16 %v2167
    %v2740 = vunpack.c.l.b16 %v2168
    %v2741 = vunpack.c.h.b16 %v2168
    %v2742 = vunpack.c.l.b16 %v2169
    %v2743 = vunpack.c.h.b16 %v2169
    %v2744 = vunpack.c.l.b16 %v2170
    %v2745 = vunpack.c.l.b16 %v2171
    %v2746 = vunpack.c.h.b16 %v2171
    %v2747 = vunpack.c.l.b16 %v2172
    %v2748 = vunpack.c.h.b16 %v2172
    %v2749 = vunpack.c.l.b16 %v2173
    %v2750 = vpack.c.b16 %v2395, %v2390
    %v2751 = vpack.c.b16 %v2396, %v2391
    %v2752 = vpack.c.b16 %v2397, %v2392
    %v2753 = vpack.c.b16 %v2398, %v2393
    %v2754 = vpack.c.b16 %v2399, %v2394
    %v2755 = vpack.c.b16 %v2405, %v2400
    %v2756 = vpack.c.b16 %v2406, %v2401
    %v2757 = vpack.c.b16 %v2407, %v2402
    %v2758 = vpack.c.b16 %v2408, %v2403
    %v2759 = vpack.c.b16 %v2409, %v2404
    %v2760 = vpack.c.b16 %v2415, %v2410
    %v2761 = vpack.c.b16 %v2416, %v2411
    %v2762 = vpack.c.b16 %v2417, %v2412
    %v2763 = vpack.c.b16 %v2418, %v2413
    %v2764 = vpack.c.b16 %v2419, %v2414
    %v2765 = vpack.c.b16 %v2425, %v2420
    %v2766 = vpack.c.b16 %v2426, %v2421
    %v2767 = vpack.c.b16 %v2427, %v2422
    %v2768 = vpack.c.b16 %v2428, %v2423
    %v2769 = vpack.c.b16 %v2429, %v2424
    %v2770 = vpack.c.b16 %v2435, %v2430
    %v2771 = vpack.c.b16 %v2436, %v2431
    %v2772 = vpack.c.b16 %v2437, %v2432
    %v2773 = vpack.c.b16 %v2438, %v2433
    %v2774 = vpack.c.b16 %v2439, %v2434
    %v2775 = vpack.c.b16 %v2445, %v2440
    %v2776 = vpack.c.b16 %v2446, %v2441
    %v2777 = vpack.c.b16 %v2447, %v2442
    %v2778 = vpack.c.b16 %v2448, %v2443
    %v2779 = vpack.c.b16 %v2449, %v2444
    %v2780 = vpack.c.b16 %v2455, %v2450
    %v2781 = vpack.c.b16 %v2456, %v2451
    %v2782 = vpack.c.b16 %v2457, %v2452
    %v2783 = vpack.c.b16 %v2458, %v2453
    %v2784 = vpack.c.b16 %v2459, %v2454
    %v2785 = vpack.c.b16 %v2465, %v2460
    %v2786 = vpack.c.b16 %v2466, %v2461
    %v2787 = vpack.c.b16 %v2467, %v2462
    %v2788 = vpack.c.b16 %v2468, %v2463
    %v2789 = vpack.c.b16 %v2469, %v2464
    %v2790 = vpack.c.b16 %v2475, %v2470
    %v2791 = vpack.c.b16 %v2476, %v2471
    %v2792 = vpack.c.b16 %v2477, %v2472
    %v2793 = vpack.c.b16 %v2478, %v2473
    %v2794 = vpack.c.b16 %v2479, %v2474
    %v2795 = vpack.c.b16 %v2485, %v2480
    %v2796 = vpack.c.b16 %v2486, %v2481
    %v2797 = vpack.c.b16 %v2487, %v2482
    %v2798 = vpack.c.b16 %v2488, %v2483
    %v2799 = vpack.c.b16 %v2489, %v2484
    %v2800 = vpack.c.b16 %v2495, %v2490
    %v2801 = vpack.c.b16 %v2496, %v2491
    %v2802 = vpack.c.b16 %v2497, %v2492
    %v2803 = vpack.c.b16 %v2498, %v2493
    %v2804 = vpack.c.b16 %v2499, %v2494
    %v2805 = vpack.c.b16 %v2505, %v2500
    %v2806 = vpack.c.b16 %v2506, %v2501
    %v2807 = vpack.c.b16 %v2507, %v2502
    %v2808 = vpack.c.b16 %v2508, %v2503
    %v2809 = vpack.c.b16 %v2509, %v2504
    %v2810 = vpack.c.b16 %v2515, %v2510
    %v2811 = vpack.c.b16 %v2516, %v2511
    %v2812 = vpack.c.b16 %v2517, %v2512
    %v2813 = vpack.c.b16 %v2518, %v2513
    %v2814 = vpack.c.b16 %v2519, %v2514
    %v2815 = vpack.c.b16 %v2525, %v2520
    %v2816 = vpack.c.b16 %v2526, %v2521
    %v2817 = vpack.c.b16 %v2527, %v2522
    %v2818 = vpack.c.b16 %v2528, %v2523
    %v2819 = vpack.c.b16 %v2529, %v2524
    %v2820 = vpack.c.b16 %v2535, %v2530
    %v2821 = vpack.c.b16 %v2536, %v2531
    %v2822 = vpack.c.b16 %v2537, %v2532
    %v2823 = vpack.c.b16 %v2538, %v2533
    %v2824 = vpack.c.b16 %v2539, %v2534
    %v2825 = vpack.c.b16 %v2545, %v2540
    %v2826 = vpack.c.b16 %v2546, %v2541
    %v2827 = vpack.c.b16 %v2547, %v2542
    %v2828 = vpack.c.b16 %v2548, %v2543
    %v2829 = vpack.c.b16 %v2549, %v2544
    %v2830 = vpack.c.b16 %v2555, %v2550
    %v2831 = vpack.c.b16 %v2556, %v2551
    %v2832 = vpack.c.b16 %v2557, %v2552
    %v2833 = vpack.c.b16 %v2558, %v2553
    %v2834 = vpack.c.b16 %v2559, %v2554
    %v2835 = vpack.c.b16 %v2565, %v2560
    %v2836 = vpack.c.b16 %v2566, %v2561
    %v2837 = vpack.c.b16 %v2567, %v2562
    %v2838 = vpack.c.b16 %v2568, %v2563
    %v2839 = vpack.c.b16 %v2569, %v2564
    %v2840 = vpack.c.b16 %v2575, %v2570
    %v2841 = vpack.c.b16 %v2576, %v2571
    %v2842 = vpack.c.b16 %v2577, %v2572
    %v2843 = vpack.c.b16 %v2578, %v2573
    %v2844 = vpack.c.b16 %v2579, %v2574
    %v2845 = vpack.c.b16 %v2585, %v2580
    %v2846 = vpack.c.b16 %v2586, %v2581
    %v2847 = vpack.c.b16 %v2587, %v2582
    %v2848 = vpack.c.b16 %v2588, %v2583
    %v2849 = vpack.c.b16 %v2589, %v2584
    %v2850 = vpack.c.b16 %v2595, %v2590
    %v2851 = vpack.c.b16 %v2596, %v2591
    %v2852 = vpack.c.b16 %v2597, %v2592
    %v2853 = vpack.c.b16 %v2598, %v2593
    %v2854 = vpack.c.b16 %v2599, %v2594
    %v2855 = vpack.c.b16 %v2605, %v2600
    %v2856 = vpack.c.b16 %v2606, %v2601
    %v2857 = vpack.c.b16 %v2607, %v2602
    %v2858 = vpack.c.b16 %v2608, %v2603
    %v2859 = vpack.c.b16 %v2609, %v2604
    %v2860 = vpack.c.b16 %v2615, %v2610
    %v2861 = vpack.c.b16 %v2616, %v2611
    %v2862 = vpack.c.b16 %v2617, %v2612
    %v2863 = vpack.c.b16 %v2618, %v2613
    %v2864 = vpack.c.b16 %v2619, %v2614
    %v2865 = vpack.c.b16 %v2625, %v2620
    %v2866 = vpack.c.b16 %v2626, %v2621
    %v2867 = vpack.c.b16 %v2627, %v2622
    %v2868 = vpack.c.b16 %v2628, %v2623
    %v2869 = vpack.c.b16 %v2629, %v2624
    %v2870 = vpack.c.b16 %v2635, %v2630
    %v2871 = vpack.c.b16 %v2636, %v2631
    %v2872 = vpack.c.b16 %v2637, %v2632
    %v2873 = vpack.c.b16 %v2638, %v2633
    %v2874 = vpack.c.b16 %v2639, %v2634
    %v2875 = vpack.c.b16 %v2645, %v2640
    %v2876 = vpack.c.b16 %v2646, %v2641
    %v2877 = vpack.c.b16 %v2647, %v2642
    %v2878 = vpack.c.b16 %v2648, %v2643
    %v2879 = vpack.c.b16 %v2649, %v2644
    %v2880 = vpack.c.b16 %v2655, %v2650
    %v2881 = vpack.c.b16 %v2656, %v2651
    %v2882 = vpack.c.b16 %v2657, %v2652
    %v2883 = vpack.c.b16 %v2658, %v2653
    %v2884 = vpack.c.b16 %v2659, %v2654
    %v2885 = vpack.c.b16 %v2665, %v2660
    %v2886 = vpack.c.b16 %v2666, %v2661
    %v2887 = vpack.c.b16 %v2667, %v2662
    %v2888 = vpack.c.b16 %v2668, %v2663
    %v2889 = vpack.c.b16 %v2669, %v2664
    %v2890 = vpack.c.b16 %v2675, %v2670
    %v2891 = vpack.c.b16 %v2676, %v2671
    %v2892 = vpack.c.b16 %v2677, %v2672
    %v2893 = vpack.c.b16 %v2678, %v2673
    %v2894 = vpack.c.b16 %v2679, %v2674
    %v2895 = vpack.c.b16 %v2685, %v2680
    %v2896 = vpack.c.b16 %v2686, %v2681
    %v2897 = vpack.c.b16 %v2687, %v2682
    %v2898 = vpack.c.b16 %v2688, %v2683
    %v2899 = vpack.c.b16 %v2689, %v2684
    %v2900 = vpack.c.b16 %v2695, %v2690
    %v2901 = vpack.c.b16 %v2696, %v2691
    %v2902 = vpack.c.b16 %v2697, %v2692
    %v2903 = vpack.c.b16 %v2698, %v2693
    %v2904 = vpack.c.b16 %v2699, %v2694
    %v2905 = vpack.c.b16 %v2705, %v2700
    %v2906 = vpack.c.b16 %v2706, %v2701
    %v2907 = vpack.c.b16 %v2707, %v2702
    %v2908 = vpack.c.b16 %v2708, %v2703
    %v2909 = vpack.c.b16 %v2709, %v2704
    %v2910 = vpack.c.b16 %v2715, %v2710
    %v2911 = vpack.c.b16 %v2716, %v2711
    %v2912 = vpack.c.b16 %v2717, %v2712
    %v2913 = vpack.c.b16 %v2718, %v2713
    %v2914 = vpack.c.b16 %v2719, %v2714
    %v2915 = vpack.c.b16 %v2725, %v2720
    %v2916 = vpack.c.b16 %v2726, %v2721
    %v2917 = vpack.c.b16 %v2727, %v2722
    %v2918 = vpack.c.b16 %v2728, %v2723
    %v2919 = vpack.c.b16 %v2729, %v2724
    %v2920 = vpack.c.b16 %v2735, %v2730
    %v2921 = vpack.c.b16 %v2736, %v2731
    %v2922 = vpack.c.b16 %v2737, %v2732
    %v2923 = vpack.c.b16 %v2738, %v2733
    %v2924 = vpack.c.b16 %v2739, %v2734
    %v2925 = vpack.c.b16 %v2745, %v2740
    %v2926 = vpack.c.b16 %v2746, %v2741
    %v2927 = vpack.c.b16 %v2747, %v2742
    %v2928 = vpack.c.b16 %v2748, %v2743
    %v2929 = vpack.c.b16 %v2749, %v2744
    %3110 = vmatprep.subr.bf16.mxu0 %v2751
    %3111 = vmatpush1.bf16.msra.mxu0 %v2750
    %3112 = vmatprep.subr.bf16.mxu0 %v2756
    %3113 = vmatpush1.bf16.msra.mxu0 %v2755
    %3114 = vmatprep.subr.bf16.mxu0 %v2761
    %3115 = vmatpush1.bf16.msra.mxu0 %v2760
    %3116 = vmatprep.subr.bf16.mxu0 %v2766
    %3117 = vmatpush1.bf16.msra.mxu0 %v2765
    %3118 = vmatprep.subr.bf16.mxu0 %v2771
    %3119 = vmatpush1.bf16.msra.mxu0 %v2770
    %3120 = vmatprep.subr.bf16.mxu0 %v2776
    %3121 = vmatpush1.bf16.msra.mxu0 %v2775
    %3122 = vmatprep.subr.bf16.mxu0 %v2781
    %3123 = vmatpush1.bf16.msra.mxu0 %v2780
    %3124 = vmatprep.subr.bf16.mxu0 %v2786
    %3125 = vmatpush1.bf16.msra.mxu0 %v2785
    %3126 = vmatprep.subr.bf16.mxu0 %v2791
    %3127 = vmatpush1.bf16.msra.mxu0 %v2790
    %3128 = vmatprep.subr.bf16.mxu0 %v2796
    %3129 = vmatpush1.bf16.msra.mxu0 %v2795
    %3130 = vmatprep.subr.bf16.mxu0 %v2801
    %3131 = vmatpush1.bf16.msra.mxu0 %v2800
    %3132 = vmatprep.subr.bf16.mxu0 %v2806
    %3133 = vmatpush1.bf16.msra.mxu0 %v2805
    %3134 = vmatprep.subr.bf16.mxu0 %v2811
    %3135 = vmatpush1.bf16.msra.mxu0 %v2810
    %3136 = vmatprep.subr.bf16.mxu0 %v2816
    %3137 = vmatpush1.bf16.msra.mxu0 %v2815
    %3138 = vmatprep.subr.bf16.mxu0 %v2821
    %3139 = vmatpush1.bf16.msra.mxu0 %v2820
    %3140 = vmatprep.subr.bf16.mxu0 %v2826
    %3141 = vmatpush1.bf16.msra.mxu0 %v2825
    %3142 = vmatprep.mubr.bf16.mxu0 %v417
    %3143 = vmatmul.mubr.bf16.gmra.mrb[0].mxu0 %v416
    %v3144 = vpop.f32.mrb[0].mxu0
    %v3145 = vadd.f32 0.0, %v3144
    %v3146 = vpop.f32.mrb[0].mxu0
    %v3147 = vadd.f32 0.0, %v3146
    %v3148 = vpop.f32.mrb[0].mxu0
    %v3149 = vadd.f32 0.0, %v3148
    %v3150 = vpop.f32.mrb[0].mxu0
    %v3151 = vadd.f32 0.0, %v3150
    %3152 = vdwg.mxu0
    %3153 = vmatprep.subr.bf16.mxu0 %v2831
    %3154 = vmatpush1.bf16.msra.mxu0 %v2830
    %3155 = vmatprep.subr.bf16.mxu0 %v2836
    %3156 = vmatpush1.bf16.msra.mxu0 %v2835
    %3157 = vmatprep.subr.bf16.mxu0 %v2841
    %3158 = vmatpush1.bf16.msra.mxu0 %v2840
    %3159 = vmatprep.subr.bf16.mxu0 %v2846
    %3160 = vmatpush1.bf16.msra.mxu0 %v2845
    %3161 = vmatprep.subr.bf16.mxu0 %v2851
    %3162 = vmatpush1.bf16.msra.mxu0 %v2850
    %3163 = vmatprep.subr.bf16.mxu0 %v2856
    %3164 = vmatpush1.bf16.msra.mxu0 %v2855
    %3165 = vmatprep.subr.bf16.mxu0 %v2861
    %3166 = vmatpush1.bf16.msra.mxu0 %v2860
    %3167 = vmatprep.subr.bf16.mxu0 %v2866
    %3168 = vmatpush1.bf16.msra.mxu0 %v2865
    %3169 = vmatprep.subr.bf16.mxu0 %v2871
    %3170 = vmatpush1.bf16.msra.mxu0 %v2870
    %3171 = vmatprep.subr.bf16.mxu0 %v2876
    %3172 = vmatpush1.bf16.msra.mxu0 %v2875
    %3173 = vmatprep.subr.bf16.mxu0 %v2881
    %3174 = vmatpush1.bf16.msra.mxu0 %v2880
    %3175 = vmatprep.subr.bf16.mxu0 %v2886
    %3176 = vmatpush1.bf16.msra.mxu0 %v2885
    %3177 = vmatprep.subr.bf16.mxu0 %v2891
    %3178 = vmatpush1.bf16.msra.mxu0 %v2890
    %3179 = vmatprep.subr.bf16.mxu0 %v2896
    %3180 = vmatpush1.bf16.msra.mxu0 %v2895
    %3181 = vmatprep.subr.bf16.mxu0 %v2901
    %3182 = vmatpush1.bf16.msra.mxu0 %v2900
    %3183 = vmatprep.subr.bf16.mxu0 %v2906
    %3184 = vmatpush1.bf16.msra.mxu0 %v2905
    %3185 = vmatprep.mubr.bf16.mxu0 %v419
    %3186 = vmatmul.mubr.bf16.gmra.mrb[0].mxu0 %v418
    %v3187 = vpop.f32.mrb[0].mxu0
    %v3188 = vadd.f32 %v3145, %v3187
    %v3189 = vpop.f32.mrb[0].mxu0
    %v3190 = vadd.f32 %v3147, %v3189
    %v3191 = vpop.f32.mrb[0].mxu0
    %v3192 = vadd.f32 %v3149, %v3191
    %v3193 = vpop.f32.mrb[0].mxu0
    %v3194 = vadd.f32 %v3151, %v3193
    %3195 = vdwg.mxu0
    %3196 = vmatprep.subr.bf16.mxu0 %v2911
    %3197 = vmatpush1.bf16.msra.mxu0 %v2910
    %3198 = vmatprep.subr.bf16.mxu0 %v2916
    %3199 = vmatpush1.bf16.msra.mxu0 %v2915
    %3200 = vmatprep.subr.bf16.mxu0 %v2921
    %3201 = vmatpush1.bf16.msra.mxu0 %v2920
    %3202 = vmatprep.subr.bf16.mxu0 %v2926
    %3203 = vmatpush1.bf16.msra.mxu0 %v2925
    %3204 = vmatprep.subr.bf16.mxu0 0
    %3205 = vmatpush1.bf16.msra.mxu0 0
    %3206 = vmatprep.subr.bf16.mxu0 0
    %3207 = vmatpush1.bf16.msra.mxu0 0
    %3208 = vmatprep.subr.bf16.mxu0 0
    %3209 = vmatpush1.bf16.msra.mxu0 0
    %3210 = vmatprep.subr.bf16.mxu0 0
    %3211 = vmatpush1.bf16.msra.mxu0 0
    %3212 = vmatprep.subr.bf16.mxu0 0
    %3213 = vmatpush1.bf16.msra.mxu0 0
    %3214 = vmatprep.subr.bf16.mxu0 0
    %3215 = vmatpush1.bf16.msra.mxu0 0
    %3216 = vmatprep.subr.bf16.mxu0 0
    %3217 = vmatpush1.bf16.msra.mxu0 0
    %3218 = vmatprep.subr.bf16.mxu0 0
    %3219 = vmatpush1.bf16.msra.mxu0 0
    %3220 = vmatprep.subr.bf16.mxu0 0
    %3221 = vmatpush1.bf16.msra.mxu0 0
    %3222 = vmatprep.subr.bf16.mxu0 0
    %3223 = vmatpush1.bf16.msra.mxu0 0
    %3224 = vmatprep.subr.bf16.mxu0 0
    %3225 = vmatpush1.bf16.msra.mxu0 0
    %3226 = vmatprep.subr.bf16.mxu0 0
    %3227 = vmatpush1.bf16.msra.mxu0 0
    %3228 = vmatprep.mubr.bf16.mxu0 0
    %3229 = vmatmul.mubr.bf16.gmra.mrb[0].mxu0 %v1575
    %v3230 = vpop.f32.mrb[0].mxu0
    %v3231 = vadd.f32 %v3188, %v3230
    %v3232 = vpop.f32.mrb[0].mxu0
    %v3233 = vadd.f32 %v3190, %v3232
    %v3234 = vpop.f32.mrb[0].mxu0
    %v3235 = vadd.f32 %v3192, %v3234
    %v3236 = vpop.f32.mrb[0].mxu0
    %v3237 = vadd.f32 %v3194, %v3236
    %3238 = vdwg.mxu0
    %3239 = vmatprep.subr.bf16.mxu0 %v2753
    %3240 = vmatpush1.bf16.msra.mxu0 %v2752
    %3241 = vmatprep.subr.bf16.mxu0 %v2758
    %3242 = vmatpush1.bf16.msra.mxu0 %v2757
    %3243 = vmatprep.subr.bf16.mxu0 %v2763
    %3244 = vmatpush1.bf16.msra.mxu0 %v2762
    %3245 = vmatprep.subr.bf16.mxu0 %v2768
    %3246 = vmatpush1.bf16.msra.mxu0 %v2767
    %3247 = vmatprep.subr.bf16.mxu0 %v2773
    %3248 = vmatpush1.bf16.msra.mxu0 %v2772
    %3249 = vmatprep.subr.bf16.mxu0 %v2778
    %3250 = vmatpush1.bf16.msra.mxu0 %v2777
    %3251 = vmatprep.subr.bf16.mxu0 %v2783
    %3252 = vmatpush1.bf16.msra.mxu0 %v2782
    %3253 = vmatprep.subr.bf16.mxu0 %v2788
    %3254 = vmatpush1.bf16.msra.mxu0 %v2787
    %3255 = vmatprep.subr.bf16.mxu0 %v2793
    %3256 = vmatpush1.bf16.msra.mxu0 %v2792
    %3257 = vmatprep.subr.bf16.mxu0 %v2798
    %3258 = vmatpush1.bf16.msra.mxu0 %v2797
    %3259 = vmatprep.subr.bf16.mxu0 %v2803
    %3260 = vmatpush1.bf16.msra.mxu0 %v2802
    %3261 = vmatprep.subr.bf16.mxu0 %v2808
    %3262 = vmatpush1.bf16.msra.mxu0 %v2807
    %3263 = vmatprep.subr.bf16.mxu0 %v2813
    %3264 = vmatpush1.bf16.msra.mxu0 %v2812
    %3265 = vmatprep.subr.bf16.mxu0 %v2818
    %3266 = vmatpush1.bf16.msra.mxu0 %v2817
    %3267 = vmatprep.subr.bf16.mxu0 %v2823
    %3268 = vmatpush1.bf16.msra.mxu0 %v2822
    %3269 = vmatprep.subr.bf16.mxu0 %v2828
    %3270 = vmatpush1.bf16.msra.mxu0 %v2827
    %3271 = vmatprep.mubr.bf16.mxu0 %v417
    %3272 = vmatmul.mubr.bf16.gmra.mrb[0].mxu0 %v416
    %v3273 = vpop.f32.mrb[0].mxu0
    %v3274 = vadd.f32 0.0, %v3273
    %v3275 = vpop.f32.mrb[0].mxu0
    %v3276 = vadd.f32 0.0, %v3275
    %v3277 = vpop.f32.mrb[0].mxu0
    %v3278 = vadd.f32 0.0, %v3277
    %v3279 = vpop.f32.mrb[0].mxu0
    %v3280 = vadd.f32 0.0, %v3279
    %3281 = vdwg.mxu0
    %3282 = vmatprep.subr.bf16.mxu0 %v2833
    %3283 = vmatpush1.bf16.msra.mxu0 %v2832
    %3284 = vmatprep.subr.bf16.mxu0 %v2838
    %3285 = vmatpush1.bf16.msra.mxu0 %v2837
    %3286 = vmatprep.subr.bf16.mxu0 %v2843
    %3287 = vmatpush1.bf16.msra.mxu0 %v2842
    %3288 = vmatprep.subr.bf16.mxu0 %v2848
    %3289 = vmatpush1.bf16.msra.mxu0 %v2847
    %3290 = vmatprep.subr.bf16.mxu0 %v2853
    %3291 = vmatpush1.bf16.msra.mxu0 %v2852
    %3292 = vmatprep.subr.bf16.mxu0 %v2858
    %3293 = vmatpush1.bf16.msra.mxu0 %v2857
    %3294 = vmatprep.subr.bf16.mxu0 %v2863
    %3295 = vmatpush1.bf16.msra.mxu0 %v2862
    %3296 = vmatprep.subr.bf16.mxu0 %v2868
    %3297 = vmatpush1.bf16.msra.mxu0 %v2867
    %3298 = vmatprep.subr.bf16.mxu0 %v2873
    %3299 = vmatpush1.bf16.msra.mxu0 %v2872
    %3300 = vmatprep.subr.bf16.mxu0 %v2878
    %3301 = vmatpush1.bf16.msra.mxu0 %v2877
    %3302 = vmatprep.subr.bf16.mxu0 %v2883
    %3303 = vmatpush1.bf16.msra.mxu0 %v2882
    %3304 = vmatprep.subr.bf16.mxu0 %v2888
    %3305 = vmatpush1.bf16.msra.mxu0 %v2887
    %3306 = vmatprep.subr.bf16.mxu0 %v2893
    %3307 = vmatpush1.bf16.msra.mxu0 %v2892
    %3308 = vmatprep.subr.bf16.mxu0 %v2898
    %3309 = vmatpush1.bf16.msra.mxu0 %v2897
    %3310 = vmatprep.subr.bf16.mxu0 %v2903
    %3311 = vmatpush1.bf16.msra.mxu0 %v2902
    %3312 = vmatprep.subr.bf16.mxu0 %v2908
    %3313 = vmatpush1.bf16.msra.mxu0 %v2907
    %3314 = vmatprep.mubr.bf16.mxu0 %v419
    %3315 = vmatmul.mubr.bf16.gmra.mrb[0].mxu0 %v418
    %v3316 = vpop.f32.mrb[0].mxu0
    %v3317 = vadd.f32 %v3274, %v3316
    %v3318 = vpop.f32.mrb[0].mxu0
    %v3319 = vadd.f32 %v3276, %v3318
    %v3320 = vpop.f32.mrb[0].mxu0
    %v3321 = vadd.f32 %v3278, %v3320
    %v3322 = vpop.f32.mrb[0].mxu0
    %v3323 = vadd.f32 %v3280, %v3322
    %3324 = vdwg.mxu0
    %3325 = vmatprep.subr.bf16.mxu0 %v2913
    %3326 = vmatpush1.bf16.msra.mxu0 %v2912
    %3327 = vmatprep.subr.bf16.mxu0 %v2918
    %3328 = vmatpush1.bf16.msra.mxu0 %v2917
    %3329 = vmatprep.subr.bf16.mxu0 %v2923
    %3330 = vmatpush1.bf16.msra.mxu0 %v2922
    %3331 = vmatprep.subr.bf16.mxu0 %v2928
    %3332 = vmatpush1.bf16.msra.mxu0 %v2927
    %3333 = vmatprep.subr.bf16.mxu0 0
    %3334 = vmatpush1.bf16.msra.mxu0 0
    %3335 = vmatprep.subr.bf16.mxu0 0
    %3336 = vmatpush1.bf16.msra.mxu0 0
    %3337 = vmatprep.subr.bf16.mxu0 0
    %3338 = vmatpush1.bf16.msra.mxu0 0
    %3339 = vmatprep.subr.bf16.mxu0 0
    %3340 = vmatpush1.bf16.msra.mxu0 0
    %3341 = vmatprep.subr.bf16.mxu0 0
    %3342 = vmatpush1.bf16.msra.mxu0 0
    %3343 = vmatprep.subr.bf16.mxu0 0
    %3344 = vmatpush1.bf16.msra.mxu0 0
    %3345 = vmatprep.subr.bf16.mxu0 0
    %3346 = vmatpush1.bf16.msra.mxu0 0
    %3347 = vmatprep.subr.bf16.mxu0 0
    %3348 = vmatpush1.bf16.msra.mxu0 0
    %3349 = vmatprep.subr.bf16.mxu0 0
    %3350 = vmatpush1.bf16.msra.mxu0 0
    %3351 = vmatprep.subr.bf16.mxu0 0
    %3352 = vmatpush1.bf16.msra.mxu0 0
    %3353 = vmatprep.subr.bf16.mxu0 0
    %3354 = vmatpush1.bf16.msra.mxu0 0
    %3355 = vmatprep.subr.bf16.mxu0 0
    %3356 = vmatpush1.bf16.msra.mxu0 0
    %3357 = vmatprep.mubr.bf16.mxu0 0
    %3358 = vmatmul.mubr.bf16.gmra.mrb[0].mxu0 %v1575
    %v3359 = vpop.f32.mrb[0].mxu0
    %v3360 = vadd.f32 %v3317, %v3359
    %v3361 = vpop.f32.mrb[0].mxu0
    %v3362 = vadd.f32 %v3319, %v3361
    %v3363 = vpop.f32.mrb[0].mxu0
    %v3364 = vadd.f32 %v3321, %v3363
    %v3365 = vpop.f32.mrb[0].mxu0
    %v3366 = vadd.f32 %v3323, %v3365
    %3367 = vdwg.mxu0
    %3368 = vmatprep.subr.bf16.mxu0 0
    %3369 = vmatpush1.bf16.msra.mxu0 %v2754
    %3370 = vmatprep.subr.bf16.mxu0 0
    %3371 = vmatpush1.bf16.msra.mxu0 %v2759
    %3372 = vmatprep.subr.bf16.mxu0 0
    %3373 = vmatpush1.bf16.msra.mxu0 %v2764
    %3374 = vmatprep.subr.bf16.mxu0 0
    %3375 = vmatpush1.bf16.msra.mxu0 %v2769
    %3376 = vmatprep.subr.bf16.mxu0 0
    %3377 = vmatpush1.bf16.msra.mxu0 %v2774
    %3378 = vmatprep.subr.bf16.mxu0 0
    %3379 = vmatpush1.bf16.msra.mxu0 %v2779
    %3380 = vmatprep.subr.bf16.mxu0 0
    %3381 = vmatpush1.bf16.msra.mxu0 %v2784
    %3382 = vmatprep.subr.bf16.mxu0 0
    %3383 = vmatpush1.bf16.msra.mxu0 %v2789
    %3384 = vmatprep.subr.bf16.mxu0 0
    %3385 = vmatpush1.bf16.msra.mxu0 %v2794
    %3386 = vmatprep.subr.bf16.mxu0 0
    %3387 = vmatpush1.bf16.msra.mxu0 %v2799
    %3388 = vmatprep.subr.bf16.mxu0 0
    %3389 = vmatpush1.bf16.msra.mxu0 %v2804
    %3390 = vmatprep.subr.bf16.mxu0 0
    %3391 = vmatpush1.bf16.msra.mxu0 %v2809
    %3392 = vmatprep.subr.bf16.mxu0 0
    %3393 = vmatpush1.bf16.msra.mxu0 %v2814
    %3394 = vmatprep.subr.bf16.mxu0 0
    %3395 = vmatpush1.bf16.msra.mxu0 %v2819
    %3396 = vmatprep.subr.bf16.mxu0 0
    %3397 = vmatpush1.bf16.msra.mxu0 %v2824
    %3398 = vmatprep.subr.bf16.mxu0 0
    %3399 = vmatpush1.bf16.msra.mxu0 %v2829
    %3400 = vmatprep.mubr.bf16.mxu0 %v417
    %3401 = vmatmul.mubr.bf16.gmra.mrb[0].mxu0 %v416
    %v3402 = vpop.f32.mrb[0].mxu0
    %v3403 = vadd.f32 0.0, %v3402
    %v3404 = vpop.f32.mrb[0].mxu0
    %v3405 = vpop.f32.mrb[0].mxu0
    %v3406 = vadd.f32 0.0, %v3405
    %v3407 = vpop.f32.mrb[0].mxu0
    %3408 = vdwg.mxu0
    %3409 = vmatprep.subr.bf16.mxu0 0
    %3410 = vmatpush1.bf16.msra.mxu0 %v2834
    %3411 = vmatprep.subr.bf16.mxu0 0
    %3412 = vmatpush1.bf16.msra.mxu0 %v2839
    %3413 = vmatprep.subr.bf16.mxu0 0
    %3414 = vmatpush1.bf16.msra.mxu0 %v2844
    %3415 = vmatprep.subr.bf16.mxu0 0
    %3416 = vmatpush1.bf16.msra.mxu0 %v2849
    %3417 = vmatprep.subr.bf16.mxu0 0
    %3418 = vmatpush1.bf16.msra.mxu0 %v2854
    %3419 = vmatprep.subr.bf16.mxu0 0
    %3420 = vmatpush1.bf16.msra.mxu0 %v2859
    %3421 = vmatprep.subr.bf16.mxu0 0
    %3422 = vmatpush1.bf16.msra.mxu0 %v2864
    %3423 = vmatprep.subr.bf16.mxu0 0
    %3424 = vmatpush1.bf16.msra.mxu0 %v2869
    %3425 = vmatprep.subr.bf16.mxu0 0
    %3426 = vmatpush1.bf16.msra.mxu0 %v2874
    %3427 = vmatprep.subr.bf16.mxu0 0
    %3428 = vmatpush1.bf16.msra.mxu0 %v2879
    %3429 = vmatprep.subr.bf16.mxu0 0
    %3430 = vmatpush1.bf16.msra.mxu0 %v2884
    %3431 = vmatprep.subr.bf16.mxu0 0
    %3432 = vmatpush1.bf16.msra.mxu0 %v2889
    %3433 = vmatprep.subr.bf16.mxu0 0
    %3434 = vmatpush1.bf16.msra.mxu0 %v2894
    %3435 = vmatprep.subr.bf16.mxu0 0
    %3436 = vmatpush1.bf16.msra.mxu0 %v2899
    %3437 = vmatprep.subr.bf16.mxu0 0
    %3438 = vmatpush1.bf16.msra.mxu0 %v2904
    %3439 = vmatprep.subr.bf16.mxu0 0
    %3440 = vmatpush1.bf16.msra.mxu0 %v2909
    %3441 = vmatprep.mubr.bf16.mxu0 %v419
    %3442 = vmatmul.mubr.bf16.gmra.mrb[0].mxu0 %v418
    %v3443 = vpop.f32.mrb[0].mxu0
    %v3444 = vadd.f32 %v3403, %v3443
    %v3445 = vpop.f32.mrb[0].mxu0
    %v3446 = vpop.f32.mrb[0].mxu0
    %v3447 = vadd.f32 %v3406, %v3446
    %v3448 = vpop.f32.mrb[0].mxu0
    %3449 = vdwg.mxu0
    %3450 = vmatprep.subr.bf16.mxu0 0
    %3451 = vmatpush1.bf16.msra.mxu0 %v2914
    %3452 = vmatprep.subr.bf16.mxu0 0
    %3453 = vmatpush1.bf16.msra.mxu0 %v2919
    %3454 = vmatprep.subr.bf16.mxu0 0
    %3455 = vmatpush1.bf16.msra.mxu0 %v2924
    %3456 = vmatprep.subr.bf16.mxu0 0
    %3457 = vmatpush1.bf16.msra.mxu0 %v2929
    %3458 = vmatprep.subr.bf16.mxu0 0
    %3459 = vmatpush1.bf16.msra.mxu0 0
    %3460 = vmatprep.subr.bf16.mxu0 0
    %3461 = vmatpush1.bf16.msra.mxu0 0
    %3462 = vmatprep.subr.bf16.mxu0 0
    %3463 = vmatpush1.bf16.msra.mxu0 0
    %3464 = vmatprep.subr.bf16.mxu0 0
    %3465 = vmatpush1.bf16.msra.mxu0 0
    %3466 = vmatprep.subr.bf16.mxu0 0
    %3467 = vmatpush1.bf16.msra.mxu0 0
    %3468 = vmatprep.subr.bf16.mxu0 0
    %3469 = vmatpush1.bf16.msra.mxu0 0
    %3470 = vmatprep.subr.bf16.mxu0 0
    %3471 = vmatpush1.bf16.msra.mxu0 0
    %3472 = vmatprep.subr.bf16.mxu0 0
    %3473 = vmatpush1.bf16.msra.mxu0 0
    %3474 = vmatprep.subr.bf16.mxu0 0
    %3475 = vmatpush1.bf16.msra.mxu0 0
    %3476 = vmatprep.subr.bf16.mxu0 0
    %3477 = vmatpush1.bf16.msra.mxu0 0
    %3478 = vmatprep.subr.bf16.mxu0 0
    %3479 = vmatpush1.bf16.msra.mxu0 0
    %3480 = vmatprep.subr.bf16.mxu0 0
    %3481 = vmatpush1.bf16.msra.mxu0 0
    %3482 = vmatprep.mubr.bf16.mxu0 0
    %3483 = vmatmul.mubr.bf16.gmra.mrb[0].mxu0 %v1575
    %v3484 = vpop.f32.mrb[0].mxu0
    %v3485 = vadd.f32 %v3444, %v3484
    %v3486 = vpop.f32.mrb[0].mxu0
    %v3487 = vpop.f32.mrb[0].mxu0
    %v3488 = vadd.f32 %v3447, %v3487
    %v3489 = vpop.f32.mrb[0].mxu0
    %3490 = vdwg.mxu0
    %v3491 = vpack.c.bf16 %v1702, %v1698
    %v3492 = vpack.c.bf16 %v1704, %v1700
    %v3493 = vpack.c.bf16 %v1831, %v1827
    %v3494 = vpack.c.bf16 %v1833, %v1829
    %v3495 = vpack.c.bf16 %v1955, %v1952
    %v3496 = vpack.c.bf16 %v3235, %v3231
    %v3497 = vpack.c.bf16 %v3237, %v3233
    %v3498 = vpack.c.bf16 %v3364, %v3360
    %v3499 = vpack.c.bf16 %v3366, %v3362
    %v3500 = vpack.c.bf16 %v3488, %v3485
    %v3501 = vld [vmem:[%s5] sm:$0xf]
    %v3502 = vld [vmem:[%s5 + $0x4] sm:$0xf]
    %v3503 = vld [vmem:[%s5 + $0x8] sm:$0xf]
    %v3504 = vld [vmem:[%s5 + $0xc] sm:$0xf]
    %v3505 = vld [vmem:[%s5 + $0x10] sm:$0xf]
    %v3506 = vld [vmem:[%s5 + $0x14] sm:$0xf]
    %v3507 = vld [vmem:[%s5 + $0x18] sm:$0xf]
    %v3508 = vld [vmem:[%s5 + $0x1c] sm:$0xf]
    %v3509 = vld [vmem:[%s5 + $0x20] sm:$0xf]
    %v3510 = vld [vmem:[%s5 + $0x24] sm:$0xf]
    %v3511 = vld [vmem:[%s5 + $0x28] sm:$0xf]
    %v3512 = vld [vmem:[%s5 + $0x2c] sm:$0xf]
    %v3513 = vld [vmem:[%s5 + $0x30] sm:$0xf]
    %v3514 = vld [vmem:[%s5 + $0x34] sm:$0xf]
    %v3515 = vld [vmem:[%s5 + $0x38] sm:$0xf]
    %v3516 = vld [vmem:[%s5 + $0x3c] sm:$0xf]
    %v3517 = vld [vmem:[%s5 + $0x40] sm:$0xf]
    %v3518 = vld [vmem:[%s5 + $0x44] sm:$0xf]
    %v3519 = vld [vmem:[%s5 + $0x48] sm:$0xf]
    %v3520 = vld [vmem:[%s5 + $0x4c] sm:$0xf]
    %v3521 = vld [vmem:[%s5 + $0x50] sm:$0xf]
    %v3522 = vld [vmem:[%s5 + $0x54] sm:$0xf]
    %v3523 = vld [vmem:[%s5 + $0x58] sm:$0xf]
    %v3524 = vld [vmem:[%s5 + $0x5c] sm:$0xf]
    %v3525 = vld [vmem:[%s5 + $0x60] sm:$0xf]
    %v3526 = vld [vmem:[%s5 + $0x64] sm:$0xf]
    %v3527 = vld [vmem:[%s5 + $0x68] sm:$0xf]
    %v3528 = vld [vmem:[%s5 + $0x6c] sm:$0xf]
    %v3529 = vld [vmem:[%s5 + $0x70] sm:$0xf]
    %v3530 = vld [vmem:[%s5 + $0x74] sm:$0xf]
    %v3531 = vld [vmem:[%s5 + $0x78] sm:$0xf]
    %v3532 = vld [vmem:[%s5 + $0x7c] sm:$0xf]
    %v3533 = vld [vmem:[%s5 + $0x80] sm:$0xf]
    %v3534 = vld [vmem:[%s5 + $0x84] sm:$0xf]
    %v3535 = vld [vmem:[%s5 + $0x88] sm:$0xf]
    %v3536 = vld [vmem:[%s5 + $0x8c] sm:$0xf]
    %v3537 = vld [vmem:[%s5 + $0x90] sm:$0xf]
    %v3538 = vld [vmem:[%s5 + $0x94] sm:$0xf]
    %v3539 = vld [vmem:[%s5 + $0x98] sm:$0xf]
    %v3540 = vld [vmem:[%s5 + $0x9c] sm:$0xf]
    %v3541 = vld [vmem:[%s5 + $0xa0] sm:$0xf]
    %v3542 = vld [vmem:[%s5 + $0xa4] sm:$0xf]
    %v3543 = vld [vmem:[%s5 + $0xa8] sm:$0xf]
    %v3544 = vld [vmem:[%s5 + $0xac] sm:$0xf]
    %v3545 = vld [vmem:[%s5 + $0xb0] sm:$0xf]
    %v3546 = vld [vmem:[%s5 + $0xb4] sm:$0xf]
    %v3547 = vld [vmem:[%s5 + $0xb8] sm:$0xf]
    %v3548 = vld [vmem:[%s5 + $0xbc] sm:$0xf]
    %v3549 = vld [vmem:[%s5 + $0xc0] sm:$0xf]
    %v3550 = vld [vmem:[%s5 + $0xc4] sm:$0xf]
    %v3551 = vld [vmem:[%s5 + $0xc8] sm:$0xf]
    %v3552 = vld [vmem:[%s5 + $0xcc] sm:$0xf]
    %v3553 = vld [vmem:[%s5 + $0xd0] sm:$0xf]
    %v3554 = vld [vmem:[%s5 + $0xd4] sm:$0xf]
    %v3555 = vld [vmem:[%s5 + $0xd8] sm:$0xf]
    %v3556 = vld [vmem:[%s5 + $0xdc] sm:$0xf]
    %v3557 = vld [vmem:[%s5 + $0xe0] sm:$0xf]
    %v3558 = vld [vmem:[%s5 + $0xe4] sm:$0xf]
    %v3559 = vld [vmem:[%s5 + $0xe8] sm:$0xf]
    %v3560 = vld [vmem:[%s5 + $0xec] sm:$0xf]
    %v3561 = vld [vmem:[%s5 + $0xf0] sm:$0xf]
    %v3562 = vld [vmem:[%s5 + $0xf4] sm:$0xf]
    %v3563 = vld [vmem:[%s5 + $0xf8] sm:$0xf]
    %v3564 = vld [vmem:[%s5 + $0xfc] sm:$0xf]
    %v3565 = vld [vmem:[%s5 + $0x100] sm:$0xf]
    %v3566 = vld [vmem:[%s5 + $0x104] sm:$0xf]
    %v3567 = vld [vmem:[%s5 + $0x108] sm:$0xf]
    %v3568 = vld [vmem:[%s5 + $0x10c] sm:$0xf]
    %v3569 = vld [vmem:[%s5 + $0x110] sm:$0xf]
    %v3570 = vld [vmem:[%s5 + $0x114] sm:$0xf]
    %v3571 = vld [vmem:[%s5 + $0x118] sm:$0xf]
    %v3572 = vld [vmem:[%s5 + $0x11c] sm:$0xf]
    %v3645 = vunpack.c.l.b16 %v3501
    %v3646 = vunpack.c.l.b16 %v3502
    %v3647 = vunpack.c.l.b16 %v3503
    %v3648 = vunpack.c.l.b16 %v3504
    %v3649 = vunpack.c.l.b16 %v3505
    %v3650 = vunpack.c.l.b16 %v3506
    %v3651 = vunpack.c.l.b16 %v3507
    %v3652 = vunpack.c.l.b16 %v3508
    %v3653 = vunpack.c.l.b16 %v3509
    %v3654 = vunpack.c.l.b16 %v3510
    %v3655 = vunpack.c.l.b16 %v3511
    %v3656 = vunpack.c.l.b16 %v3512
    %v3657 = vunpack.c.l.b16 %v3513
    %v3658 = vunpack.c.l.b16 %v3514
    %v3659 = vunpack.c.l.b16 %v3515
    %v3660 = vunpack.c.l.b16 %v3516
    %v3661 = vunpack.c.l.b16 %v3517
    %v3662 = vunpack.c.l.b16 %v3518
    %v3663 = vunpack.c.l.b16 %v3519
    %v3664 = vunpack.c.l.b16 %v3520
    %v3665 = vunpack.c.l.b16 %v3521
    %v3666 = vunpack.c.l.b16 %v3522
    %v3667 = vunpack.c.l.b16 %v3523
    %v3668 = vunpack.c.l.b16 %v3524
    %v3669 = vunpack.c.l.b16 %v3525
    %v3670 = vunpack.c.l.b16 %v3526
    %v3671 = vunpack.c.l.b16 %v3527
    %v3672 = vunpack.c.l.b16 %v3528
    %v3673 = vunpack.c.l.b16 %v3529
    %v3674 = vunpack.c.l.b16 %v3530
    %v3675 = vunpack.c.l.b16 %v3531
    %v3676 = vunpack.c.l.b16 %v3532
    %v3677 = vunpack.c.l.b16 %v3533
    %v3678 = vunpack.c.l.b16 %v3534
    %v3679 = vunpack.c.l.b16 %v3535
    %v3680 = vunpack.c.l.b16 %v3536
    %v3681 = vunpack.c.l.b16 %v3537
    %v3682 = vunpack.c.l.b16 %v3538
    %v3683 = vunpack.c.l.b16 %v3539
    %v3684 = vunpack.c.l.b16 %v3540
    %v3685 = vunpack.c.l.b16 %v3541
    %v3686 = vunpack.c.l.b16 %v3542
    %v3687 = vunpack.c.l.b16 %v3543
    %v3688 = vunpack.c.l.b16 %v3544
    %v3689 = vunpack.c.l.b16 %v3545
    %v3690 = vunpack.c.l.b16 %v3546
    %v3691 = vunpack.c.l.b16 %v3547
    %v3692 = vunpack.c.l.b16 %v3548
    %v3693 = vunpack.c.l.b16 %v3549
    %v3694 = vunpack.c.l.b16 %v3550
    %v3695 = vunpack.c.l.b16 %v3551
    %v3696 = vunpack.c.l.b16 %v3552
    %v3697 = vunpack.c.l.b16 %v3553
    %v3698 = vunpack.c.l.b16 %v3554
    %v3699 = vunpack.c.l.b16 %v3555
    %v3700 = vunpack.c.l.b16 %v3556
    %v3701 = vunpack.c.l.b16 %v3557
    %v3702 = vunpack.c.l.b16 %v3558
    %v3703 = vunpack.c.l.b16 %v3559
    %v3704 = vunpack.c.l.b16 %v3560
    %v3705 = vunpack.c.l.b16 %v3561
    %v3706 = vunpack.c.l.b16 %v3562
    %v3707 = vunpack.c.l.b16 %v3563
    %v3708 = vunpack.c.l.b16 %v3564
    %v3709 = vunpack.c.l.b16 %v3565
    %v3710 = vunpack.c.l.b16 %v3566
    %v3711 = vunpack.c.l.b16 %v3567
    %v3712 = vunpack.c.l.b16 %v3568
    %v3713 = vunpack.c.l.b16 %v3569
    %v3714 = vunpack.c.l.b16 %v3570
    %v3715 = vunpack.c.l.b16 %v3571
    %v3716 = vunpack.c.l.b16 %v3572
    %v3717 = vpack.c.b16 %v3646, %v3645
    %v3718 = vpack.c.b16 %v3648, %v3647
    %v3719 = vpack.c.b16 %v3650, %v3649
    %v3720 = vpack.c.b16 %v3652, %v3651
    %v3721 = vpack.c.b16 %v3654, %v3653
    %v3722 = vpack.c.b16 %v3656, %v3655
    %v3723 = vpack.c.b16 %v3658, %v3657
    %v3724 = vpack.c.b16 %v3660, %v3659
    %v3725 = vpack.c.b16 %v3662, %v3661
    %v3726 = vpack.c.b16 %v3664, %v3663
    %v3727 = vpack.c.b16 %v3666, %v3665
    %v3728 = vpack.c.b16 %v3668, %v3667
    %v3729 = vpack.c.b16 %v3670, %v3669
    %v3730 = vpack.c.b16 %v3672, %v3671
    %v3731 = vpack.c.b16 %v3674, %v3673
    %v3732 = vpack.c.b16 %v3676, %v3675
    %v3733 = vpack.c.b16 %v3678, %v3677
    %v3734 = vpack.c.b16 %v3680, %v3679
    %v3735 = vpack.c.b16 %v3682, %v3681
    %v3736 = vpack.c.b16 %v3684, %v3683
    %v3737 = vpack.c.b16 %v3686, %v3685
    %v3738 = vpack.c.b16 %v3688, %v3687
    %v3739 = vpack.c.b16 %v3690, %v3689
    %v3740 = vpack.c.b16 %v3692, %v3691
    %v3741 = vpack.c.b16 %v3694, %v3693
    %v3742 = vpack.c.b16 %v3696, %v3695
    %v3743 = vpack.c.b16 %v3698, %v3697
    %v3744 = vpack.c.b16 %v3700, %v3699
    %v3745 = vpack.c.b16 %v3702, %v3701
    %v3746 = vpack.c.b16 %v3704, %v3703
    %v3747 = vpack.c.b16 %v3706, %v3705
    %v3748 = vpack.c.b16 %v3708, %v3707
    %v3749 = vpack.c.b16 %v3710, %v3709
    %v3750 = vpack.c.b16 %v3712, %v3711
    %v3751 = vpack.c.b16 %v3714, %v3713
    %v3752 = vpack.c.b16 %v3716, %v3715
    %v3790 = vsel %vm1573, %v3495, 0
    %3792 = vmatprep.subr.bf16.mxu0 0
    %3793 = vmatpush1.bf16.msra.mxu0 %v3717
    %3794 = vmatprep.subr.bf16.mxu0 0
    %3795 = vmatpush1.bf16.msra.mxu0 %v3718
    %3796 = vmatprep.subr.bf16.mxu0 0
    %3797 = vmatpush1.bf16.msra.mxu0 %v3719
    %3798 = vmatprep.subr.bf16.mxu0 0
    %3799 = vmatpush1.bf16.msra.mxu0 %v3720
    %3800 = vmatprep.subr.bf16.mxu0 0
    %3801 = vmatpush1.bf16.msra.mxu0 %v3721
    %3802 = vmatprep.subr.bf16.mxu0 0
    %3803 = vmatpush1.bf16.msra.mxu0 %v3722
    %3804 = vmatprep.subr.bf16.mxu0 0
    %3805 = vmatpush1.bf16.msra.mxu0 %v3723
    %3806 = vmatprep.subr.bf16.mxu0 0
    %3807 = vmatpush1.bf16.msra.mxu0 %v3724
    %3808 = vmatprep.subr.bf16.mxu0 0
    %3809 = vmatpush1.bf16.msra.mxu0 %v3725
    %3810 = vmatprep.subr.bf16.mxu0 0
    %3811 = vmatpush1.bf16.msra.mxu0 %v3726
    %3812 = vmatprep.subr.bf16.mxu0 0
    %3813 = vmatpush1.bf16.msra.mxu0 %v3727
    %3814 = vmatprep.subr.bf16.mxu0 0
    %3815 = vmatpush1.bf16.msra.mxu0 %v3728
    %3816 = vmatprep.subr.bf16.mxu0 0
    %3817 = vmatpush1.bf16.msra.mxu0 %v3729
    %3818 = vmatprep.subr.bf16.mxu0 0
    %3819 = vmatpush1.bf16.msra.mxu0 %v3730
    %3820 = vmatprep.subr.bf16.mxu0 0
    %3821 = vmatpush1.bf16.msra.mxu0 %v3731
    %3822 = vmatprep.subr.bf16.mxu0 0
    %3823 = vmatpush1.bf16.msra.mxu0 %v3732
    %3824 = vmatprep.mubr.bf16.mxu0 %v3492
    %3825 = vmatmul.mubr.bf16.gmra.mrb[0].mxu0 %v3491
    %v3826 = vpop.f32.mrb[0].mxu0
    %v3827 = vadd.f32 0.0, %v3826
    %v3828 = vpop.f32.mrb[0].mxu0
    %v3829 = vpop.f32.mrb[0].mxu0
    %v3830 = vadd.f32 0.0, %v3829
    %v3831 = vpop.f32.mrb[0].mxu0
    %3832 = vdwg.mxu0
    %3833 = vmatprep.subr.bf16.mxu0 0
    %3834 = vmatpush1.bf16.msra.mxu0 %v3733
    %3835 = vmatprep.subr.bf16.mxu0 0
    %3836 = vmatpush1.bf16.msra.mxu0 %v3734
    %3837 = vmatprep.subr.bf16.mxu0 0
    %3838 = vmatpush1.bf16.msra.mxu0 %v3735
    %3839 = vmatprep.subr.bf16.mxu0 0
    %3840 = vmatpush1.bf16.msra.mxu0 %v3736
    %3841 = vmatprep.subr.bf16.mxu0 0
    %3842 = vmatpush1.bf16.msra.mxu0 %v3737
    %3843 = vmatprep.subr.bf16.mxu0 0
    %3844 = vmatpush1.bf16.msra.mxu0 %v3738
    %3845 = vmatprep.subr.bf16.mxu0 0
    %3846 = vmatpush1.bf16.msra.mxu0 %v3739
    %3847 = vmatprep.subr.bf16.mxu0 0
    %3848 = vmatpush1.bf16.msra.mxu0 %v3740
    %3849 = vmatprep.subr.bf16.mxu0 0
    %3850 = vmatpush1.bf16.msra.mxu0 %v3741
    %3851 = vmatprep.subr.bf16.mxu0 0
    %3852 = vmatpush1.bf16.msra.mxu0 %v3742
    %3853 = vmatprep.subr.bf16.mxu0 0
    %3854 = vmatpush1.bf16.msra.mxu0 %v3743
    %3855 = vmatprep.subr.bf16.mxu0 0
    %3856 = vmatpush1.bf16.msra.mxu0 %v3744
    %3857 = vmatprep.subr.bf16.mxu0 0
    %3858 = vmatpush1.bf16.msra.mxu0 %v3745
    %3859 = vmatprep.subr.bf16.mxu0 0
    %3860 = vmatpush1.bf16.msra.mxu0 %v3746
    %3861 = vmatprep.subr.bf16.mxu0 0
    %3862 = vmatpush1.bf16.msra.mxu0 %v3747
    %3863 = vmatprep.subr.bf16.mxu0 0
    %3864 = vmatpush1.bf16.msra.mxu0 %v3748
    %3865 = vmatprep.mubr.bf16.mxu0 %v3494
    %3866 = vmatmul.mubr.bf16.gmra.mrb[0].mxu0 %v3493
    %v3867 = vpop.f32.mrb[0].mxu0
    %v3868 = vadd.f32 %v3827, %v3867
    %v3869 = vpop.f32.mrb[0].mxu0
    %v3870 = vpop.f32.mrb[0].mxu0
    %v3871 = vadd.f32 %v3830, %v3870
    %v3872 = vpop.f32.mrb[0].mxu0
    %3873 = vdwg.mxu0
    %3874 = vmatprep.subr.bf16.mxu0 0
    %3875 = vmatpush1.bf16.msra.mxu0 %v3749
    %3876 = vmatprep.subr.bf16.mxu0 0
    %3877 = vmatpush1.bf16.msra.mxu0 %v3750
    %3878 = vmatprep.subr.bf16.mxu0 0
    %3879 = vmatpush1.bf16.msra.mxu0 %v3751
    %3880 = vmatprep.subr.bf16.mxu0 0
    %3881 = vmatpush1.bf16.msra.mxu0 %v3752
    %3882 = vmatprep.subr.bf16.mxu0 0
    %3883 = vmatpush1.bf16.msra.mxu0 0
    %3884 = vmatprep.subr.bf16.mxu0 0
    %3885 = vmatpush1.bf16.msra.mxu0 0
    %3886 = vmatprep.subr.bf16.mxu0 0
    %3887 = vmatpush1.bf16.msra.mxu0 0
    %3888 = vmatprep.subr.bf16.mxu0 0
    %3889 = vmatpush1.bf16.msra.mxu0 0
    %3890 = vmatprep.subr.bf16.mxu0 0
    %3891 = vmatpush1.bf16.msra.mxu0 0
    %3892 = vmatprep.subr.bf16.mxu0 0
    %3893 = vmatpush1.bf16.msra.mxu0 0
    %3894 = vmatprep.subr.bf16.mxu0 0
    %3895 = vmatpush1.bf16.msra.mxu0 0
    %3896 = vmatprep.subr.bf16.mxu0 0
    %3897 = vmatpush1.bf16.msra.mxu0 0
    %3898 = vmatprep.subr.bf16.mxu0 0
    %3899 = vmatpush1.bf16.msra.mxu0 0
    %3900 = vmatprep.subr.bf16.mxu0 0
    %3901 = vmatpush1.bf16.msra.mxu0 0
    %3902 = vmatprep.subr.bf16.mxu0 0
    %3903 = vmatpush1.bf16.msra.mxu0 0
    %3904 = vmatprep.subr.bf16.mxu0 0
    %3905 = vmatpush1.bf16.msra.mxu0 0
    %3906 = vmatprep.mubr.bf16.mxu0 0
    %3907 = vmatmul.mubr.bf16.gmra.mrb[0].mxu0 %v3790
    %v3908 = vpop.f32.mrb[0].mxu0
    %v3909 = vadd.f32 %v3868, %v3908
    %v3910 = vpop.f32.mrb[0].mxu0
    %v3911 = vpop.f32.mrb[0].mxu0
    %v3912 = vadd.f32 %v3871, %v3911
    %v3913 = vpop.f32.mrb[0].mxu0
    %3914 = vdwg.mxu0
    %v3915 = vld [vmem:[%s6] sm:$0xf]
    %v3916 = vld [vmem:[%s6 + $0x4] sm:$0xf]
    %v3917 = vld [vmem:[%s6 + $0x8] sm:$0xf]
    %v3918 = vld [vmem:[%s6 + $0xc] sm:$0xf]
    %v3919 = vld [vmem:[%s6 + $0x10] sm:$0xf]
    %v3920 = vld [vmem:[%s6 + $0x14] sm:$0xf]
    %v3921 = vld [vmem:[%s6 + $0x18] sm:$0xf]
    %v3922 = vld [vmem:[%s6 + $0x1c] sm:$0xf]
    %v3923 = vld [vmem:[%s6 + $0x20] sm:$0xf]
    %v3924 = vld [vmem:[%s6 + $0x24] sm:$0xf]
    %v3925 = vld [vmem:[%s6 + $0x28] sm:$0xf]
    %v3926 = vld [vmem:[%s6 + $0x2c] sm:$0xf]
    %v3927 = vld [vmem:[%s6 + $0x30] sm:$0xf]
    %v3928 = vld [vmem:[%s6 + $0x34] sm:$0xf]
    %v3929 = vld [vmem:[%s6 + $0x38] sm:$0xf]
    %v3930 = vld [vmem:[%s6 + $0x3c] sm:$0xf]
    %v3931 = vld [vmem:[%s6 + $0x40] sm:$0xf]
    %v3932 = vld [vmem:[%s6 + $0x44] sm:$0xf]
    %v3933 = vld [vmem:[%s6 + $0x48] sm:$0xf]
    %v3934 = vld [vmem:[%s6 + $0x4c] sm:$0xf]
    %v3935 = vld [vmem:[%s6 + $0x50] sm:$0xf]
    %v3936 = vld [vmem:[%s6 + $0x54] sm:$0xf]
    %v3937 = vld [vmem:[%s6 + $0x58] sm:$0xf]
    %v3938 = vld [vmem:[%s6 + $0x5c] sm:$0xf]
    %v3939 = vld [vmem:[%s6 + $0x60] sm:$0xf]
    %v3940 = vld [vmem:[%s6 + $0x64] sm:$0xf]
    %v3941 = vld [vmem:[%s6 + $0x68] sm:$0xf]
    %v3942 = vld [vmem:[%s6 + $0x6c] sm:$0xf]
    %v3943 = vld [vmem:[%s6 + $0x70] sm:$0xf]
    %v3944 = vld [vmem:[%s6 + $0x74] sm:$0xf]
    %v3945 = vld [vmem:[%s6 + $0x78] sm:$0xf]
    %v3946 = vld [vmem:[%s6 + $0x7c] sm:$0xf]
    %v3947 = vld [vmem:[%s6 + $0x80] sm:$0xf]
    %v3948 = vld [vmem:[%s6 + $0x84] sm:$0xf]
    %v3949 = vld [vmem:[%s6 + $0x88] sm:$0xf]
    %v3950 = vld [vmem:[%s6 + $0x8c] sm:$0xf]
    %v3951 = vld [vmem:[%s6 + $0x90] sm:$0xf]
    %v3952 = vld [vmem:[%s6 + $0x94] sm:$0xf]
    %v3953 = vld [vmem:[%s6 + $0x98] sm:$0xf]
    %v3954 = vld [vmem:[%s6 + $0x9c] sm:$0xf]
    %v3955 = vld [vmem:[%s6 + $0xa0] sm:$0xf]
    %v3956 = vld [vmem:[%s6 + $0xa4] sm:$0xf]
    %v3957 = vld [vmem:[%s6 + $0xa8] sm:$0xf]
    %v3958 = vld [vmem:[%s6 + $0xac] sm:$0xf]
    %v3959 = vld [vmem:[%s6 + $0xb0] sm:$0xf]
    %v3960 = vld [vmem:[%s6 + $0xb4] sm:$0xf]
    %v3961 = vld [vmem:[%s6 + $0xb8] sm:$0xf]
    %v3962 = vld [vmem:[%s6 + $0xbc] sm:$0xf]
    %v3963 = vld [vmem:[%s6 + $0xc0] sm:$0xf]
    %v3964 = vld [vmem:[%s6 + $0xc4] sm:$0xf]
    %v3965 = vld [vmem:[%s6 + $0xc8] sm:$0xf]
    %v3966 = vld [vmem:[%s6 + $0xcc] sm:$0xf]
    %v3967 = vld [vmem:[%s6 + $0xd0] sm:$0xf]
    %v3968 = vld [vmem:[%s6 + $0xd4] sm:$0xf]
    %v3969 = vld [vmem:[%s6 + $0xd8] sm:$0xf]
    %v3970 = vld [vmem:[%s6 + $0xdc] sm:$0xf]
    %v3971 = vld [vmem:[%s6 + $0xe0] sm:$0xf]
    %v3972 = vld [vmem:[%s6 + $0xe4] sm:$0xf]
    %v3973 = vld [vmem:[%s6 + $0xe8] sm:$0xf]
    %v3974 = vld [vmem:[%s6 + $0xec] sm:$0xf]
    %v3975 = vld [vmem:[%s6 + $0xf0] sm:$0xf]
    %v3976 = vld [vmem:[%s6 + $0xf4] sm:$0xf]
    %v3977 = vld [vmem:[%s6 + $0xf8] sm:$0xf]
    %v3978 = vld [vmem:[%s6 + $0xfc] sm:$0xf]
    %v3979 = vld [vmem:[%s6 + $0x100] sm:$0xf]
    %v3980 = vld [vmem:[%s6 + $0x104] sm:$0xf]
    %v3981 = vld [vmem:[%s6 + $0x108] sm:$0xf]
    %v3982 = vld [vmem:[%s6 + $0x10c] sm:$0xf]
    %v3983 = vld [vmem:[%s6 + $0x110] sm:$0xf]
    %v3984 = vld [vmem:[%s6 + $0x114] sm:$0xf]
    %v3985 = vld [vmem:[%s6 + $0x118] sm:$0xf]
    %v3986 = vld [vmem:[%s6 + $0x11c] sm:$0xf]
    %v3987 = vld [vmem:[%s7] sm:$0xf]
    %v3988 = vld [vmem:[%s7 + $0x4] sm:$0xf]
    %v3989 = vld [vmem:[%s7 + $0x8] sm:$0xf]
    %v3990 = vld [vmem:[%s7 + $0xc] sm:$0xf]
    %v3991 = vld [vmem:[%s7 + $0x10] sm:$0xf]
    %v3992 = vld [vmem:[%s7 + $0x14] sm:$0xf]
    %v3993 = vld [vmem:[%s7 + $0x18] sm:$0xf]
    %v3994 = vld [vmem:[%s7 + $0x1c] sm:$0xf]
    %v3995 = vld [vmem:[%s7 + $0x20] sm:$0xf]
    %v3996 = vld [vmem:[%s7 + $0x24] sm:$0xf]
    %v3997 = vld [vmem:[%s7 + $0x28] sm:$0xf]
    %v3998 = vld [vmem:[%s7 + $0x2c] sm:$0xf]
    %v3999 = vld [vmem:[%s7 + $0x30] sm:$0xf]
    %v4000 = vld [vmem:[%s7 + $0x34] sm:$0xf]
    %v4001 = vld [vmem:[%s7 + $0x38] sm:$0xf]
    %v4002 = vld [vmem:[%s7 + $0x3c] sm:$0xf]
    %v4003 = vld [vmem:[%s7 + $0x40] sm:$0xf]
    %v4004 = vld [vmem:[%s7 + $0x44] sm:$0xf]
    %v4005 = vld [vmem:[%s7 + $0x48] sm:$0xf]
    %v4006 = vld [vmem:[%s7 + $0x4c] sm:$0xf]
    %v4007 = vld [vmem:[%s7 + $0x50] sm:$0xf]
    %v4008 = vld [vmem:[%s7 + $0x54] sm:$0xf]
    %v4009 = vld [vmem:[%s7 + $0x58] sm:$0xf]
    %v4010 = vld [vmem:[%s7 + $0x5c] sm:$0xf]
    %v4011 = vld [vmem:[%s7 + $0x60] sm:$0xf]
    %v4012 = vld [vmem:[%s7 + $0x64] sm:$0xf]
    %v4013 = vld [vmem:[%s7 + $0x68] sm:$0xf]
    %v4014 = vld [vmem:[%s7 + $0x6c] sm:$0xf]
    %v4015 = vld [vmem:[%s7 + $0x70] sm:$0xf]
    %v4016 = vld [vmem:[%s7 + $0x74] sm:$0xf]
    %v4017 = vld [vmem:[%s7 + $0x78] sm:$0xf]
    %v4018 = vld [vmem:[%s7 + $0x7c] sm:$0xf]
    %v4019 = vld [vmem:[%s7 + $0x80] sm:$0xf]
    %v4020 = vld [vmem:[%s7 + $0x84] sm:$0xf]
    %v4021 = vld [vmem:[%s7 + $0x88] sm:$0xf]
    %v4022 = vld [vmem:[%s7 + $0x8c] sm:$0xf]
    %v4023 = vld [vmem:[%s7 + $0x90] sm:$0xf]
    %v4024 = vld [vmem:[%s7 + $0x94] sm:$0xf]
    %v4025 = vld [vmem:[%s7 + $0x98] sm:$0xf]
    %v4026 = vld [vmem:[%s7 + $0x9c] sm:$0xf]
    %v4027 = vld [vmem:[%s7 + $0xa0] sm:$0xf]
    %v4028 = vld [vmem:[%s7 + $0xa4] sm:$0xf]
    %v4029 = vld [vmem:[%s7 + $0xa8] sm:$0xf]
    %v4030 = vld [vmem:[%s7 + $0xac] sm:$0xf]
    %v4031 = vld [vmem:[%s7 + $0xb0] sm:$0xf]
    %v4032 = vld [vmem:[%s7 + $0xb4] sm:$0xf]
    %v4033 = vld [vmem:[%s7 + $0xb8] sm:$0xf]
    %v4034 = vld [vmem:[%s7 + $0xbc] sm:$0xf]
    %v4035 = vld [vmem:[%s7 + $0xc0] sm:$0xf]
    %v4036 = vld [vmem:[%s7 + $0xc4] sm:$0xf]
    %v4037 = vld [vmem:[%s7 + $0xc8] sm:$0xf]
    %v4038 = vld [vmem:[%s7 + $0xcc] sm:$0xf]
    %v4039 = vld [vmem:[%s7 + $0xd0] sm:$0xf]
    %v4040 = vld [vmem:[%s7 + $0xd4] sm:$0xf]
    %v4041 = vld [vmem:[%s7 + $0xd8] sm:$0xf]
    %v4042 = vld [vmem:[%s7 + $0xdc] sm:$0xf]
    %v4043 = vld [vmem:[%s7 + $0xe0] sm:$0xf]
    %v4044 = vld [vmem:[%s7 + $0xe4] sm:$0xf]
    %v4045 = vld [vmem:[%s7 + $0xe8] sm:$0xf]
    %v4046 = vld [vmem:[%s7 + $0xec] sm:$0xf]
    %v4047 = vld [vmem:[%s7 + $0xf0] sm:$0xf]
    %v4048 = vld [vmem:[%s7 + $0xf4] sm:$0xf]
    %v4049 = vld [vmem:[%s7 + $0xf8] sm:$0xf]
    %v4050 = vld [vmem:[%s7 + $0xfc] sm:$0xf]
    %v4051 = vld [vmem:[%s7 + $0x100] sm:$0xf]
    %v4052 = vld [vmem:[%s7 + $0x104] sm:$0xf]
    %v4053 = vld [vmem:[%s7 + $0x108] sm:$0xf]
    %v4054 = vld [vmem:[%s7 + $0x10c] sm:$0xf]
    %v4055 = vld [vmem:[%s7 + $0x110] sm:$0xf]
    %v4056 = vld [vmem:[%s7 + $0x114] sm:$0xf]
    %v4057 = vld [vmem:[%s7 + $0x118] sm:$0xf]
    %v4058 = vld [vmem:[%s7 + $0x11c] sm:$0xf]
    %v4131 = vunpack.c.l.b16 %v3987
    %v4132 = vunpack.c.l.b16 %v3988
    %v4133 = vunpack.c.l.b16 %v3989
    %v4134 = vunpack.c.l.b16 %v3990
    %v4135 = vunpack.c.l.b16 %v3991
    %v4136 = vunpack.c.l.b16 %v3992
    %v4137 = vunpack.c.l.b16 %v3993
    %v4138 = vunpack.c.l.b16 %v3994
    %v4139 = vunpack.c.l.b16 %v3995
    %v4140 = vunpack.c.l.b16 %v3996
    %v4141 = vunpack.c.l.b16 %v3997
    %v4142 = vunpack.c.l.b16 %v3998
    %v4143 = vunpack.c.l.b16 %v3999
    %v4144 = vunpack.c.l.b16 %v4000
    %v4145 = vunpack.c.l.b16 %v4001
    %v4146 = vunpack.c.l.b16 %v4002
    %v4147 = vunpack.c.l.b16 %v4003
    %v4148 = vunpack.c.l.b16 %v4004
    %v4149 = vunpack.c.l.b16 %v4005
    %v4150 = vunpack.c.l.b16 %v4006
    %v4151 = vunpack.c.l.b16 %v4007
    %v4152 = vunpack.c.l.b16 %v4008
    %v4153 = vunpack.c.l.b16 %v4009
    %v4154 = vunpack.c.l.b16 %v4010
    %v4155 = vunpack.c.l.b16 %v4011
    %v4156 = vunpack.c.l.b16 %v4012
    %v4157 = vunpack.c.l.b16 %v4013
    %v4158 = vunpack.c.l.b16 %v4014
    %v4159 = vunpack.c.l.b16 %v4015
    %v4160 = vunpack.c.l.b16 %v4016
    %v4161 = vunpack.c.l.b16 %v4017
    %v4162 = vunpack.c.l.b16 %v4018
    %v4163 = vunpack.c.l.b16 %v4019
    %v4164 = vunpack.c.l.b16 %v4020
    %v4165 = vunpack.c.l.b16 %v4021
    %v4166 = vunpack.c.l.b16 %v4022
    %v4167 = vunpack.c.l.b16 %v4023
    %v4168 = vunpack.c.l.b16 %v4024
    %v4169 = vunpack.c.l.b16 %v4025
    %v4170 = vunpack.c.l.b16 %v4026
    %v4171 = vunpack.c.l.b16 %v4027
    %v4172 = vunpack.c.l.b16 %v4028
    %v4173 = vunpack.c.l.b16 %v4029
    %v4174 = vunpack.c.l.b16 %v4030
    %v4175 = vunpack.c.l.b16 %v4031
    %v4176 = vunpack.c.l.b16 %v4032
    %v4177 = vunpack.c.l.b16 %v4033
    %v4178 = vunpack.c.l.b16 %v4034
    %v4179 = vunpack.c.l.b16 %v4035
    %v4180 = vunpack.c.l.b16 %v4036
    %v4181 = vunpack.c.l.b16 %v4037
    %v4182 = vunpack.c.l.b16 %v4038
    %v4183 = vunpack.c.l.b16 %v4039
    %v4184 = vunpack.c.l.b16 %v4040
    %v4185 = vunpack.c.l.b16 %v4041
    %v4186 = vunpack.c.l.b16 %v4042
    %v4187 = vunpack.c.l.b16 %v4043
    %v4188 = vunpack.c.l.b16 %v4044
    %v4189 = vunpack.c.l.b16 %v4045
    %v4190 = vunpack.c.l.b16 %v4046
    %v4191 = vunpack.c.l.b16 %v4047
    %v4192 = vunpack.c.l.b16 %v4048
    %v4193 = vunpack.c.l.b16 %v4049
    %v4194 = vunpack.c.l.b16 %v4050
    %v4195 = vunpack.c.l.b16 %v4051
    %v4196 = vunpack.c.l.b16 %v4052
    %v4197 = vunpack.c.l.b16 %v4053
    %v4198 = vunpack.c.l.b16 %v4054
    %v4199 = vunpack.c.l.b16 %v4055
    %v4200 = vunpack.c.l.b16 %v4056
    %v4201 = vunpack.c.l.b16 %v4057
    %v4202 = vunpack.c.l.b16 %v4058
    %v4203 = vpack.c.b16 %v4132, %v4131
    %v4204 = vpack.c.b16 %v4134, %v4133
    %v4205 = vpack.c.b16 %v4136, %v4135
    %v4206 = vpack.c.b16 %v4138, %v4137
    %v4207 = vpack.c.b16 %v4140, %v4139
    %v4208 = vpack.c.b16 %v4142, %v4141
    %v4209 = vpack.c.b16 %v4144, %v4143
    %v4210 = vpack.c.b16 %v4146, %v4145
    %v4211 = vpack.c.b16 %v4148, %v4147
    %v4212 = vpack.c.b16 %v4150, %v4149
    %v4213 = vpack.c.b16 %v4152, %v4151
    %v4214 = vpack.c.b16 %v4154, %v4153
    %v4215 = vpack.c.b16 %v4156, %v4155
    %v4216 = vpack.c.b16 %v4158, %v4157
    %v4217 = vpack.c.b16 %v4160, %v4159
    %v4218 = vpack.c.b16 %v4162, %v4161
    %v4219 = vpack.c.b16 %v4164, %v4163
    %v4220 = vpack.c.b16 %v4166, %v4165
    %v4221 = vpack.c.b16 %v4168, %v4167
    %v4222 = vpack.c.b16 %v4170, %v4169
    %v4223 = vpack.c.b16 %v4172, %v4171
    %v4224 = vpack.c.b16 %v4174, %v4173
    %v4225 = vpack.c.b16 %v4176, %v4175
    %v4226 = vpack.c.b16 %v4178, %v4177
    %v4227 = vpack.c.b16 %v4180, %v4179
    %v4228 = vpack.c.b16 %v4182, %v4181
    %v4229 = vpack.c.b16 %v4184, %v4183
    %v4230 = vpack.c.b16 %v4186, %v4185
    %v4231 = vpack.c.b16 %v4188, %v4187
    %v4232 = vpack.c.b16 %v4190, %v4189
    %v4233 = vpack.c.b16 %v4192, %v4191
    %v4234 = vpack.c.b16 %v4194, %v4193
    %v4235 = vpack.c.b16 %v4196, %v4195
    %v4236 = vpack.c.b16 %v4198, %v4197
    %v4237 = vpack.c.b16 %v4200, %v4199
    %v4238 = vpack.c.b16 %v4202, %v4201
    %v4276 = vsel %vm1573, %v3500, 0
    %4278 = vmatprep.subr.bf16.mxu0 0
    %4279 = vmatpush1.bf16.msra.mxu0 %v4203
    %4280 = vmatprep.subr.bf16.mxu0 0
    %4281 = vmatpush1.bf16.msra.mxu0 %v4204
    %4282 = vmatprep.subr.bf16.mxu0 0
    %4283 = vmatpush1.bf16.msra.mxu0 %v4205
    %4284 = vmatprep.subr.bf16.mxu0 0
    %4285 = vmatpush1.bf16.msra.mxu0 %v4206
    %4286 = vmatprep.subr.bf16.mxu0 0
    %4287 = vmatpush1.bf16.msra.mxu0 %v4207
    %4288 = vmatprep.subr.bf16.mxu0 0
    %4289 = vmatpush1.bf16.msra.mxu0 %v4208
    %4290 = vmatprep.subr.bf16.mxu0 0
    %4291 = vmatpush1.bf16.msra.mxu0 %v4209
    %4292 = vmatprep.subr.bf16.mxu0 0
    %4293 = vmatpush1.bf16.msra.mxu0 %v4210
    %4294 = vmatprep.subr.bf16.mxu0 0
    %4295 = vmatpush1.bf16.msra.mxu0 %v4211
    %4296 = vmatprep.subr.bf16.mxu0 0
    %4297 = vmatpush1.bf16.msra.mxu0 %v4212
    %4298 = vmatprep.subr.bf16.mxu0 0
    %4299 = vmatpush1.bf16.msra.mxu0 %v4213
    %4300 = vmatprep.subr.bf16.mxu0 0
    %4301 = vmatpush1.bf16.msra.mxu0 %v4214
    %4302 = vmatprep.subr.bf16.mxu0 0
    %4303 = vmatpush1.bf16.msra.mxu0 %v4215
    %4304 = vmatprep.subr.bf16.mxu0 0
    %4305 = vmatpush1.bf16.msra.mxu0 %v4216
    %4306 = vmatprep.subr.bf16.mxu0 0
    %4307 = vmatpush1.bf16.msra.mxu0 %v4217
    %4308 = vmatprep.subr.bf16.mxu0 0
    %4309 = vmatpush1.bf16.msra.mxu0 %v4218
    %4310 = vmatprep.mubr.bf16.mxu0 %v3497
    %4311 = vmatmul.mubr.bf16.gmra.mrb[0].mxu0 %v3496
    %v4312 = vpop.f32.mrb[0].mxu0
    %v4313 = vadd.f32 0.0, %v4312
    %v4314 = vpop.f32.mrb[0].mxu0
    %v4315 = vpop.f32.mrb[0].mxu0
    %v4316 = vadd.f32 0.0, %v4315
    %v4317 = vpop.f32.mrb[0].mxu0
    %4318 = vdwg.mxu0
    %4319 = vmatprep.subr.bf16.mxu0 0
    %4320 = vmatpush1.bf16.msra.mxu0 %v4219
    %4321 = vmatprep.subr.bf16.mxu0 0
    %4322 = vmatpush1.bf16.msra.mxu0 %v4220
    %4323 = vmatprep.subr.bf16.mxu0 0
    %4324 = vmatpush1.bf16.msra.mxu0 %v4221
    %4325 = vmatprep.subr.bf16.mxu0 0
    %4326 = vmatpush1.bf16.msra.mxu0 %v4222
    %4327 = vmatprep.subr.bf16.mxu0 0
    %4328 = vmatpush1.bf16.msra.mxu0 %v4223
    %4329 = vmatprep.subr.bf16.mxu0 0
    %4330 = vmatpush1.bf16.msra.mxu0 %v4224
    %4331 = vmatprep.subr.bf16.mxu0 0
    %4332 = vmatpush1.bf16.msra.mxu0 %v4225
    %4333 = vmatprep.subr.bf16.mxu0 0
    %4334 = vmatpush1.bf16.msra.mxu0 %v4226
    %4335 = vmatprep.subr.bf16.mxu0 0
    %4336 = vmatpush1.bf16.msra.mxu0 %v4227
    %4337 = vmatprep.subr.bf16.mxu0 0
    %4338 = vmatpush1.bf16.msra.mxu0 %v4228
    %4339 = vmatprep.subr.bf16.mxu0 0
    %4340 = vmatpush1.bf16.msra.mxu0 %v4229
    %4341 = vmatprep.subr.bf16.mxu0 0
    %4342 = vmatpush1.bf16.msra.mxu0 %v4230
    %4343 = vmatprep.subr.bf16.mxu0 0
    %4344 = vmatpush1.bf16.msra.mxu0 %v4231
    %4345 = vmatprep.subr.bf16.mxu0 0
    %4346 = vmatpush1.bf16.msra.mxu0 %v4232
    %4347 = vmatprep.subr.bf16.mxu0 0
    %4348 = vmatpush1.bf16.msra.mxu0 %v4233
    %4349 = vmatprep.subr.bf16.mxu0 0
    %4350 = vmatpush1.bf16.msra.mxu0 %v4234
    %4351 = vmatprep.mubr.bf16.mxu0 %v3499
    %4352 = vmatmul.mubr.bf16.gmra.mrb[0].mxu0 %v3498
    %v4353 = vpop.f32.mrb[0].mxu0
    %v4354 = vadd.f32 %v4313, %v4353
    %v4355 = vpop.f32.mrb[0].mxu0
    %v4356 = vpop.f32.mrb[0].mxu0
    %v4357 = vadd.f32 %v4316, %v4356
    %v4358 = vpop.f32.mrb[0].mxu0
    %4359 = vdwg.mxu0
    %4360 = vmatprep.subr.bf16.mxu0 0
    %4361 = vmatpush1.bf16.msra.mxu0 %v4235
    %4362 = vmatprep.subr.bf16.mxu0 0
    %4363 = vmatpush1.bf16.msra.mxu0 %v4236
    %4364 = vmatprep.subr.bf16.mxu0 0
    %4365 = vmatpush1.bf16.msra.mxu0 %v4237
    %4366 = vmatprep.subr.bf16.mxu0 0
    %4367 = vmatpush1.bf16.msra.mxu0 %v4238
    %4368 = vmatprep.subr.bf16.mxu0 0
    %4369 = vmatpush1.bf16.msra.mxu0 0
    %4370 = vmatprep.subr.bf16.mxu0 0
    %4371 = vmatpush1.bf16.msra.mxu0 0
    %4372 = vmatprep.subr.bf16.mxu0 0
    %4373 = vmatpush1.bf16.msra.mxu0 0
    %4374 = vmatprep.subr.bf16.mxu0 0
    %4375 = vmatpush1.bf16.msra.mxu0 0
    %4376 = vmatprep.subr.bf16.mxu0 0
    %4377 = vmatpush1.bf16.msra.mxu0 0
    %4378 = vmatprep.subr.bf16.mxu0 0
    %4379 = vmatpush1.bf16.msra.mxu0 0
    %4380 = vmatprep.subr.bf16.mxu0 0
    %4381 = vmatpush1.bf16.msra.mxu0 0
    %4382 = vmatprep.subr.bf16.mxu0 0
    %4383 = vmatpush1.bf16.msra.mxu0 0
    %4384 = vmatprep.subr.bf16.mxu0 0
    %4385 = vmatpush1.bf16.msra.mxu0 0
    %4386 = vmatprep.subr.bf16.mxu0 0
    %4387 = vmatpush1.bf16.msra.mxu0 0
    %4388 = vmatprep.subr.bf16.mxu0 0
    %4389 = vmatpush1.bf16.msra.mxu0 0
    %4390 = vmatprep.subr.bf16.mxu0 0
    %4391 = vmatpush1.bf16.msra.mxu0 0
    %4392 = vmatprep.mubr.bf16.mxu0 0
    %4393 = vmatmul.mubr.bf16.gmra.mrb[0].mxu0 %v4276
    %v4394 = vpop.f32.mrb[0].mxu0
    %v4395 = vadd.f32 %v4354, %v4394
    %v4396 = vpop.f32.mrb[0].mxu0
    %v4397 = vpop.f32.mrb[0].mxu0
    %v4398 = vadd.f32 %v4357, %v4397
    %v4399 = vpop.f32.mrb[0].mxu0
    %4400 = vdwg.mxu0
    %v4473 = vunpack.c.l.b16 %v3915
    %v4474 = vunpack.c.l.b16 %v3916
    %v4475 = vunpack.c.l.b16 %v3917
    %v4476 = vunpack.c.l.b16 %v3918
    %v4477 = vunpack.c.l.b16 %v3919
    %v4478 = vunpack.c.l.b16 %v3920
    %v4479 = vunpack.c.l.b16 %v3921
    %v4480 = vunpack.c.l.b16 %v3922
    %v4481 = vunpack.c.l.b16 %v3923
    %v4482 = vunpack.c.l.b16 %v3924
    %v4483 = vunpack.c.l.b16 %v3925
    %v4484 = vunpack.c.l.b16 %v3926
    %v4485 = vunpack.c.l.b16 %v3927
    %v4486 = vunpack.c.l.b16 %v3928
    %v4487 = vunpack.c.l.b16 %v3929
    %v4488 = vunpack.c.l.b16 %v3930
    %v4489 = vunpack.c.l.b16 %v3931
    %v4490 = vunpack.c.l.b16 %v3932
    %v4491 = vunpack.c.l.b16 %v3933
    %v4492 = vunpack.c.l.b16 %v3934
    %v4493 = vunpack.c.l.b16 %v3935
    %v4494 = vunpack.c.l.b16 %v3936
    %v4495 = vunpack.c.l.b16 %v3937
    %v4496 = vunpack.c.l.b16 %v3938
    %v4497 = vunpack.c.l.b16 %v3939
    %v4498 = vunpack.c.l.b16 %v3940
    %v4499 = vunpack.c.l.b16 %v3941
    %v4500 = vunpack.c.l.b16 %v3942
    %v4501 = vunpack.c.l.b16 %v3943
    %v4502 = vunpack.c.l.b16 %v3944
    %v4503 = vunpack.c.l.b16 %v3945
    %v4504 = vunpack.c.l.b16 %v3946
    %v4505 = vunpack.c.l.b16 %v3947
    %v4506 = vunpack.c.l.b16 %v3948
    %v4507 = vunpack.c.l.b16 %v3949
    %v4508 = vunpack.c.l.b16 %v3950
    %v4509 = vunpack.c.l.b16 %v3951
    %v4510 = vunpack.c.l.b16 %v3952
    %v4511 = vunpack.c.l.b16 %v3953
    %v4512 = vunpack.c.l.b16 %v3954
    %v4513 = vunpack.c.l.b16 %v3955
    %v4514 = vunpack.c.l.b16 %v3956
    %v4515 = vunpack.c.l.b16 %v3957
    %v4516 = vunpack.c.l.b16 %v3958
    %v4517 = vunpack.c.l.b16 %v3959
    %v4518 = vunpack.c.l.b16 %v3960
    %v4519 = vunpack.c.l.b16 %v3961
    %v4520 = vunpack.c.l.b16 %v3962
    %v4521 = vunpack.c.l.b16 %v3963
    %v4522 = vunpack.c.l.b16 %v3964
    %v4523 = vunpack.c.l.b16 %v3965
    %v4524 = vunpack.c.l.b16 %v3966
    %v4525 = vunpack.c.l.b16 %v3967
    %v4526 = vunpack.c.l.b16 %v3968
    %v4527 = vunpack.c.l.b16 %v3969
    %v4528 = vunpack.c.l.b16 %v3970
    %v4529 = vunpack.c.l.b16 %v3971
    %v4530 = vunpack.c.l.b16 %v3972
    %v4531 = vunpack.c.l.b16 %v3973
    %v4532 = vunpack.c.l.b16 %v3974
    %v4533 = vunpack.c.l.b16 %v3975
    %v4534 = vunpack.c.l.b16 %v3976
    %v4535 = vunpack.c.l.b16 %v3977
    %v4536 = vunpack.c.l.b16 %v3978
    %v4537 = vunpack.c.l.b16 %v3979
    %v4538 = vunpack.c.l.b16 %v3980
    %v4539 = vunpack.c.l.b16 %v3981
    %v4540 = vunpack.c.l.b16 %v3982
    %v4541 = vunpack.c.l.b16 %v3983
    %v4542 = vunpack.c.l.b16 %v3984
    %v4543 = vunpack.c.l.b16 %v3985
    %v4544 = vunpack.c.l.b16 %v3986
    %v4545 = vpack.c.b16 %v4474, %v4473
    %v4546 = vpack.c.b16 %v4476, %v4475
    %v4547 = vpack.c.b16 %v4478, %v4477
    %v4548 = vpack.c.b16 %v4480, %v4479
    %v4549 = vpack.c.b16 %v4482, %v4481
    %v4550 = vpack.c.b16 %v4484, %v4483
    %v4551 = vpack.c.b16 %v4486, %v4485
    %v4552 = vpack.c.b16 %v4488, %v4487
    %v4553 = vpack.c.b16 %v4490, %v4489
    %v4554 = vpack.c.b16 %v4492, %v4491
    %v4555 = vpack.c.b16 %v4494, %v4493
    %v4556 = vpack.c.b16 %v4496, %v4495
    %v4557 = vpack.c.b16 %v4498, %v4497
    %v4558 = vpack.c.b16 %v4500, %v4499
    %v4559 = vpack.c.b16 %v4502, %v4501
    %v4560 = vpack.c.b16 %v4504, %v4503
    %v4561 = vpack.c.b16 %v4506, %v4505
    %v4562 = vpack.c.b16 %v4508, %v4507
    %v4563 = vpack.c.b16 %v4510, %v4509
    %v4564 = vpack.c.b16 %v4512, %v4511
    %v4565 = vpack.c.b16 %v4514, %v4513
    %v4566 = vpack.c.b16 %v4516, %v4515
    %v4567 = vpack.c.b16 %v4518, %v4517
    %v4568 = vpack.c.b16 %v4520, %v4519
    %v4569 = vpack.c.b16 %v4522, %v4521
    %v4570 = vpack.c.b16 %v4524, %v4523
    %v4571 = vpack.c.b16 %v4526, %v4525
    %v4572 = vpack.c.b16 %v4528, %v4527
    %v4573 = vpack.c.b16 %v4530, %v4529
    %v4574 = vpack.c.b16 %v4532, %v4531
    %v4575 = vpack.c.b16 %v4534, %v4533
    %v4576 = vpack.c.b16 %v4536, %v4535
    %v4577 = vpack.c.b16 %v4538, %v4537
    %v4578 = vpack.c.b16 %v4540, %v4539
    %v4579 = vpack.c.b16 %v4542, %v4541
    %v4580 = vpack.c.b16 %v4544, %v4543
    %4617 = vmatprep.subr.bf16.mxu0 0
    %4618 = vmatpush1.bf16.msra.mxu0 %v4545
    %4619 = vmatprep.subr.bf16.mxu0 0
    %4620 = vmatpush1.bf16.msra.mxu0 %v4546
    %4621 = vmatprep.subr.bf16.mxu0 0
    %4622 = vmatpush1.bf16.msra.mxu0 %v4547
    %4623 = vmatprep.subr.bf16.mxu0 0
    %4624 = vmatpush1.bf16.msra.mxu0 %v4548
    %4625 = vmatprep.subr.bf16.mxu0 0
    %4626 = vmatpush1.bf16.msra.mxu0 %v4549
    %4627 = vmatprep.subr.bf16.mxu0 0
    %4628 = vmatpush1.bf16.msra.mxu0 %v4550
    %4629 = vmatprep.subr.bf16.mxu0 0
    %4630 = vmatpush1.bf16.msra.mxu0 %v4551
    %4631 = vmatprep.subr.bf16.mxu0 0
    %4632 = vmatpush1.bf16.msra.mxu0 %v4552
    %4633 = vmatprep.subr.bf16.mxu0 0
    %4634 = vmatpush1.bf16.msra.mxu0 %v4553
    %4635 = vmatprep.subr.bf16.mxu0 0
    %4636 = vmatpush1.bf16.msra.mxu0 %v4554
    %4637 = vmatprep.subr.bf16.mxu0 0
    %4638 = vmatpush1.bf16.msra.mxu0 %v4555
    %4639 = vmatprep.subr.bf16.mxu0 0
    %4640 = vmatpush1.bf16.msra.mxu0 %v4556
    %4641 = vmatprep.subr.bf16.mxu0 0
    %4642 = vmatpush1.bf16.msra.mxu0 %v4557
    %4643 = vmatprep.subr.bf16.mxu0 0
    %4644 = vmatpush1.bf16.msra.mxu0 %v4558
    %4645 = vmatprep.subr.bf16.mxu0 0
    %4646 = vmatpush1.bf16.msra.mxu0 %v4559
    %4647 = vmatprep.subr.bf16.mxu0 0
    %4648 = vmatpush1.bf16.msra.mxu0 %v4560
    %4649 = vmatprep.mubr.bf16.mxu0 %v3492
    %4650 = vmatmul.mubr.bf16.gmra.mrb[0].mxu0 %v3491
    %v4651 = vpop.f32.mrb[0].mxu0
    %v4652 = vadd.f32 %v4395, %v4651
    %v4653 = vpop.f32.mrb[0].mxu0
    %v4654 = vpop.f32.mrb[0].mxu0
    %v4655 = vadd.f32 %v4398, %v4654
    %v4656 = vpop.f32.mrb[0].mxu0
    %4657 = vdwg.mxu0
    %4658 = vmatprep.subr.bf16.mxu0 0
    %4659 = vmatpush1.bf16.msra.mxu0 %v4561
    %4660 = vmatprep.subr.bf16.mxu0 0
    %4661 = vmatpush1.bf16.msra.mxu0 %v4562
    %4662 = vmatprep.subr.bf16.mxu0 0
    %4663 = vmatpush1.bf16.msra.mxu0 %v4563
    %4664 = vmatprep.subr.bf16.mxu0 0
    %4665 = vmatpush1.bf16.msra.mxu0 %v4564
    %4666 = vmatprep.subr.bf16.mxu0 0
    %4667 = vmatpush1.bf16.msra.mxu0 %v4565
    %4668 = vmatprep.subr.bf16.mxu0 0
    %4669 = vmatpush1.bf16.msra.mxu0 %v4566
    %4670 = vmatprep.subr.bf16.mxu0 0
    %4671 = vmatpush1.bf16.msra.mxu0 %v4567
    %4672 = vmatprep.subr.bf16.mxu0 0
    %4673 = vmatpush1.bf16.msra.mxu0 %v4568
    %4674 = vmatprep.subr.bf16.mxu0 0
    %4675 = vmatpush1.bf16.msra.mxu0 %v4569
    %4676 = vmatprep.subr.bf16.mxu0 0
    %4677 = vmatpush1.bf16.msra.mxu0 %v4570
    %4678 = vmatprep.subr.bf16.mxu0 0
    %4679 = vmatpush1.bf16.msra.mxu0 %v4571
    %4680 = vmatprep.subr.bf16.mxu0 0
    %4681 = vmatpush1.bf16.msra.mxu0 %v4572
    %4682 = vmatprep.subr.bf16.mxu0 0
    %4683 = vmatpush1.bf16.msra.mxu0 %v4573
    %4684 = vmatprep.subr.bf16.mxu0 0
    %4685 = vmatpush1.bf16.msra.mxu0 %v4574
    %4686 = vmatprep.subr.bf16.mxu0 0
    %4687 = vmatpush1.bf16.msra.mxu0 %v4575
    %4688 = vmatprep.subr.bf16.mxu0 0
    %4689 = vmatpush1.bf16.msra.mxu0 %v4576
    %4690 = vmatprep.mubr.bf16.mxu0 %v3494
    %4691 = vmatmul.mubr.bf16.gmra.mrb[0].mxu0 %v3493
    %v4692 = vpop.f32.mrb[0].mxu0
    %v4693 = vadd.f32 %v4652, %v4692
    %v4694 = vpop.f32.mrb[0].mxu0
    %v4695 = vpop.f32.mrb[0].mxu0
    %v4696 = vadd.f32 %v4655, %v4695
    %v4697 = vpop.f32.mrb[0].mxu0
    %4698 = vdwg.mxu0
    %4699 = vmatprep.subr.bf16.mxu0 0
    %4700 = vmatpush1.bf16.msra.mxu0 %v4577
    %4701 = vmatprep.subr.bf16.mxu0 0
    %4702 = vmatpush1.bf16.msra.mxu0 %v4578
    %4703 = vmatprep.subr.bf16.mxu0 0
    %4704 = vmatpush1.bf16.msra.mxu0 %v4579
    %4705 = vmatprep.subr.bf16.mxu0 0
    %4706 = vmatpush1.bf16.msra.mxu0 %v4580
    %4707 = vmatprep.subr.bf16.mxu0 0
    %4708 = vmatpush1.bf16.msra.mxu0 0
    %4709 = vmatprep.subr.bf16.mxu0 0
    %4710 = vmatpush1.bf16.msra.mxu0 0
    %4711 = vmatprep.subr.bf16.mxu0 0
    %4712 = vmatpush1.bf16.msra.mxu0 0
    %4713 = vmatprep.subr.bf16.mxu0 0
    %4714 = vmatpush1.bf16.msra.mxu0 0
    %4715 = vmatprep.subr.bf16.mxu0 0
    %4716 = vmatpush1.bf16.msra.mxu0 0
    %4717 = vmatprep.subr.bf16.mxu0 0
    %4718 = vmatpush1.bf16.msra.mxu0 0
    %4719 = vmatprep.subr.bf16.mxu0 0
    %4720 = vmatpush1.bf16.msra.mxu0 0
    %4721 = vmatprep.subr.bf16.mxu0 0
    %4722 = vmatpush1.bf16.msra.mxu0 0
    %4723 = vmatprep.subr.bf16.mxu0 0
    %4724 = vmatpush1.bf16.msra.mxu0 0
    %4725 = vmatprep.subr.bf16.mxu0 0
    %4726 = vmatpush1.bf16.msra.mxu0 0
    %4727 = vmatprep.subr.bf16.mxu0 0
    %4728 = vmatpush1.bf16.msra.mxu0 0
    %4729 = vmatprep.subr.bf16.mxu0 0
    %4730 = vmatpush1.bf16.msra.mxu0 0
    %4731 = vmatprep.mubr.bf16.mxu0 0
    %4732 = vmatmul.mubr.bf16.gmra.mrb[0].mxu0 %v3790
    %v4733 = vpop.f32.mrb[0].mxu0
    %v4734 = vadd.f32 %v4693, %v4733
    %v4735 = vpop.f32.mrb[0].mxu0
    %v4736 = vpop.f32.mrb[0].mxu0
    %v4737 = vadd.f32 %v4696, %v4736
    %v4738 = vpop.f32.mrb[0].mxu0
    %4739 = vdwg.mxu0
    %vm4740 = vcmp.ge.f32.partialorder %v3909, 0.0
    %vm4741 = vcmp.ge.f32.partialorder %v3912, 0.0
    %v4742 = vmul.f32 %v3909, 0.2
    %v4743 = vmul.f32 %v3912, 0.2
    %v4744 = vsel %vm4740, %v3909, %v4742
    %v4745 = vsel %vm4741, %v3912, %v4743
    %vm4746 = vcmp.ge.f32.partialorder %v4734, 0.0
    %vm4747 = vcmp.ge.f32.partialorder %v4737, 0.0
    %v4748 = vmul.f32 %v4734, 0.2
    %v4749 = vmul.f32 %v4737, 0.2
    %v4750 = vsel %vm4746, %v4734, %v4748
    %v4751 = vsel %vm4747, %v4737, %v4749
    %v4752 = vld [vmem:[%s9] sm:$0x1]
    %vm4753 = vcmp.gt.f32.partialorder %v4752, 0.0
    %v4754 = vsel %vm4753, 1, 0
    %v4755 = vlaneseq
    %v4756 = vshrl.u32 %v4755, 7
    %v4757 = vsub.s32 0, %v4756
    %v4758 = vrot.slane %v4754, %v4757
    %vm4759 = vcmp.eq.s32.totalorder %v4758, 1
    %v4760 = vsel %vm4759, %v4750, -1e+30
    %v4761 = vsel %vm4759, %v4751, -1e+30
    %v4762 = vmax.f32 %v4744, %v4760
    %v4763 = vmax.f32 %v4745, %v4761
    %v4764 = vsub.f32 %v4744, %v4762
    %v4765 = vsub.f32 %v4745, %v4763
    %v4766 = vmul.f32 %v4764, 1.442695
    %v4767 = vpow.pop %v4766
    %v4768 = vmul.f32 %v4765, 1.442695
    %v4769 = vpow.pop %v4768
    %v4770 = vsub.f32 %v4760, %v4762
    %v4771 = vsub.f32 %v4761, %v4763
    %v4772 = vmul.f32 %v4770, 1.442695
    %v4773 = vpow.pop %v4772
    %v4774 = vmul.f32 %v4771, 1.442695
    %v4775 = vpow.pop %v4774
    %v4776 = vadd.f32 %v4767, %v4773
    %v4777 = vadd.f32 %v4769, %v4775
    %v4778 = vrcp.pop %v4776
    %v4779 = vrcp.pop %v4777
    %v4780 = vmul.f32 %v4767, %v4778
    %v4781 = vmul.f32 %v4769, %v4779
    %v4782 = vpack.c.bf16 %v4781, %v4780
    %v4783 = vld [vmem:[#allocation7] sm:$0xff]
    %v4784 = vld [vmem:[#allocation7 + $0x8] sm:$0xff]
    %v4785 = vld [vmem:[#allocation7 + $0x10] sm:$0xf]
    %v4786 = vld [vmem:[#allocation7 + $0x14] sm:$0xff]
    %v4787 = vld [vmem:[#allocation7 + $0x1c] sm:$0xff]
    %v4788 = vld [vmem:[#allocation7 + $0x24] sm:$0xf]
    %v4789 = vld [vmem:[#allocation7 + $0x28] sm:$0xff]
    %v4790 = vld [vmem:[#allocation7 + $0x30] sm:$0xff]
    %v4791 = vld [vmem:[#allocation7 + $0x38] sm:$0xf]
    %v4792 = vld [vmem:[#allocation7 + $0x3c] sm:$0xff]
    %v4793 = vld [vmem:[#allocation7 + $0x44] sm:$0xff]
    %v4794 = vld [vmem:[#allocation7 + $0x4c] sm:$0xf]
    %v4795 = vld [vmem:[#allocation7 + $0x50] sm:$0xff]
    %v4796 = vld [vmem:[#allocation7 + $0x58] sm:$0xff]
    %v4797 = vld [vmem:[#allocation7 + $0x60] sm:$0xf]
    %v4798 = vld [vmem:[#allocation7 + $0x64] sm:$0xff]
    %v4799 = vld [vmem:[#allocation7 + $0x6c] sm:$0xff]
    %v4800 = vld [vmem:[#allocation7 + $0x74] sm:$0xf]
    %v4801 = vld [vmem:[#allocation7 + $0x78] sm:$0xff]
    %v4802 = vld [vmem:[#allocation7 + $0x80] sm:$0xff]
    %v4803 = vld [vmem:[#allocation7 + $0x88] sm:$0xf]
    %v4804 = vld [vmem:[#allocation7 + $0x8c] sm:$0xff]
    %v4805 = vld [vmem:[#allocation7 + $0x94] sm:$0xff]
    %v4806 = vld [vmem:[#allocation7 + $0x9c] sm:$0xf]
    %v4807 = vld [vmem:[#allocation7 + $0xa0] sm:$0xff]
    %v4808 = vld [vmem:[#allocation7 + $0xa8] sm:$0xff]
    %v4809 = vld [vmem:[#allocation7 + $0xb0] sm:$0xf]
    %v4837 = vunpack.c.l.b16 %v4783
    %v4838 = vunpack.c.h.b16 %v4783
    %v4839 = vunpack.c.l.b16 %v4784
    %v4840 = vunpack.c.h.b16 %v4784
    %v4841 = vunpack.c.l.b16 %v4785
    %v4842 = vunpack.c.l.b16 %v4786
    %v4843 = vunpack.c.h.b16 %v4786
    %v4844 = vunpack.c.l.b16 %v4787
    %v4845 = vunpack.c.h.b16 %v4787
    %v4846 = vunpack.c.l.b16 %v4788
    %v4847 = vunpack.c.l.b16 %v4789
    %v4848 = vunpack.c.h.b16 %v4789
    %v4849 = vunpack.c.l.b16 %v4790
    %v4850 = vunpack.c.h.b16 %v4790
    %v4851 = vunpack.c.l.b16 %v4791
    %v4852 = vunpack.c.l.b16 %v4792
    %v4853 = vunpack.c.h.b16 %v4792
    %v4854 = vunpack.c.l.b16 %v4793
    %v4855 = vunpack.c.h.b16 %v4793
    %v4856 = vunpack.c.l.b16 %v4794
    %v4857 = vunpack.c.l.b16 %v4795
    %v4858 = vunpack.c.h.b16 %v4795
    %v4859 = vunpack.c.l.b16 %v4796
    %v4860 = vunpack.c.h.b16 %v4796
    %v4861 = vunpack.c.l.b16 %v4797
    %v4862 = vunpack.c.l.b16 %v4798
    %v4863 = vunpack.c.h.b16 %v4798
    %v4864 = vunpack.c.l.b16 %v4799
    %v4865 = vunpack.c.h.b16 %v4799
    %v4866 = vunpack.c.l.b16 %v4800
    %v4867 = vunpack.c.l.b16 %v4801
    %v4868 = vunpack.c.h.b16 %v4801
    %v4869 = vunpack.c.l.b16 %v4802
    %v4870 = vunpack.c.h.b16 %v4802
    %v4871 = vunpack.c.l.b16 %v4803
    %v4872 = vunpack.c.l.b16 %v4804
    %v4873 = vunpack.c.h.b16 %v4804
    %v4874 = vunpack.c.l.b16 %v4805
    %v4875 = vunpack.c.h.b16 %v4805
    %v4876 = vunpack.c.l.b16 %v4806
    %v4877 = vunpack.c.l.b16 %v4807
    %v4878 = vunpack.c.h.b16 %v4807
    %v4879 = vunpack.c.l.b16 %v4808
    %v4880 = vunpack.c.h.b16 %v4808
    %v4881 = vunpack.c.l.b16 %v4809
    %v4882 = vpack.c.b16 %v4842, %v4837
    %v4883 = vpack.c.b16 %v4843, %v4838
    %v4884 = vpack.c.b16 %v4844, %v4839
    %v4885 = vpack.c.b16 %v4845, %v4840
    %v4886 = vpack.c.b16 %v4846, %v4841
    %v4887 = vpack.c.b16 %v4852, %v4847
    %v4888 = vpack.c.b16 %v4853, %v4848
    %v4889 = vpack.c.b16 %v4854, %v4849
    %v4890 = vpack.c.b16 %v4855, %v4850
    %v4891 = vpack.c.b16 %v4856, %v4851
    %v4892 = vpack.c.b16 %v4862, %v4857
    %v4893 = vpack.c.b16 %v4863, %v4858
    %v4894 = vpack.c.b16 %v4864, %v4859
    %v4895 = vpack.c.b16 %v4865, %v4860
    %v4896 = vpack.c.b16 %v4866, %v4861
    %v4897 = vpack.c.b16 %v4872, %v4867
    %v4898 = vpack.c.b16 %v4873, %v4868
    %v4899 = vpack.c.b16 %v4874, %v4869
    %v4900 = vpack.c.b16 %v4875, %v4870
    %v4901 = vpack.c.b16 %v4876, %v4871
    %v4902 = vpack.c.b16 %v4877, %v4877
    %v4903 = vpack.c.b16 %v4878, %v4878
    %v4904 = vpack.c.b16 %v4879, %v4879
    %v4905 = vpack.c.b16 %v4880, %v4880
    %v4906 = vpack.c.b16 %v4881, %v4881
    %v4928 = vsel %vm259, %v4782, 0
    %v4931 = vsel %vm263, %v4902, 0
    %v4934 = vsel %vm263, %v4903, 0
    %v4937 = vsel %vm263, %v4904, 0
    %v4940 = vsel %vm263, %v4905, 0
    %v4943 = vsel %vm263, %v4906, 0
    %4945 = vmatprep.subr.bf16.mxu0 %v4883
    %4946 = vmatpush1.bf16.msra.mxu0 %v4882
    %4947 = vmatprep.subr.bf16.mxu0 %v4888
    %4948 = vmatpush1.bf16.msra.mxu0 %v4887
    %4949 = vmatprep.subr.bf16.mxu0 %v4893
    %4950 = vmatpush1.bf16.msra.mxu0 %v4892
    %4951 = vmatprep.subr.bf16.mxu0 %v4898
    %4952 = vmatpush1.bf16.msra.mxu0 %v4897
    %4953 = vmatprep.subr.bf16.mxu0 %v4934
    %4954 = vmatpush1.bf16.msra.mxu0 %v4931
    %4955 = vmatprep.subr.bf16.mxu0 0
    %4956 = vmatpush1.bf16.msra.mxu0 0
    %4957 = vmatprep.subr.bf16.mxu0 0
    %4958 = vmatpush1.bf16.msra.mxu0 0
    %4959 = vmatprep.subr.bf16.mxu0 0
    %4960 = vmatpush1.bf16.msra.mxu0 0
    %4961 = vmatprep.subr.bf16.mxu0 0
    %4962 = vmatpush1.bf16.msra.mxu0 0
    %4963 = vmatprep.subr.bf16.mxu0 0
    %4964 = vmatpush1.bf16.msra.mxu0 0
    %4965 = vmatprep.subr.bf16.mxu0 0
    %4966 = vmatpush1.bf16.msra.mxu0 0
    %4967 = vmatprep.subr.bf16.mxu0 0
    %4968 = vmatpush1.bf16.msra.mxu0 0
    %4969 = vmatprep.subr.bf16.mxu0 0
    %4970 = vmatpush1.bf16.msra.mxu0 0
    %4971 = vmatprep.subr.bf16.mxu0 0
    %4972 = vmatpush1.bf16.msra.mxu0 0
    %4973 = vmatprep.subr.bf16.mxu0 0
    %4974 = vmatpush1.bf16.msra.mxu0 0
    %4975 = vmatprep.subr.bf16.mxu0 0
    %4976 = vmatpush1.bf16.msra.mxu0 0
    %4977 = vmatprep.mubr.bf16.mxu0 0
    %4978 = vmatmul.mubr.bf16.gmra.mrb[0].mxu0 %v4928
    %v4979 = vpop.f32.mrb[0].mxu0
    %v4980 = vadd.f32 0.0, %v4979
    %v4981 = vpop.f32.mrb[0].mxu0
    %v4982 = vadd.f32 0.0, %v4981
    %v4983 = vpop.f32.mrb[0].mxu0
    %v4984 = vadd.f32 0.0, %v4983
    %v4985 = vpop.f32.mrb[0].mxu0
    %v4986 = vadd.f32 0.0, %v4985
    %4987 = vdwg.mxu0
    %4988 = vmatprep.subr.bf16.mxu0 %v4885
    %4989 = vmatpush1.bf16.msra.mxu0 %v4884
    %4990 = vmatprep.subr.bf16.mxu0 %v4890
    %4991 = vmatpush1.bf16.msra.mxu0 %v4889
    %4992 = vmatprep.subr.bf16.mxu0 %v4895
    %4993 = vmatpush1.bf16.msra.mxu0 %v4894
    %4994 = vmatprep.subr.bf16.mxu0 %v4900
    %4995 = vmatpush1.bf16.msra.mxu0 %v4899
    %4996 = vmatprep.subr.bf16.mxu0 %v4940
    %4997 = vmatpush1.bf16.msra.mxu0 %v4937
    %4998 = vmatprep.subr.bf16.mxu0 0
    %4999 = vmatpush1.bf16.msra.mxu0 0
    %5000 = vmatprep.subr.bf16.mxu0 0
    %5001 = vmatpush1.bf16.msra.mxu0 0
    %5002 = vmatprep.subr.bf16.mxu0 0
    %5003 = vmatpush1.bf16.msra.mxu0 0
    %5004 = vmatprep.subr.bf16.mxu0 0
    %5005 = vmatpush1.bf16.msra.mxu0 0
    %5006 = vmatprep.subr.bf16.mxu0 0
    %5007 = vmatpush1.bf16.msra.mxu0 0
    %5008 = vmatprep.subr.bf16.mxu0 0
    %5009 = vmatpush1.bf16.msra.mxu0 0
    %5010 = vmatprep.subr.bf16.mxu0 0
    %5011 = vmatpush1.bf16.msra.mxu0 0
    %5012 = vmatprep.subr.bf16.mxu0 0
    %5013 = vmatpush1.bf16.msra.mxu0 0
    %5014 = vmatprep.subr.bf16.mxu0 0
    %5015 = vmatpush1.bf16.msra.mxu0 0
    %5016 = vmatprep.subr.bf16.mxu0 0
    %5017 = vmatpush1.bf16.msra.mxu0 0
    %5018 = vmatprep.subr.bf16.mxu0 0
    %5019 = vmatpush1.bf16.msra.mxu0 0
    %5020 = vmatprep.mubr.bf16.mxu0 0
    %5021 = vmatmul.mubr.bf16.gmra.mrb[0].mxu0 %v4928
    %v5022 = vpop.f32.mrb[0].mxu0
    %v5023 = vadd.f32 0.0, %v5022
    %v5024 = vpop.f32.mrb[0].mxu0
    %v5025 = vadd.f32 0.0, %v5024
    %v5026 = vpop.f32.mrb[0].mxu0
    %v5027 = vadd.f32 0.0, %v5026
    %v5028 = vpop.f32.mrb[0].mxu0
    %v5029 = vadd.f32 0.0, %v5028
    %5030 = vdwg.mxu0
    %5031 = vmatprep.subr.bf16.mxu0 0
    %5032 = vmatpush1.bf16.msra.mxu0 %v4886
    %5033 = vmatprep.subr.bf16.mxu0 0
    %5034 = vmatpush1.bf16.msra.mxu0 %v4891
    %5035 = vmatprep.subr.bf16.mxu0 0
    %5036 = vmatpush1.bf16.msra.mxu0 %v4896
    %5037 = vmatprep.subr.bf16.mxu0 0
    %5038 = vmatpush1.bf16.msra.mxu0 %v4901
    %5039 = vmatprep.subr.bf16.mxu0 0
    %5040 = vmatpush1.bf16.msra.mxu0 %v4943
    %5041 = vmatprep.subr.bf16.mxu0 0
    %5042 = vmatpush1.bf16.msra.mxu0 0
    %5043 = vmatprep.subr.bf16.mxu0 0
    %5044 = vmatpush1.bf16.msra.mxu0 0
    %5045 = vmatprep.subr.bf16.mxu0 0
    %5046 = vmatpush1.bf16.msra.mxu0 0
    %5047 = vmatprep.subr.bf16.mxu0 0
    %5048 = vmatpush1.bf16.msra.mxu0 0
    %5049 = vmatprep.subr.bf16.mxu0 0
    %5050 = vmatpush1.bf16.msra.mxu0 0
    %5051 = vmatprep.subr.bf16.mxu0 0
    %5052 = vmatpush1.bf16.msra.mxu0 0
    %5053 = vmatprep.subr.bf16.mxu0 0
    %5054 = vmatpush1.bf16.msra.mxu0 0
    %5055 = vmatprep.subr.bf16.mxu0 0
    %5056 = vmatpush1.bf16.msra.mxu0 0
    %5057 = vmatprep.subr.bf16.mxu0 0
    %5058 = vmatpush1.bf16.msra.mxu0 0
    %5059 = vmatprep.subr.bf16.mxu0 0
    %5060 = vmatpush1.bf16.msra.mxu0 0
    %5061 = vmatprep.subr.bf16.mxu0 0
    %5062 = vmatpush1.bf16.msra.mxu0 0
    %5063 = vmatprep.mubr.bf16.mxu0 0
    %5064 = vmatmul.mubr.bf16.gmra.mrb[0].mxu0 %v4928
    %v5065 = vpop.f32.mrb[0].mxu0
    %v5066 = vadd.f32 0.0, %v5065
    %v5067 = vpop.f32.mrb[0].mxu0
    %v5068 = vpop.f32.mrb[0].mxu0
    %v5069 = vadd.f32 0.0, %v5068
    %v5070 = vpop.f32.mrb[0].mxu0
    %5071 = vdwg.mxu0
    %v5072 = vsub.f32 %v1698, %v3231
    %v5073 = vsub.f32 %v1700, %v3233
    %v5074 = vsub.f32 %v1827, %v3360
    %v5075 = vsub.f32 %v1829, %v3362
    %v5076 = vsub.f32 %v1952, %v3485
    %v5077 = vsub.f32 %v1702, %v3235
    %v5078 = vsub.f32 %v1704, %v3237
    %v5079 = vsub.f32 %v1831, %v3364
    %v5080 = vsub.f32 %v1833, %v3366
    %v5081 = vsub.f32 %v1955, %v3488
    %v5082 = vmul.f32 %v4980, %v5072
    %v5083 = vmul.f32 %v4982, %v5073
    %v5084 = vmul.f32 %v5023, %v5074
    %v5085 = vmul.f32 %v5025, %v5075
    %v5086 = vmul.f32 %v5066, %v5076
    %v5087 = vmul.f32 %v4984, %v5077
    %v5088 = vmul.f32 %v4986, %v5078
    %v5089 = vmul.f32 %v5027, %v5079
    %v5090 = vmul.f32 %v5029, %v5080
    %v5091 = vmul.f32 %v5069, %v5081
    %v5092 = vadd.f32 %v3231, %v5082
    %v5093 = vadd.f32 %v3233, %v5083
    %v5094 = vadd.f32 %v3360, %v5084
    %v5095 = vadd.f32 %v3362, %v5085
    %v5096 = vadd.f32 %v3485, %v5086
    %v5097 = vadd.f32 %v3235, %v5087
    %v5098 = vadd.f32 %v3237, %v5088
    %v5099 = vadd.f32 %v3364, %v5089
    %v5100 = vadd.f32 %v3366, %v5090
    %v5101 = vadd.f32 %v3488, %v5091
    %v5102 = vld [vmem:[%s10] sm:$0x1f]
    %v5104 = vlaneseq
    %v5105 = vshrl.u32 %v5104, 7
    %v5106 = vsub.s32 0, %v5105
    %v5107 = vrot.slane %v5102, %v5106
    %v5108 = vlaneseq
    %v5109 = vshrl.u32 %v5108, 7
    %v5110 = vsub.s32 1, %v5109
    %v5111 = vrot.slane %v5102, %v5110
    %v5112 = vlaneseq
    %v5113 = vshrl.u32 %v5112, 7
    %v5114 = vsub.s32 2, %v5113
    %v5115 = vrot.slane %v5102, %v5114
    %v5116 = vlaneseq
    %v5117 = vshrl.u32 %v5116, 7
    %v5118 = vsub.s32 3, %v5117
    %v5119 = vrot.slane %v5102, %v5118
    %v5120 = vlaneseq
    %v5121 = vshrl.u32 %v5120, 7
    %v5122 = vsub.s32 4, %v5121
    %v5123 = vrot.slane %v5102, %v5122
    %v5129 = vadd.f32 %v5092, %v5107
    %v5130 = vadd.f32 %v5093, %v5111
    %v5131 = vadd.f32 %v5094, %v5115
    %v5132 = vadd.f32 %v5095, %v5119
    %v5133 = vadd.f32 %v5096, %v5123
    %v5134 = vadd.f32 %v5097, %v5107
    %v5135 = vadd.f32 %v5098, %v5111
    %v5136 = vadd.f32 %v5099, %v5115
    %v5137 = vadd.f32 %v5100, %v5119
    %v5138 = vadd.f32 %v5101, %v5123
    %v5139 = vmax.f32 %v5129, 0.0
    %v5140 = vmax.f32 %v5130, 0.0
    %v5141 = vmax.f32 %v5131, 0.0
    %v5142 = vmax.f32 %v5132, 0.0
    %v5143 = vmax.f32 %v5133, 0.0
    %v5144 = vmax.f32 %v5134, 0.0
    %v5145 = vmax.f32 %v5135, 0.0
    %v5146 = vmax.f32 %v5136, 0.0
    %v5147 = vmax.f32 %v5137, 0.0
    %v5148 = vmax.f32 %v5138, 0.0
    %5149 = vst [vmem:[#allocation8] sm:$0xff] %v5139
    %5150 = vst [vmem:[#allocation8 + $0x8] sm:$0xff] %v5140
    %5151 = vst [vmem:[#allocation8 + $0x10] sm:$0xff] %v5141
    %5152 = vst [vmem:[#allocation8 + $0x18] sm:$0xff] %v5142
    %5153 = vst.msk [vmem:[#allocation8 + $0x20] sm:$0xff] %vm1573, %v5143
    %5154 = vst [vmem:[#allocation8 + $0x28] sm:$0xff] %v5144
    %5155 = vst [vmem:[#allocation8 + $0x30] sm:$0xff] %v5145
    %5156 = vst [vmem:[#allocation8 + $0x38] sm:$0xff] %v5146
    %5157 = vst [vmem:[#allocation8 + $0x40] sm:$0xff] %v5147
    %5158 = vst.msk [vmem:[#allocation8 + $0x48] sm:$0xff] %vm1573, %v5148
    // Predicated region
    $region58: #{encoder_forward.1} parent=1 // pred_check
      _
    $region59: #{encoder_forward.1} parent=1 // pred_check_branch
      %5160 = sbr.rel (0) target = $region61
    $region60: #{encoder_forward.1} parent=1 // pred_region
      %s5162 = ssub.s32 1280, 1280
      %5163 = vsyncadd [#allocation4], %s5162
      %s5164 = sshll.u32 [#allocation8], 4
      %s5165 = int_to_ptr.vmem [resolvable:$true] %s5164
      %5170 = dma.vmem_to_hbm [thread:$0]  %s5165, 1280, %s11, [#allocation4], 640, 640, 40
    $region61: #{encoder_forward.1} parent=1 // pred_fallthru
      _
    // Predicated region
    $region62: #{encoder_forward.1} parent=1 // pred_check
      _
    $region63: #{encoder_forward.1} parent=1 // pred_check_branch
      %5172 = sbr.rel (0) target = $region65
    $region64: #{encoder_forward.1} parent=1 // pred_region
      %5173 = dma.done [#allocation4], 1280
    $region65: #{encoder_forward.1} parent=1 // pred_fallthru
      _
    %5174 = vsyncpa [#allocation3], 1
    %5175 = vsyncpa [#allocation6], 1
    %5176 = vsyncpa [#allocation4], 1

</llo_original>
